<compile_context>
chip_gen: v6e
topology: v6e:2x2x1
jax: 0.10.0
libtpu: 0.0.40
codegen_flags: <defaults>
</compile_context>

<pallas_src>
import functools
import math

import numpy as np
import jax
import jax.numpy as jnp
from jax import lax
from jax.experimental import pallas as pl
from jax.experimental.pallas import tpu as pltpu

# ----------------------------------------------------------------------------
# Small (scaled-down) configuration consistent with the module structure.
# (reference: n_fft=2048, hop=240, n_mels=128, conv_dim=512, encoder_dim=1024,
#  depth=12, heads=16, dw_kernel=31, codebook_size=4096)
# ----------------------------------------------------------------------------
SR = 24000
N_FFT = 64
HOP = 16
N_MELS = 16
CONV_DIM = 8
ENC_DIM = 32
FFN_DIM = 4 * ENC_DIM
DEPTH = 2
HEADS = 4
DW_KERNEL = 5
CODEBOOK_SIZE = 64

MEL_MEAN = 6.768444971712967     # stat['melspec_2048_mean']
MEL_STD = 18.417922652295623     # stat['melspec_2048_std']

LN_EPS = 1e-5
BN_EPS = 1e-5

# dtype policy: encoder activations/weights in bf16 (MXU-native HBM traffic),
# all normalization / softmax / BN math and matmul accumulation in f32.
CDT = jnp.bfloat16

# tile targets: 256-aligned for the v6e 2x256x256 MXU, per-step VMEM budgeted
# for v7x's 64 MiB (bf16 256x512 A + 512x256 W + 256x256 f32 acc, x2 buffers).
# _tile() clamps to the full dim when it does not divide (toy shapes).
TM, TN, TK = 256, 256, 512


def _tile(dim, target):
    return target if dim % target == 0 else dim


# ----------------------------------------------------------------------------
# Tiled matmul kernel (P1 + P3)
# ----------------------------------------------------------------------------
def _act(x, activation):
    if activation == "silu":
        return x * jax.nn.sigmoid(x)
    if activation == "relu":
        return jnp.maximum(x, 0.0)
    return x


def _matmul_acc_kernel(a_ref, b_ref, bias_ref, o_ref, acc_ref, *, activation):
    k = pl.program_id(2)

    @pl.when(k == 0)
    def _():
        acc_ref[...] = jnp.zeros_like(acc_ref)

    acc_ref[...] += jnp.dot(a_ref[...], b_ref[...],
                            preferred_element_type=jnp.float32)

    @pl.when(k == pl.num_programs(2) - 1)
    def _():
        o_ref[...] = _act(acc_ref[...] + bias_ref[...],
                          activation).astype(o_ref.dtype)


def _matmul_kernel(a_ref, b_ref, bias_ref, o_ref, *, activation):
    r = jnp.dot(a_ref[...], b_ref[...], preferred_element_type=jnp.float32)
    o_ref[...] = _act(r + bias_ref[...], activation).astype(o_ref.dtype)


def matmul(a, b, bias, activation="none", out_dtype=CDT, tm=TM, tn=TN, tk=TK):
    """act(A @ B + bias); A:(M,K), B:(K,N), bias:(N,); f32 accumulation."""
    M, K = a.shape
    K2, N = b.shape
    assert K == K2
    tm, tn, tk = _tile(M, tm), _tile(N, tn), _tile(K, tk)
    nm, nn, nk = M // tm, N // tn, K // tk
    bias2 = bias.reshape(1, N).astype(jnp.float32)

    in_specs = [
        pl.BlockSpec((tm, tk), lambda i, j, k: (i, k)),
        pl.BlockSpec((tk, tn), lambda i, j, k: (k, j)),
        pl.BlockSpec((1, tn), lambda i, j, k: (0, j)),
    ]
    out_spec = pl.BlockSpec((tm, tn), lambda i, j, k: (i, j))
    if nk == 1:
        kern = functools.partial(_matmul_kernel, activation=activation)
        scratch = []
    else:
        kern = functools.partial(_matmul_acc_kernel, activation=activation)
        scratch = [pltpu.VMEM((tm, tn), jnp.float32)]

    return pl.pallas_call(
        kern,
        out_shape=jax.ShapeDtypeStruct((M, N), out_dtype),
        grid=(nm, nn, nk),
        in_specs=in_specs,
        out_specs=out_spec,
        scratch_shapes=scratch,
        compiler_params=pltpu.CompilerParams(
            dimension_semantics=("parallel", "parallel", "arbitrary")),
    )(a, b, bias2)


# ----------------------------------------------------------------------------
# LayerNorm kernel (standalone uses: pre-attention LN, per-layer/encoder final LN)
# ----------------------------------------------------------------------------
def _ln_kernel(x_ref, g_ref, b_ref, o_ref):
    x = x_ref[...].astype(jnp.float32)
    mu = jnp.mean(x, axis=-1, keepdims=True)
    var = jnp.mean(jnp.square(x - mu), axis=-1, keepdims=True)
    y = (x - mu) * lax.rsqrt(var + LN_EPS)
    o_ref[...] = (y * g_ref[...] + b_ref[...]).astype(o_ref.dtype)


def layernorm(x2d, g, b, out_dtype=CDT, tm=512):
    M, D = x2d.shape
    tm = _tile(M, tm)
    return pl.pallas_call(
        _ln_kernel,
        out_shape=jax.ShapeDtypeStruct((M, D), out_dtype),
        grid=(M // tm,),
        in_specs=[
            pl.BlockSpec((tm, D), lambda i: (i, 0)),
            pl.BlockSpec((1, D), lambda i: (0, 0)),
            pl.BlockSpec((1, D), lambda i: (0, 0)),
        ],
        out_specs=pl.BlockSpec((tm, D), lambda i: (i, 0)),
        compiler_params=pltpu.CompilerParams(dimension_semantics=("parallel",)),
    )(x2d, g.reshape(1, D).astype(jnp.float32),
      b.reshape(1, D).astype(jnp.float32))


# ----------------------------------------------------------------------------
# Fused conformer feed-forward: 0.5 * (LN -> W1 -> SiLU -> W2 + b2)
# The (M, 4D) SiLU intermediate never touches HBM (tiled along the FFN axis).
# ----------------------------------------------------------------------------
def _ffn_kernel(x_ref, g_ref, b_ref, w1_ref, b1_ref, w2_ref, b2_ref,
                o_ref, acc_ref, *, res_scale):
    j = pl.program_id(1)

    @pl.when(j == 0)
    def _():
        acc_ref[...] = jnp.zeros_like(acc_ref)

    x = x_ref[...].astype(jnp.float32)
    mu = jnp.mean(x, axis=-1, keepdims=True)
    var = jnp.mean(jnp.square(x - mu), axis=-1, keepdims=True)
    h = (x - mu) * lax.rsqrt(var + LN_EPS) * g_ref[...] + b_ref[...]

    a = jnp.dot(h.astype(w1_ref.dtype), w1_ref[...],
                preferred_element_type=jnp.float32) + b1_ref[...]
    a = a * jax.nn.sigmoid(a)                                   # SiLU, f32
    acc_ref[...] += jnp.dot(a.astype(w2_ref.dtype), w2_ref[...],
                            preferred_element_type=jnp.float32)

    @pl.when(j == pl.num_programs(1) - 1)
    def _():
        o_ref[...] = (res_scale * (acc_ref[...] + b2_ref[...])).astype(o_ref.dtype)


def feed_forward(x2d, p, res_scale=0.5, tm=TM, tf=512):
    M, D = x2d.shape
    F = p["w1"].shape[1]
    tm, tf = _tile(M, tm), _tile(F, tf)
    return pl.pallas_call(
        functools.partial(_ffn_kernel, res_scale=res_scale),
        out_shape=jax.ShapeDtypeStruct((M, D), x2d.dtype),
        grid=(M // tm, F // tf),
        in_specs=[
            pl.BlockSpec((tm, D), lambda i, j: (i, 0)),
            pl.BlockSpec((1, D), lambda i, j: (0, 0)),
            pl.BlockSpec((1, D), lambda i, j: (0, 0)),
            pl.BlockSpec((D, tf), lambda i, j: (0, j)),
            pl.BlockSpec((1, tf), lambda i, j: (0, j)),
            pl.BlockSpec((tf, D), lambda i, j: (j, 0)),
            pl.BlockSpec((1, D), lambda i, j: (0, 0)),
        ],
        out_specs=pl.BlockSpec((tm, D), lambda i, j: (i, 0)),
        scratch_shapes=[pltpu.VMEM((tm, D), jnp.float32)],
        compiler_params=pltpu.CompilerParams(
            dimension_semantics=("parallel", "arbitrary")),
    )(x2d,
      p["ln_g"].reshape(1, D).astype(jnp.float32),
      p["ln_b"].reshape(1, D).astype(jnp.float32),
      p["w1"], p["b1"].reshape(1, F).astype(jnp.float32),
      p["w2"], p["b2"].reshape(1, D).astype(jnp.float32))


# ----------------------------------------------------------------------------
# Conv module, part 1: fused pre-LN + pointwise_conv1 + GLU (writes only (M, D))
# ----------------------------------------------------------------------------
def _glu_kernel(x_ref, g_ref, b_ref, wa_ref, wg_ref, o_ref):
    x = x_ref[...].astype(jnp.float32)
    mu = jnp.mean(x, axis=-1, keepdims=True)
    var = jnp.mean(jnp.square(x - mu), axis=-1, keepdims=True)
    h = ((x - mu) * lax.rsqrt(var + LN_EPS) * g_ref[...] + b_ref[...]
         ).astype(wa_ref.dtype)
    a = jnp.dot(h, wa_ref[...], preferred_element_type=jnp.float32)
    gate = jnp.dot(h, wg_ref[...], preferred_element_type=jnp.float32)
    o_ref[...] = (a * jax.nn.sigmoid(gate)).astype(o_ref.dtype)


def glu_pointwise(x2d, p, tm=TM, tn=TN):
    M, D = x2d.shape
    N = p["pw1_a"].shape[1]
    tm, tn = _tile(M, tm), _tile(N, tn)
    return pl.pallas_call(
        _glu_kernel,
        out_shape=jax.ShapeDtypeStruct((M, N), x2d.dtype),
        grid=(M // tm, N // tn),
        in_specs=[
            pl.BlockSpec((tm, D), lambda i, j: (i, 0)),
            pl.BlockSpec((1, D), lambda i, j: (0, 0)),
            pl.BlockSpec((1, D), lambda i, j: (0, 0)),
            pl.BlockSpec((D, tn), lambda i, j: (0, j)),
            pl.BlockSpec((D, tn), lambda i, j: (0, j)),
        ],
        out_specs=pl.BlockSpec((tm, tn), lambda i, j: (i, j)),
        compiler_params=pltpu.CompilerParams(
            dimension_semantics=("parallel", "parallel")),
    )(x2d, p["ln_g"].reshape(1, D).astype(jnp.float32),
      p["ln_b"].reshape(1, D).astype(jnp.float32),
      p["pw1_a"], p["pw1_g"])


# ----------------------------------------------------------------------------
# Conv module, part 2: depthwise conv + eval BatchNorm + swish + pointwise_conv2
# fused in one kernel per batch element.
# ----------------------------------------------------------------------------
def _convmod_tail_kernel(x_ref, w_ref, scale_ref, shift_ref, pw2_ref, o_ref,
                         *, K, T):
    x = x_ref[0].astype(jnp.float32)                  # (Tp, D)
    w = w_ref[...]                                    # (K, D) f32
    acc = x[0:T, :] * w[0:1, :]
    for k in range(1, K):                             # static, small K
        acc = acc + x[k:k + T, :] * w[k:k + 1, :]
    h = acc * scale_ref[...] + shift_ref[...]         # BatchNorm1d (running stats)
    h = h * jax.nn.sigmoid(h)                         # swish
    out = jnp.dot(h.astype(pw2_ref.dtype), pw2_ref[...],
                  preferred_element_type=jnp.float32)
    o_ref[...] = out[None].astype(o_ref.dtype)


def conv_module_tail(x, p):
    B, T, D = x.shape
    K = p["dw_w"].shape[0]
    pad = (K - 1) // 2   # TODO(synk): assumes odd depthwise kernel (31 in reference)
    xp = jnp.pad(x, ((0, 0), (pad, pad), (0, 0)))
    Tp = T + 2 * pad
    scale1 = p["bn"]["g"] * lax.rsqrt(p["bn"]["v"] + BN_EPS)
    shift1 = p["bn"]["b"] - p["bn"]["m"] * scale1
    return pl.pallas_call(
        functools.partial(_convmod_tail_kernel, K=K, T=T),
        out_shape=jax.ShapeDtypeStruct((B, T, D), x.dtype),
        grid=(B,),
        in_specs=[
            pl.BlockSpec((1, Tp, D), lambda b: (b, 0, 0)),
            pl.BlockSpec((K, D), lambda b: (0, 0)),
            pl.BlockSpec((1, D), lambda b: (0, 0)),
            pl.BlockSpec((1, D), lambda b: (0, 0)),
            pl.BlockSpec((D, D), lambda b: (0, 0)),
        ],
        out_specs=pl.BlockSpec((1, T, D), lambda b: (b, 0, 0)),
        compiler_params=pltpu.CompilerParams(dimension_semantics=("parallel",)),
    )(xp, p["dw_w"].astype(jnp.float32),
      scale1.reshape(1, D).astype(jnp.float32),
      shift1.reshape(1, D).astype(jnp.float32),
      p["pw2_w"])


# ----------------------------------------------------------------------------
# Attention core: a block of heads per grid step, batched dot_general,
# softmax denominator via pl.reciprocal(approx=True).
# ----------------------------------------------------------------------------
def _attn_kernel(q_ref, k_ref, v_ref, o_ref, *, scale):
    q = q_ref[0]                                      # (Hb, T, Dh)
    k = k_ref[0]
    v = v_ref[0]
    s = lax.dot_general(q, k, (((2,), (2,)), ((0,), (0,))),
                        preferred_element_type=jnp.float32) * scale
    m = jnp.max(s, axis=-1, keepdims=True)
    p = jnp.exp(s - m)
    inv = pl.reciprocal(jnp.sum(p, axis=-1, keepdims=True), approx=True)
    o = lax.dot_general(p.astype(v.dtype), v, (((2,), (1,)), ((0,), (0,))),
                        preferred_element_type=jnp.float32) * inv
    o_ref[...] = o[None].astype(o_ref.dtype)


def mha_core(q, k, v):
    """q,k,v: (B, H, T, Dh) -> (B, H, T, Dh)."""
    B, H, T, Dh = q.shape
    hb = max(1, min(H, 128 // max(Dh, 1)))            # aim for >=128 lanes of work
    if H % hb:
        hb = H
    scale = 1.0 / math.sqrt(Dh)
    return pl.pallas_call(
        functools.partial(_attn_kernel, scale=scale),
        out_shape=jax.ShapeDtypeStruct((B, H, T, Dh), q.dtype),
        grid=(B, H // hb),
        in_specs=[pl.BlockSpec((1, hb, T, Dh), lambda b, h: (b, h, 0, 0))] * 3,
        out_specs=pl.BlockSpec((1, hb, T, Dh), lambda b, h: (b, h, 0, 0)),
        compiler_params=pltpu.CompilerParams(
            dimension_semantics=("parallel", "parallel")),
    )(q, k, v)


# ----------------------------------------------------------------------------
# Mel spectrogram "preprocessor_melspec_2048": windowed DFT + power + HTK mel +
# dB + dataset normalization, all fused in one kernel (Hann folded into bases).
# ----------------------------------------------------------------------------
def _hz_to_mel(f):
    return 2595.0 * np.log10(1.0 + f / 700.0)


def _mel_to_hz(m):
    return 700.0 * (10.0 ** (m / 2595.0) - 1.0)


def _mel_filterbank(n_freqs, n_mels, sample_rate):
    all_freqs = np.linspace(0, sample_rate // 2, n_freqs)
    m_pts = np.linspace(_hz_to_mel(0.0), _hz_to_mel(sample_rate / 2.0), n_mels + 2)
    f_pts = _mel_to_hz(m_pts)
    f_diff = f_pts[1:] - f_pts[:-1]
    slopes = f_pts[None, :] - all_freqs[:, None]
    down = -slopes[:, :-2] / f_diff[:-1]
    up = slopes[:, 2:] / f_diff[1:]
    return np.maximum(0.0, np.minimum(down, up)).astype(np.float32)


_N_FREQ = N_FFT // 2 + 1
_n = np.arange(N_FFT)
_f = np.arange(_N_FREQ)
_ang = 2.0 * np.pi * np.outer(_n, _f) / N_FFT
_HANN = (0.5 - 0.5 * np.cos(2.0 * np.pi * np.arange(N_FFT) / N_FFT))[:, None]
DFT_COS = jnp.asarray(_HANN * np.cos(_ang), jnp.float32)      # window folded in
DFT_SIN = jnp.asarray(_HANN * -np.sin(_ang), jnp.float32)
MEL_FB = jnp.asarray(_mel_filterbank(_N_FREQ, N_MELS, SR), jnp.float32)


def _mel_kernel(fr_ref, cos_ref, sin_ref, fb_ref, o_ref, *, mean, std):
    fr = fr_ref[...]
    re = jnp.dot(fr, cos_ref[...], preferred_element_type=jnp.float32)
    im = jnp.dot(fr, sin_ref[...], preferred_element_type=jnp.float32)
    power = re * re + im * im
    mel = jnp.dot(power, fb_ref[...], preferred_element_type=jnp.float32)
    mel_db = 10.0 * jnp.log10(jnp.maximum(mel, 1e-10))         # AmplitudeToDB
    o_ref[...] = ((mel_db - mean) / std).astype(o_ref.dtype)


def melspectrogram_norm(x):
    """x: (B, samples) -> (B, n_mels, T) normalized dB mel spectrogram."""
    B, L = x.shape
    pad = N_FFT // 2
    xp = jnp.pad(x, ((0, 0), (pad, pad)), mode="reflect")      # center=True
    num_frames = 1 + (L + 2 * pad - N_FFT) // HOP
    idx = jnp.arange(num_frames)[:, None] * HOP + jnp.arange(N_FFT)[None, :]
    # TODO(synk): framing gather stays in XLA; a BlockSpec index_map framing
    #             would avoid materializing the framed tensor at n_fft=2048.
    frames = xp[:, idx].reshape(B * num_frames, N_FFT)
    M = B * num_frames
    tm = _tile(M, 512)
    mel = pl.pallas_call(
        functools.partial(_mel_kernel, mean=MEL_MEAN, std=MEL_STD),
        out_shape=jax.ShapeDtypeStruct((M, N_MELS), jnp.float32),
        grid=(M // tm,),
        in_specs=[
            pl.BlockSpec((tm, N_FFT), lambda i: (i, 0)),
            pl.BlockSpec((N_FFT, _N_FREQ), lambda i: (0, 0)),
            pl.BlockSpec((N_FFT, _N_FREQ), lambda i: (0, 0)),
            pl.BlockSpec((_N_FREQ, N_MELS), lambda i: (0, 0)),
        ],
        out_specs=pl.BlockSpec((tm, N_MELS), lambda i: (i, 0)),
        compiler_params=pltpu.CompilerParams(dimension_semantics=("parallel",)),
    )(frames, DFT_COS, DFT_SIN, MEL_FB)
    return mel.reshape(B, num_frames, N_MELS).transpose(0, 2, 1)  # (B, n_mels, T)


# ----------------------------------------------------------------------------
# Conv2dSubsampling frontend: two residual 2-D conv blocks (stride 2,2 each),
# BatchNorm folded into the conv weights, conv via XLA, linear via Pallas.
# ----------------------------------------------------------------------------
def _fold_bn(w, b, bn):
    s = bn["g"] * lax.rsqrt(bn["v"] + BN_EPS)
    return w * s[:, None, None, None], (b - bn["m"]) * s + bn["b"]


def conv2d_3x3(x, w, b, stride):
    out = lax.conv_general_dilated(
        x, w, window_strides=stride, padding=((1, 1), (1, 1)),
        dimension_numbers=("NCHW", "OIHW", "NCHW"))
    return out + b.reshape(1, -1, 1, 1)


def res2d_module(x, p, stride):
    w1, b1 = _fold_bn(p["conv1_w"], p["conv1_b"], p["bn1"])
    w2, b2 = _fold_bn(p["conv2_w"], p["conv2_b"], p["bn2"])
    w3, b3 = _fold_bn(p["conv3_w"], p["conv3_b"], p["bn3"])
    out = jax.nn.relu(conv2d_3x3(x, w1, b1, stride))
    out = conv2d_3x3(out, w2, b2, (1, 1))
    res = conv2d_3x3(x, w3, b3, stride)
    return jax.nn.relu(out + res)


def conv_subsampling(mel, params):
    """mel: (B, n_mels, T) -> tokens (B, T//4, ENC_DIM) in bf16."""
    x = mel[:, None, :, :]                                      # (B,1,F,T)
    x = res2d_module(x, params["res1"], (2, 2))
    x = res2d_module(x, params["res2"], (2, 2))
    B, C, F, T = x.shape
    x = x.transpose(0, 3, 1, 2).reshape(B * T, C * F)           # b c f t -> (b t)(c f)
    y = matmul(x, params["sub_lin_w"], params["sub_lin_b"], out_dtype=CDT)
    return y.reshape(B, T, ENC_DIM)


# ----------------------------------------------------------------------------
# Wav2Vec2Conformer encoder (rotary position embeddings), eval mode
# ----------------------------------------------------------------------------
def self_attention(x, p, cos, sin):
    B, T, D = x.shape
    H = HEADS
    Dh = D // H
    h = layernorm(x.reshape(B * T, D), p["ln_g"], p["ln_b"])    # (BT, D) bf16

    # rotary applied to the Q/K input only (HF Wav2Vec2ConformerSelfAttention)
    hh = h.reshape(B, T, H, Dh).astype(jnp.float32)
    rot = jnp.concatenate([-hh[..., Dh // 2:], hh[..., :Dh // 2]], axis=-1)
    qk_in = (hh * cos[None, :, None, :] + rot * sin[None, :, None, :])
    qk_in = qk_in.reshape(B * T, D).astype(CDT)

    qk = matmul(qk_in, p["wqk"], p["bqk"], out_dtype=CDT)       # fused Q|K proj
    q, k = qk[:, :D], qk[:, D:]
    v = matmul(h, p["wv"], p["bv"], out_dtype=CDT)

    def heads(t):
        return t.reshape(B, T, H, Dh).transpose(0, 2, 1, 3)

    o = mha_core(heads(q), heads(k), heads(v))
    o = o.transpose(0, 2, 1, 3).reshape(B * T, D)
    o = matmul(o, p["wo"], p["bo"], out_dtype=CDT)
    return o.reshape(B, T, D)


def conv_module(x, p):
    B, T, D = x.shape
    h = glu_pointwise(x.reshape(B * T, D), p)                   # LN + pw1 + GLU
    h = conv_module_tail(h.reshape(B, T, D), p)                 # dw + BN + swish + pw2
    return h


def conformer_layer(x, p, cos, sin):
    B, T, D = x.shape
    x2 = x.reshape(B * T, D)
    x2 = x2 + feed_forward(x2, p["ffn1"])                       # includes *0.5
    x = x2.reshape(B, T, D)
    x = x + self_attention(x, p["attn"], cos, sin)
    x = x + conv_module(x, p["conv"])
    x2 = x.reshape(B * T, D)
    x2 = x2 + feed_forward(x2, p["ffn2"])
    x2 = layernorm(x2, p["final_ln_g"], p["final_ln_b"])
    return x2.reshape(B, T, D)


def conformer_encoder(x, params):
    B, T, D = x.shape
    Dh = D // HEADS
    inv_freq = 1.0 / (10000.0 ** (jnp.arange(0, Dh, 2, dtype=jnp.float32) / Dh))
    freqs = jnp.arange(T, dtype=jnp.float32)[:, None] * inv_freq[None, :]
    emb = jnp.concatenate([freqs, freqs], axis=-1)
    cos, sin = jnp.cos(emb), jnp.sin(emb)                       # (T, Dh)

    hidden_states = []
    h = x
    for lp in params["layers"]:
        hidden_states.append(h)
        h = conformer_layer(h, lp, cos, sin)
    h = layernorm(h.reshape(B * T, D), params["enc_ln_g"],
                  params["enc_ln_b"]).reshape(B, T, D)
    hidden_states.append(h)
    return h, jnp.stack(hidden_states).astype(jnp.float32)


# ----------------------------------------------------------------------------
# MusicFM25Hz.get_predictions
# ----------------------------------------------------------------------------
def get_predictions(x, params):
    mel = melspectrogram_norm(x)[..., :-1]                      # preprocess + normalize
    tokens = conv_subsampling(mel, params)                      # (B, T, D) bf16
    last, hidden_emb = conformer_encoder(tokens, params)
    B, T, D = last.shape
    logits = matmul(last.reshape(B * T, D), params["lin_w"], params["lin_b"],
                    out_dtype=jnp.float32)
    logits = logits.reshape(B, T, CODEBOOK_SIZE)
    return {"melspec_2048": logits}, hidden_emb


# ----------------------------------------------------------------------------
# Deterministic synthetic parameter initialization
# ----------------------------------------------------------------------------
def init_params(key):
    counter = {"i": 0}

    def nk():
        counter["i"] += 1
        return jax.random.fold_in(key, counter["i"])

    def w(shape, scale=0.02, dtype=jnp.float32):
        return (scale * jax.random.normal(nk(), shape, jnp.float32)).astype(dtype)

    ones = lambda s: jnp.ones(s, jnp.float32)
    zeros = lambda s: jnp.zeros(s, jnp.float32)

    def bn(c):
        return dict(g=ones((c,)) + w((c,)), b=w((c,)), m=w((c,)), v=ones((c,)))

    def res(cin, cout):
        return dict(conv1_w=w((cout, cin, 3, 3)), conv1_b=w((cout,)),
                    conv2_w=w((cout, cout, 3, 3)), conv2_b=w((cout,)),
                    conv3_w=w((cout, cin, 3, 3)), conv3_b=w((cout,)),
                    bn1=bn(cout), bn2=bn(cout), bn3=bn(cout))

    def ffn(d, f):
        return dict(ln_g=ones((d,)), ln_b=zeros((d,)),
                    w1=w((d, f), dtype=CDT), b1=w((f,)),
                    w2=w((f, d), dtype=CDT), b2=w((d,)))

    def layer(d, f, k):
        return dict(
            ffn1=ffn(d, f), ffn2=ffn(d, f),
            attn=dict(ln_g=ones((d,)), ln_b=zeros((d,)),
                      wqk=w((d, 2 * d), dtype=CDT), bqk=w((2 * d,)),
                      wv=w((d, d), dtype=CDT), bv=w((d,)),
                      wo=w((d, d), dtype=CDT), bo=w((d,))),
            conv=dict(ln_g=ones((d,)), ln_b=zeros((d,)),
                      pw1_a=w((d, d), dtype=CDT), pw1_g=w((d, d), dtype=CDT),
                      dw_w=w((k, d)), bn=bn(d),
                      pw2_w=w((d, d), dtype=CDT)),
            final_ln_g=ones((d,)), final_ln_b=zeros((d,)))

    return dict(
        res1=res(1, CONV_DIM),
        res2=res(CONV_DIM, CONV_DIM),
        sub_lin_w=w((CONV_DIM * (N_MELS // 4), ENC_DIM)), sub_lin_b=w((ENC_DIM,)),
        layers=[layer(ENC_DIM, FFN_DIM, DW_KERNEL) for _ in range(DEPTH)],
        enc_ln_g=ones((ENC_DIM,)), enc_ln_b=zeros((ENC_DIM,)),
        lin_w=w((ENC_DIM, CODEBOOK_SIZE), dtype=CDT), lin_b=w((CODEBOOK_SIZE,)),
        cls_token=w((ENC_DIM,)),   # defined in the reference module, unused in forward
    )


# ----------------------------------------------------------------------------
if __name__ == "__main__":
    key = jax.random.PRNGKey(0)
    pkey, xkey = jax.random.split(key)
    params = init_params(pkey)

    B = 2
    NUM_SAMPLES = 256                         # small raw-audio length
    x = jax.random.normal(xkey, (B, NUM_SAMPLES), jnp.float32)

    fwd = jax.jit(get_predictions)
    logits, hidden_emb = fwd(x, params)
    jax.block_until_ready((logits["melspec_2048"], hidden_emb))

    assert logits["melspec_2048"].shape == (B, 4, CODEBOOK_SIZE)
    assert hidden_emb.shape == (DEPTH + 1, B, 4, ENC_DIM)
    print("KERNEL_OK")
</pallas_src>

<mosaic_0001>
module attributes {stable_mosaic.version = 11 : i64} {
  func.func @_mel_kernel(%arg0: i32, %arg1: memref<34x64xf32, #tpu.memory_space<vmem>>, %arg2: memref<64x33xf32, #tpu.memory_space<vmem>>, %arg3: memref<64x33xf32, #tpu.memory_space<vmem>>, %arg4: memref<33x16xf32, #tpu.memory_space<vmem>>, %arg5: memref<34x16xf32, #tpu.memory_space<vmem>>) attributes {dimension_semantics = [#tpu.dimension_semantics<parallel>], iteration_bounds = array<i64: 1>, scalar_prefetch = 0 : i64, scratch_operands = 0 : i64, tpu.core_type = #tpu.core_type<tc>, window_params = [{transform_indices = @transform_0, window_bounds = array<i64: 34, 64>}, {pipeline_mode = #tpu.pipeline_mode<synchronous>, transform_indices = @transform_1, window_bounds = array<i64: 64, 33>}, {pipeline_mode = #tpu.pipeline_mode<synchronous>, transform_indices = @transform_2, window_bounds = array<i64: 64, 33>}, {pipeline_mode = #tpu.pipeline_mode<synchronous>, transform_indices = @transform_3, window_bounds = array<i64: 33, 16>}, {transform_indices = @transform_4, window_bounds = array<i64: 34, 16>}]} {
    %c0 = arith.constant 0 : index
    %c0_0 = arith.constant 0 : index
    %0 = vector.load %arg1[%c0, %c0_0] : memref<34x64xf32, #tpu.memory_space<vmem>>, vector<34x64xf32>
    %c0_1 = arith.constant 0 : index
    %c0_2 = arith.constant 0 : index
    %1 = vector.load %arg2[%c0_1, %c0_2] : memref<64x33xf32, #tpu.memory_space<vmem>>, vector<64x33xf32>
    %cst = arith.constant dense<0.000000e+00> : vector<34x33xf32>
    %2 = tpu.matmul %0, %1, %cst {dimension_numbers = #tpu.dot_dimension_numbers<[1], [0], [0], [1], [0, 0, 1, 1], [], []>} : vector<34x64xf32>, vector<64x33xf32>, vector<34x33xf32> -> vector<34x33xf32>
    %c0_3 = arith.constant 0 : index
    %c0_4 = arith.constant 0 : index
    %3 = vector.load %arg3[%c0_3, %c0_4] : memref<64x33xf32, #tpu.memory_space<vmem>>, vector<64x33xf32>
    %cst_5 = arith.constant dense<0.000000e+00> : vector<34x33xf32>
    %4 = tpu.matmul %0, %3, %cst_5 {dimension_numbers = #tpu.dot_dimension_numbers<[1], [0], [0], [1], [0, 0, 1, 1], [], []>} : vector<34x64xf32>, vector<64x33xf32>, vector<34x33xf32> -> vector<34x33xf32>
    %5 = arith.mulf %2, %2 : vector<34x33xf32>
    %6 = arith.mulf %4, %4 : vector<34x33xf32>
    %7 = arith.addf %5, %6 : vector<34x33xf32>
    %c0_6 = arith.constant 0 : index
    %c0_7 = arith.constant 0 : index
    %8 = vector.load %arg4[%c0_6, %c0_7] : memref<33x16xf32, #tpu.memory_space<vmem>>, vector<33x16xf32>
    %cst_8 = arith.constant dense<0.000000e+00> : vector<34x16xf32>
    %9 = tpu.matmul %7, %8, %cst_8 {dimension_numbers = #tpu.dot_dimension_numbers<[1], [0], [0], [1], [0, 0, 1, 1], [], []>} : vector<34x33xf32>, vector<33x16xf32>, vector<34x16xf32> -> vector<34x16xf32>
    %cst_9 = arith.constant 1.000000e-10 : f32
    %10 = vector.broadcast %cst_9 : f32 to vector<34x16xf32>
    %11 = arith.maximumf %9, %10 : vector<34x16xf32>
    %12 = math.log %11 : vector<34x16xf32>
    %cst_10 = arith.constant 0.434294492 : f32
    %13 = vector.broadcast %cst_10 : f32 to vector<34x16xf32>
    %14 = arith.mulf %12, %13 : vector<34x16xf32>
    %cst_11 = arith.constant 1.000000e+01 : f32
    %15 = vector.broadcast %cst_11 : f32 to vector<34x16xf32>
    %16 = arith.mulf %15, %14 : vector<34x16xf32>
    %cst_12 = arith.constant 6.76844501 : f32
    %17 = vector.broadcast %cst_12 : f32 to vector<34x16xf32>
    %18 = arith.subf %16, %17 : vector<34x16xf32>
    %cst_13 = arith.constant 18.417923 : f32
    %19 = vector.broadcast %cst_13 : f32 to vector<34x16xf32>
    %20 = arith.divf %18, %19 : vector<34x16xf32>
    %c0_14 = arith.constant 0 : index
    %c0_15 = arith.constant 0 : index
    %21 = vector.load %arg5[%c0_14, %c0_15] : memref<34x16xf32, #tpu.memory_space<vmem>>, vector<34x16xf32>
    tpu.vector_store %arg5[%c0_14, %c0_15], %20 {strides = array<i32>} : memref<34x16xf32, #tpu.memory_space<vmem>>, vector<34x16xf32>,
    return
  }
  func.func @transform_0(%arg0: i32) -> (i32, i32) {
    %c0_i32 = arith.constant 0 : i32
    %c0_i32_0 = arith.constant 0 : i32
    return %arg0, %c0_i32 : i32, i32
  }
  func.func @transform_1(%arg0: i32) -> (i32, i32) {
    %c0_i32 = arith.constant 0 : i32
    %c0_i32_0 = arith.constant 0 : i32
    %c0_i32_1 = arith.constant 0 : i32
    return %c0_i32, %c0_i32_0 : i32, i32
  }
  func.func @transform_2(%arg0: i32) -> (i32, i32) {
    %c0_i32 = arith.constant 0 : i32
    %c0_i32_0 = arith.constant 0 : i32
    %c0_i32_1 = arith.constant 0 : i32
    return %c0_i32, %c0_i32_0 : i32, i32
  }
  func.func @transform_3(%arg0: i32) -> (i32, i32) {
    %c0_i32 = arith.constant 0 : i32
    %c0_i32_0 = arith.constant 0 : i32
    %c0_i32_1 = arith.constant 0 : i32
    return %c0_i32, %c0_i32_0 : i32, i32
  }
  func.func @transform_4(%arg0: i32) -> (i32, i32) {
    %c0_i32 = arith.constant 0 : i32
    %c0_i32_0 = arith.constant 0 : i32
    return %arg0, %c0_i32 : i32, i32
  }
}

module attributes {stable_mosaic.version = 11 : i64} {
  func.func @_matmul_kernel(%arg0: i32, %arg1: i32, %arg2: i32, %arg3: memref<8x32xf32, #tpu.memory_space<vmem>>, %arg4: memref<32x32xf32, #tpu.memory_space<vmem>>, %arg5: memref<1x32xf32, #tpu.memory_space<vmem>>, %arg6: memref<8x32xbf16, #tpu.memory_space<vmem>>) attributes {dimension_semantics = [#tpu.dimension_semantics<parallel>, #tpu.dimension_semantics<parallel>, #tpu.dimension_semantics<arbitrary>], iteration_bounds = array<i64: 1, 1, 1>, scalar_prefetch = 0 : i64, scratch_operands = 0 : i64, tpu.core_type = #tpu.core_type<tc>, window_params = [{transform_indices = @transform_0, window_bounds = array<i64: 8, 32>}, {transform_indices = @transform_1, window_bounds = array<i64: 32, 32>}, {transform_indices = @transform_2, window_bounds = array<i64: 1, 32>}, {transform_indices = @transform_3, window_bounds = array<i64: 8, 32>}]} {
    %c0 = arith.constant 0 : index
    %c0_0 = arith.constant 0 : index
    %0 = vector.load %arg3[%c0, %c0_0] : memref<8x32xf32, #tpu.memory_space<vmem>>, vector<8x32xf32>
    %c0_1 = arith.constant 0 : index
    %c0_2 = arith.constant 0 : index
    %1 = vector.load %arg4[%c0_1, %c0_2] : memref<32x32xf32, #tpu.memory_space<vmem>>, vector<32x32xf32>
    %cst = arith.constant dense<0.000000e+00> : vector<8x32xf32>
    %2 = tpu.matmul %0, %1, %cst {dimension_numbers = #tpu.dot_dimension_numbers<[1], [0], [0], [1], [0, 0, 1, 1], [], []>} : vector<8x32xf32>, vector<32x32xf32>, vector<8x32xf32> -> vector<8x32xf32>
    %c0_3 = arith.constant 0 : index
    %c0_4 = arith.constant 0 : index
    %3 = vector.load %arg5[%c0_3, %c0_4] : memref<1x32xf32, #tpu.memory_space<vmem>>, vector<1x32xf32>
    %4 = vector.broadcast %3 : vector<1x32xf32> to vector<8x32xf32>
    %5 = arith.addf %2, %4 : vector<8x32xf32>
    %6 = arith.truncf %5 : vector<8x32xf32> to vector<8x32xbf16>
    %c0_5 = arith.constant 0 : index
    %c0_6 = arith.constant 0 : index
    %7 = vector.load %arg6[%c0_5, %c0_6] : memref<8x32xbf16, #tpu.memory_space<vmem>>, vector<8x32xbf16>
    tpu.vector_store %arg6[%c0_5, %c0_6], %6 {strides = array<i32>} : memref<8x32xbf16, #tpu.memory_space<vmem>>, vector<8x32xbf16>,
    return
  }
  func.func @transform_0(%arg0: i32, %arg1: i32, %arg2: i32) -> (i32, i32) {
    %c0_i32 = arith.constant 0 : i32
    return %arg0, %arg2 : i32, i32
  }
  func.func @transform_1(%arg0: i32, %arg1: i32, %arg2: i32) -> (i32, i32) {
    %c0_i32 = arith.constant 0 : i32
    return %arg2, %arg1 : i32, i32
  }
  func.func @transform_2(%arg0: i32, %arg1: i32, %arg2: i32) -> (i32, i32) {
    %c0_i32 = arith.constant 0 : i32
    %c0_i32_0 = arith.constant 0 : i32
    return %c0_i32, %arg1 : i32, i32
  }
  func.func @transform_3(%arg0: i32, %arg1: i32, %arg2: i32) -> (i32, i32) {
    %c0_i32 = arith.constant 0 : i32
    return %arg0, %arg1 : i32, i32
  }
}

module attributes {stable_mosaic.version = 11 : i64} {
  func.func @_ffn_kernel(%arg0: i32, %arg1: i32, %arg2: memref<8x32xbf16, #tpu.memory_space<vmem>>, %arg3: memref<1x32xf32, #tpu.memory_space<vmem>>, %arg4: memref<1x32xf32, #tpu.memory_space<vmem>>, %arg5: memref<32x128xbf16, #tpu.memory_space<vmem>>, %arg6: memref<1x128xf32, #tpu.memory_space<vmem>>, %arg7: memref<128x32xbf16, #tpu.memory_space<vmem>>, %arg8: memref<1x32xf32, #tpu.memory_space<vmem>>, %arg9: memref<8x32xbf16, #tpu.memory_space<vmem>>, %arg10: memref<8x32xf32, #tpu.memory_space<vmem>>) attributes {dimension_semantics = [#tpu.dimension_semantics<parallel>, #tpu.dimension_semantics<arbitrary>], iteration_bounds = array<i64: 1, 1>, scalar_prefetch = 0 : i64, scratch_operands = 1 : i64, tpu.core_type = #tpu.core_type<tc>, window_params = [{transform_indices = @transform_0, window_bounds = array<i64: 8, 32>}, {pipeline_mode = #tpu.pipeline_mode<synchronous>, transform_indices = @transform_1, window_bounds = array<i64: 1, 32>}, {pipeline_mode = #tpu.pipeline_mode<synchronous>, transform_indices = @transform_2, window_bounds = array<i64: 1, 32>}, {transform_indices = @transform_3, window_bounds = array<i64: 32, 128>}, {transform_indices = @transform_4, window_bounds = array<i64: 1, 128>}, {transform_indices = @transform_5, window_bounds = array<i64: 128, 32>}, {pipeline_mode = #tpu.pipeline_mode<synchronous>, transform_indices = @transform_6, window_bounds = array<i64: 1, 32>}, {transform_indices = @transform_7, window_bounds = array<i64: 8, 32>}]} {
    %c0_i32 = arith.constant 0 : i32
    %0 = arith.cmpi eq, %arg1, %c0_i32 : i32
    %1 = arith.extui %0 : i1 to i32
    %c0_i32_0 = arith.constant 0 : i32
    %2 = arith.cmpi ne, %1, %c0_i32_0 : i32
    scf.if %2 {
      %cst_25 = arith.constant 0.000000e+00 : f32
      %50 = vector.broadcast %cst_25 : f32 to vector<8x32xf32>
      %c0_26 = arith.constant 0 : index
      %c0_27 = arith.constant 0 : index
      %51 = vector.load %arg10[%c0_26, %c0_27] : memref<8x32xf32, #tpu.memory_space<vmem>>, vector<8x32xf32>
      tpu.vector_store %arg10[%c0_26, %c0_27], %50 {strides = array<i32>} : memref<8x32xf32, #tpu.memory_space<vmem>>, vector<8x32xf32>,
    } else {
    }
    %c0 = arith.constant 0 : index
    %c0_1 = arith.constant 0 : index
    %3 = vector.load %arg2[%c0, %c0_1] : memref<8x32xbf16, #tpu.memory_space<vmem>>, vector<8x32xbf16>
    %4 = arith.extf %3 : vector<8x32xbf16> to vector<8x32xf32>
    %cst = arith.constant dense<0.000000e+00> : vector<8xf32>
    %5 = vector.multi_reduction <add>, %4, %cst [1] : vector<8x32xf32> to vector<8xf32>
    %6 = vector.shape_cast %5 : vector<8xf32> to vector<8x1xf32>
    %cst_2 = arith.constant 3.200000e+01 : f32
    %7 = vector.broadcast %cst_2 : f32 to vector<8x1xf32>
    %8 = arith.divf %6, %7 : vector<8x1xf32>
    %9 = vector.broadcast %8 : vector<8x1xf32> to vector<8x32xf32>
    %10 = arith.subf %4, %9 : vector<8x32xf32>
    %11 = arith.mulf %10, %10 : vector<8x32xf32>
    %cst_3 = arith.constant dense<0.000000e+00> : vector<8xf32>
    %12 = vector.multi_reduction <add>, %11, %cst_3 [1] : vector<8x32xf32> to vector<8xf32>
    %13 = vector.shape_cast %12 : vector<8xf32> to vector<8x1xf32>
    %cst_4 = arith.constant 3.200000e+01 : f32
    %14 = vector.broadcast %cst_4 : f32 to vector<8x1xf32>
    %15 = arith.divf %13, %14 : vector<8x1xf32>
    %16 = vector.broadcast %8 : vector<8x1xf32> to vector<8x32xf32>
    %17 = arith.subf %4, %16 : vector<8x32xf32>
    %cst_5 = arith.constant 9.99999974E-6 : f32
    %18 = vector.broadcast %cst_5 : f32 to vector<8x1xf32>
    %19 = arith.addf %15, %18 : vector<8x1xf32>
    %20 = math.rsqrt %19 : vector<8x1xf32>
    %21 = vector.broadcast %20 : vector<8x1xf32> to vector<8x32xf32>
    %22 = arith.mulf %17, %21 : vector<8x32xf32>
    %c0_6 = arith.constant 0 : index
    %c0_7 = arith.constant 0 : index
    %23 = vector.load %arg3[%c0_6, %c0_7] : memref<1x32xf32, #tpu.memory_space<vmem>>, vector<1x32xf32>
    %24 = vector.broadcast %23 : vector<1x32xf32> to vector<8x32xf32>
    %25 = arith.mulf %22, %24 : vector<8x32xf32>
    %c0_8 = arith.constant 0 : index
    %c0_9 = arith.constant 0 : index
    %26 = vector.load %arg4[%c0_8, %c0_9] : memref<1x32xf32, #tpu.memory_space<vmem>>, vector<1x32xf32>
    %27 = vector.broadcast %26 : vector<1x32xf32> to vector<8x32xf32>
    %28 = arith.addf %25, %27 : vector<8x32xf32>
    %29 = arith.truncf %28 : vector<8x32xf32> to vector<8x32xbf16>
    %c0_10 = arith.constant 0 : index
    %c0_11 = arith.constant 0 : index
    %30 = vector.load %arg5[%c0_10, %c0_11] : memref<32x128xbf16, #tpu.memory_space<vmem>>, vector<32x128xbf16>
    %cst_12 = arith.constant dense<0.000000e+00> : vector<8x128xf32>
    %31 = tpu.matmul %29, %30, %cst_12 {dimension_numbers = #tpu.dot_dimension_numbers<[1], [0], [0], [1], [0, 0, 1, 1], [], []>} : vector<8x32xbf16>, vector<32x128xbf16>, vector<8x128xf32> -> vector<8x128xf32>
    %c0_13 = arith.constant 0 : index
    %c0_14 = arith.constant 0 : index
    %32 = vector.load %arg6[%c0_13, %c0_14] : memref<1x128xf32, #tpu.memory_space<vmem>>, vector<1x128xf32>
    %33 = vector.broadcast %32 : vector<1x128xf32> to vector<8x128xf32>
    %34 = arith.addf %31, %33 : vector<8x128xf32>
    %35 = arith.negf %34 : vector<8x128xf32>
    %36 = math.exp %35 : vector<8x128xf32>
    %cst_15 = arith.constant 1.000000e+00 : f32
    %37 = vector.broadcast %cst_15 : f32 to vector<8x128xf32>
    %38 = arith.addf %37, %36 : vector<8x128xf32>
    %39 = arith.divf %37, %38 : vector<8x128xf32>
    %40 = arith.mulf %34, %39 : vector<8x128xf32>
    %c0_16 = arith.constant 0 : index
    %c0_17 = arith.constant 0 : index
    %41 = vector.load %arg10[%c0_16, %c0_17] : memref<8x32xf32, #tpu.memory_space<vmem>>, vector<8x32xf32>
    %42 = arith.truncf %40 : vector<8x128xf32> to vector<8x128xbf16>
    %c0_18 = arith.constant 0 : index
    %c0_19 = arith.constant 0 : index
    %43 = vector.load %arg7[%c0_18, %c0_19] : memref<128x32xbf16, #tpu.memory_space<vmem>>, vector<128x32xbf16>
    %cst_20 = arith.constant dense<0.000000e+00> : vector<8x32xf32>
    %44 = tpu.matmul %42, %43, %cst_20 {dimension_numbers = #tpu.dot_dimension_numbers<[1], [0], [0], [1], [0, 0, 1, 1], [], []>} : vector<8x128xbf16>, vector<128x32xbf16>, vector<8x32xf32> -> vector<8x32xf32>
    %45 = arith.addf %41, %44 : vector<8x32xf32>
    %c0_21 = arith.constant 0 : index
    %c0_22 = arith.constant 0 : index
    %46 = vector.load %arg10[%c0_21, %c0_22] : memref<8x32xf32, #tpu.memory_space<vmem>>, vector<8x32xf32>
    tpu.vector_store %arg10[%c0_21, %c0_22], %45 {strides = array<i32>} : memref<8x32xf32, #tpu.memory_space<vmem>>, vector<8x32xf32>,
    %c0_i32_23 = arith.constant 0 : i32
    %47 = arith.cmpi eq, %arg1, %c0_i32_23 : i32
    %48 = arith.extui %47 : i1 to i32
    %c0_i32_24 = arith.constant 0 : i32
    %49 = arith.cmpi ne, %48, %c0_i32_24 : i32
    scf.if %49 {
      %c0_25 = arith.constant 0 : index
      %c0_26 = arith.constant 0 : index
      %50 = vector.load %arg10[%c0_25, %c0_26] : memref<8x32xf32, #tpu.memory_space<vmem>>, vector<8x32xf32>
      %c0_27 = arith.constant 0 : index
      %c0_28 = arith.constant 0 : index
      %51 = vector.load %arg8[%c0_27, %c0_28] : memref<1x32xf32, #tpu.memory_space<vmem>>, vector<1x32xf32>
      %52 = vector.broadcast %51 : vector<1x32xf32> to vector<8x32xf32>
      %53 = arith.addf %50, %52 : vector<8x32xf32>
      %cst_29 = arith.constant 5.000000e-01 : f32
      %54 = vector.broadcast %cst_29 : f32 to vector<8x32xf32>
      %55 = arith.mulf %54, %53 : vector<8x32xf32>
      %56 = arith.truncf %55 : vector<8x32xf32> to vector<8x32xbf16>
      %c0_30 = arith.constant 0 : index
      %c0_31 = arith.constant 0 : index
      %57 = vector.load %arg9[%c0_30, %c0_31] : memref<8x32xbf16, #tpu.memory_space<vmem>>, vector<8x32xbf16>
      tpu.vector_store %arg9[%c0_30, %c0_31], %56 {strides = array<i32>} : memref<8x32xbf16, #tpu.memory_space<vmem>>, vector<8x32xbf16>,
    } else {
    }
    return
  }
  func.func @transform_0(%arg0: i32, %arg1: i32) -> (i32, i32) {
    %c0_i32 = arith.constant 0 : i32
    %c0_i32_0 = arith.constant 0 : i32
    return %arg0, %c0_i32 : i32, i32
  }
  func.func @transform_1(%arg0: i32, %arg1: i32) -> (i32, i32) {
    %c0_i32 = arith.constant 0 : i32
    %c0_i32_0 = arith.constant 0 : i32
    %c0_i32_1 = arith.constant 0 : i32
    return %c0_i32, %c0_i32_0 : i32, i32
  }
  func.func @transform_2(%arg0: i32, %arg1: i32) -> (i32, i32) {
    %c0_i32 = arith.constant 0 : i32
    %c0_i32_0 = arith.constant 0 : i32
    %c0_i32_1 = arith.constant 0 : i32
    return %c0_i32, %c0_i32_0 : i32, i32
  }
  func.func @transform_3(%arg0: i32, %arg1: i32) -> (i32, i32) {
    %c0_i32 = arith.constant 0 : i32
    %c0_i32_0 = arith.constant 0 : i32
    return %c0_i32, %arg1 : i32, i32
  }
  func.func @transform_4(%arg0: i32, %arg1: i32) -> (i32, i32) {
    %c0_i32 = arith.constant 0 : i32
    %c0_i32_0 = arith.constant 0 : i32
    return %c0_i32, %arg1 : i32, i32
  }
  func.func @transform_5(%arg0: i32, %arg1: i32) -> (i32, i32) {
    %c0_i32 = arith.constant 0 : i32
    %c0_i32_0 = arith.constant 0 : i32
    return %arg1, %c0_i32 : i32, i32
  }
  func.func @transform_6(%arg0: i32, %arg1: i32) -> (i32, i32) {
    %c0_i32 = arith.constant 0 : i32
    %c0_i32_0 = arith.constant 0 : i32
    %c0_i32_1 = arith.constant 0 : i32
    return %c0_i32, %c0_i32_0 : i32, i32
  }
  func.func @transform_7(%arg0: i32, %arg1: i32) -> (i32, i32) {
    %c0_i32 = arith.constant 0 : i32
    %c0_i32_0 = arith.constant 0 : i32
    return %arg0, %c0_i32 : i32, i32
  }
}

module attributes {stable_mosaic.version = 11 : i64} {
  func.func @_ln_kernel(%arg0: i32, %arg1: memref<8x32xbf16, #tpu.memory_space<vmem>>, %arg2: memref<1x32xf32, #tpu.memory_space<vmem>>, %arg3: memref<1x32xf32, #tpu.memory_space<vmem>>, %arg4: memref<8x32xbf16, #tpu.memory_space<vmem>>) attributes {dimension_semantics = [#tpu.dimension_semantics<parallel>], iteration_bounds = array<i64: 1>, scalar_prefetch = 0 : i64, scratch_operands = 0 : i64, tpu.core_type = #tpu.core_type<tc>, window_params = [{transform_indices = @transform_0, window_bounds = array<i64: 8, 32>}, {pipeline_mode = #tpu.pipeline_mode<synchronous>, transform_indices = @transform_1, window_bounds = array<i64: 1, 32>}, {pipeline_mode = #tpu.pipeline_mode<synchronous>, transform_indices = @transform_2, window_bounds = array<i64: 1, 32>}, {transform_indices = @transform_3, window_bounds = array<i64: 8, 32>}]} {
    %c0 = arith.constant 0 : index
    %c0_0 = arith.constant 0 : index
    %0 = vector.load %arg1[%c0, %c0_0] : memref<8x32xbf16, #tpu.memory_space<vmem>>, vector<8x32xbf16>
    %1 = arith.extf %0 : vector<8x32xbf16> to vector<8x32xf32>
    %cst = arith.constant dense<0.000000e+00> : vector<8xf32>
    %2 = vector.multi_reduction <add>, %1, %cst [1] : vector<8x32xf32> to vector<8xf32>
    %3 = vector.shape_cast %2 : vector<8xf32> to vector<8x1xf32>
    %cst_1 = arith.constant 3.200000e+01 : f32
    %4 = vector.broadcast %cst_1 : f32 to vector<8x1xf32>
    %5 = arith.divf %3, %4 : vector<8x1xf32>
    %6 = vector.broadcast %5 : vector<8x1xf32> to vector<8x32xf32>
    %7 = arith.subf %1, %6 : vector<8x32xf32>
    %8 = arith.mulf %7, %7 : vector<8x32xf32>
    %cst_2 = arith.constant dense<0.000000e+00> : vector<8xf32>
    %9 = vector.multi_reduction <add>, %8, %cst_2 [1] : vector<8x32xf32> to vector<8xf32>
    %10 = vector.shape_cast %9 : vector<8xf32> to vector<8x1xf32>
    %cst_3 = arith.constant 3.200000e+01 : f32
    %11 = vector.broadcast %cst_3 : f32 to vector<8x1xf32>
    %12 = arith.divf %10, %11 : vector<8x1xf32>
    %13 = vector.broadcast %5 : vector<8x1xf32> to vector<8x32xf32>
    %14 = arith.subf %1, %13 : vector<8x32xf32>
    %cst_4 = arith.constant 9.99999974E-6 : f32
    %15 = vector.broadcast %cst_4 : f32 to vector<8x1xf32>
    %16 = arith.addf %12, %15 : vector<8x1xf32>
    %17 = math.rsqrt %16 : vector<8x1xf32>
    %18 = vector.broadcast %17 : vector<8x1xf32> to vector<8x32xf32>
    %19 = arith.mulf %14, %18 : vector<8x32xf32>
    %c0_5 = arith.constant 0 : index
    %c0_6 = arith.constant 0 : index
    %20 = vector.load %arg2[%c0_5, %c0_6] : memref<1x32xf32, #tpu.memory_space<vmem>>, vector<1x32xf32>
    %21 = vector.broadcast %20 : vector<1x32xf32> to vector<8x32xf32>
    %22 = arith.mulf %19, %21 : vector<8x32xf32>
    %c0_7 = arith.constant 0 : index
    %c0_8 = arith.constant 0 : index
    %23 = vector.load %arg3[%c0_7, %c0_8] : memref<1x32xf32, #tpu.memory_space<vmem>>, vector<1x32xf32>
    %24 = vector.broadcast %23 : vector<1x32xf32> to vector<8x32xf32>
    %25 = arith.addf %22, %24 : vector<8x32xf32>
    %26 = arith.truncf %25 : vector<8x32xf32> to vector<8x32xbf16>
    %c0_9 = arith.constant 0 : index
    %c0_10 = arith.constant 0 : index
    %27 = vector.load %arg4[%c0_9, %c0_10] : memref<8x32xbf16, #tpu.memory_space<vmem>>, vector<8x32xbf16>
    tpu.vector_store %arg4[%c0_9, %c0_10], %26 {strides = array<i32>} : memref<8x32xbf16, #tpu.memory_space<vmem>>, vector<8x32xbf16>,
    return
  }
  func.func @transform_0(%arg0: i32) -> (i32, i32) {
    %c0_i32 = arith.constant 0 : i32
    %c0_i32_0 = arith.constant 0 : i32
    return %arg0, %c0_i32 : i32, i32
  }
  func.func @transform_1(%arg0: i32) -> (i32, i32) {
    %c0_i32 = arith.constant 0 : i32
    %c0_i32_0 = arith.constant 0 : i32
    %c0_i32_1 = arith.constant 0 : i32
    return %c0_i32, %c0_i32_0 : i32, i32
  }
  func.func @transform_2(%arg0: i32) -> (i32, i32) {
    %c0_i32 = arith.constant 0 : i32
    %c0_i32_0 = arith.constant 0 : i32
    %c0_i32_1 = arith.constant 0 : i32
    return %c0_i32, %c0_i32_0 : i32, i32
  }
  func.func @transform_3(%arg0: i32) -> (i32, i32) {
    %c0_i32 = arith.constant 0 : i32
    %c0_i32_0 = arith.constant 0 : i32
    return %arg0, %c0_i32 : i32, i32
  }
}

module attributes {stable_mosaic.version = 11 : i64} {
  func.func @_matmul_kernel(%arg0: i32, %arg1: i32, %arg2: i32, %arg3: memref<8x32xbf16, #tpu.memory_space<vmem>>, %arg4: memref<32x64xbf16, #tpu.memory_space<vmem>>, %arg5: memref<1x64xf32, #tpu.memory_space<vmem>>, %arg6: memref<8x64xbf16, #tpu.memory_space<vmem>>) attributes {dimension_semantics = [#tpu.dimension_semantics<parallel>, #tpu.dimension_semantics<parallel>, #tpu.dimension_semantics<arbitrary>], iteration_bounds = array<i64: 1, 1, 1>, scalar_prefetch = 0 : i64, scratch_operands = 0 : i64, tpu.core_type = #tpu.core_type<tc>, window_params = [{transform_indices = @transform_0, window_bounds = array<i64: 8, 32>}, {transform_indices = @transform_1, window_bounds = array<i64: 32, 64>}, {transform_indices = @transform_2, window_bounds = array<i64: 1, 64>}, {transform_indices = @transform_3, window_bounds = array<i64: 8, 64>}]} {
    %c0 = arith.constant 0 : index
    %c0_0 = arith.constant 0 : index
    %0 = vector.load %arg3[%c0, %c0_0] : memref<8x32xbf16, #tpu.memory_space<vmem>>, vector<8x32xbf16>
    %c0_1 = arith.constant 0 : index
    %c0_2 = arith.constant 0 : index
    %1 = vector.load %arg4[%c0_1, %c0_2] : memref<32x64xbf16, #tpu.memory_space<vmem>>, vector<32x64xbf16>
    %cst = arith.constant dense<0.000000e+00> : vector<8x64xf32>
    %2 = tpu.matmul %0, %1, %cst {dimension_numbers = #tpu.dot_dimension_numbers<[1], [0], [0], [1], [0, 0, 1, 1], [], []>} : vector<8x32xbf16>, vector<32x64xbf16>, vector<8x64xf32> -> vector<8x64xf32>
    %c0_3 = arith.constant 0 : index
    %c0_4 = arith.constant 0 : index
    %3 = vector.load %arg5[%c0_3, %c0_4] : memref<1x64xf32, #tpu.memory_space<vmem>>, vector<1x64xf32>
    %4 = vector.broadcast %3 : vector<1x64xf32> to vector<8x64xf32>
    %5 = arith.addf %2, %4 : vector<8x64xf32>
    %6 = arith.truncf %5 : vector<8x64xf32> to vector<8x64xbf16>
    %c0_5 = arith.constant 0 : index
    %c0_6 = arith.constant 0 : index
    %7 = vector.load %arg6[%c0_5, %c0_6] : memref<8x64xbf16, #tpu.memory_space<vmem>>, vector<8x64xbf16>
    tpu.vector_store %arg6[%c0_5, %c0_6], %6 {strides = array<i32>} : memref<8x64xbf16, #tpu.memory_space<vmem>>, vector<8x64xbf16>,
    return
  }
  func.func @transform_0(%arg0: i32, %arg1: i32, %arg2: i32) -> (i32, i32) {
    %c0_i32 = arith.constant 0 : i32
    return %arg0, %arg2 : i32, i32
  }
  func.func @transform_1(%arg0: i32, %arg1: i32, %arg2: i32) -> (i32, i32) {
    %c0_i32 = arith.constant 0 : i32
    return %arg2, %arg1 : i32, i32
  }
  func.func @transform_2(%arg0: i32, %arg1: i32, %arg2: i32) -> (i32, i32) {
    %c0_i32 = arith.constant 0 : i32
    %c0_i32_0 = arith.constant 0 : i32
    return %c0_i32, %arg1 : i32, i32
  }
  func.func @transform_3(%arg0: i32, %arg1: i32, %arg2: i32) -> (i32, i32) {
    %c0_i32 = arith.constant 0 : i32
    return %arg0, %arg1 : i32, i32
  }
}

module attributes {stable_mosaic.version = 11 : i64} {
  func.func @_matmul_kernel(%arg0: i32, %arg1: i32, %arg2: i32, %arg3: memref<8x32xbf16, #tpu.memory_space<vmem>>, %arg4: memref<32x32xbf16, #tpu.memory_space<vmem>>, %arg5: memref<1x32xf32, #tpu.memory_space<vmem>>, %arg6: memref<8x32xbf16, #tpu.memory_space<vmem>>) attributes {dimension_semantics = [#tpu.dimension_semantics<parallel>, #tpu.dimension_semantics<parallel>, #tpu.dimension_semantics<arbitrary>], iteration_bounds = array<i64: 1, 1, 1>, scalar_prefetch = 0 : i64, scratch_operands = 0 : i64, tpu.core_type = #tpu.core_type<tc>, window_params = [{transform_indices = @transform_0, window_bounds = array<i64: 8, 32>}, {transform_indices = @transform_1, window_bounds = array<i64: 32, 32>}, {transform_indices = @transform_2, window_bounds = array<i64: 1, 32>}, {transform_indices = @transform_3, window_bounds = array<i64: 8, 32>}]} {
    %c0 = arith.constant 0 : index
    %c0_0 = arith.constant 0 : index
    %0 = vector.load %arg3[%c0, %c0_0] : memref<8x32xbf16, #tpu.memory_space<vmem>>, vector<8x32xbf16>
    %c0_1 = arith.constant 0 : index
    %c0_2 = arith.constant 0 : index
    %1 = vector.load %arg4[%c0_1, %c0_2] : memref<32x32xbf16, #tpu.memory_space<vmem>>, vector<32x32xbf16>
    %cst = arith.constant dense<0.000000e+00> : vector<8x32xf32>
    %2 = tpu.matmul %0, %1, %cst {dimension_numbers = #tpu.dot_dimension_numbers<[1], [0], [0], [1], [0, 0, 1, 1], [], []>} : vector<8x32xbf16>, vector<32x32xbf16>, vector<8x32xf32> -> vector<8x32xf32>
    %c0_3 = arith.constant 0 : index
    %c0_4 = arith.constant 0 : index
    %3 = vector.load %arg5[%c0_3, %c0_4] : memref<1x32xf32, #tpu.memory_space<vmem>>, vector<1x32xf32>
    %4 = vector.broadcast %3 : vector<1x32xf32> to vector<8x32xf32>
    %5 = arith.addf %2, %4 : vector<8x32xf32>
    %6 = arith.truncf %5 : vector<8x32xf32> to vector<8x32xbf16>
    %c0_5 = arith.constant 0 : index
    %c0_6 = arith.constant 0 : index
    %7 = vector.load %arg6[%c0_5, %c0_6] : memref<8x32xbf16, #tpu.memory_space<vmem>>, vector<8x32xbf16>
    tpu.vector_store %arg6[%c0_5, %c0_6], %6 {strides = array<i32>} : memref<8x32xbf16, #tpu.memory_space<vmem>>, vector<8x32xbf16>,
    return
  }
  func.func @transform_0(%arg0: i32, %arg1: i32, %arg2: i32) -> (i32, i32) {
    %c0_i32 = arith.constant 0 : i32
    return %arg0, %arg2 : i32, i32
  }
  func.func @transform_1(%arg0: i32, %arg1: i32, %arg2: i32) -> (i32, i32) {
    %c0_i32 = arith.constant 0 : i32
    return %arg2, %arg1 : i32, i32
  }
  func.func @transform_2(%arg0: i32, %arg1: i32, %arg2: i32) -> (i32, i32) {
    %c0_i32 = arith.constant 0 : i32
    %c0_i32_0 = arith.constant 0 : i32
    return %c0_i32, %arg1 : i32, i32
  }
  func.func @transform_3(%arg0: i32, %arg1: i32, %arg2: i32) -> (i32, i32) {
    %c0_i32 = arith.constant 0 : i32
    return %arg0, %arg1 : i32, i32
  }
}

module attributes {stable_mosaic.version = 11 : i64} {
  func.func @_attn_kernel(%arg0: i32, %arg1: i32, %arg2: memref<1x4x4x8xbf16, #tpu.memory_space<vmem>>, %arg3: memref<1x4x4x8xbf16, #tpu.memory_space<vmem>>, %arg4: memref<1x4x4x8xbf16, #tpu.memory_space<vmem>>, %arg5: memref<1x4x4x8xbf16, #tpu.memory_space<vmem>>) attributes {dimension_semantics = [#tpu.dimension_semantics<parallel>, #tpu.dimension_semantics<parallel>], iteration_bounds = array<i64: 2, 1>, scalar_prefetch = 0 : i64, scratch_operands = 0 : i64, tpu.core_type = #tpu.core_type<tc>, window_params = [{transform_indices = @transform_0, window_bounds = array<i64: 1, 4, 4, 8>}, {transform_indices = @transform_1, window_bounds = array<i64: 1, 4, 4, 8>}, {transform_indices = @transform_2, window_bounds = array<i64: 1, 4, 4, 8>}, {transform_indices = @transform_3, window_bounds = array<i64: 1, 4, 4, 8>}]} {
    %c0 = arith.constant 0 : index
    %c0_0 = arith.constant 0 : index
    %c0_1 = arith.constant 0 : index
    %c0_2 = arith.constant 0 : index
    %0 = vector.load %arg2[%c0, %c0_0, %c0_1, %c0_2] : memref<1x4x4x8xbf16, #tpu.memory_space<vmem>>, vector<1x4x4x8xbf16>
    %1 = vector.shape_cast %0 : vector<1x4x4x8xbf16> to vector<4x4x8xbf16>
    %c0_3 = arith.constant 0 : index
    %c0_4 = arith.constant 0 : index
    %c0_5 = arith.constant 0 : index
    %c0_6 = arith.constant 0 : index
    %2 = vector.load %arg3[%c0_3, %c0_4, %c0_5, %c0_6] : memref<1x4x4x8xbf16, #tpu.memory_space<vmem>>, vector<1x4x4x8xbf16>
    %3 = vector.shape_cast %2 : vector<1x4x4x8xbf16> to vector<4x4x8xbf16>
    %c0_7 = arith.constant 0 : index
    %c0_8 = arith.constant 0 : index
    %c0_9 = arith.constant 0 : index
    %c0_10 = arith.constant 0 : index
    %4 = vector.load %arg4[%c0_7, %c0_8, %c0_9, %c0_10] : memref<1x4x4x8xbf16, #tpu.memory_space<vmem>>, vector<1x4x4x8xbf16>
    %5 = vector.shape_cast %4 : vector<1x4x4x8xbf16> to vector<4x4x8xbf16>
    %cst = arith.constant dense<0.000000e+00> : vector<4x4x4xf32>
    %6 = tpu.matmul %1, %3, %cst {dimension_numbers = #tpu.dot_dimension_numbers<[2], [2], [1], [1], [0, 0, 0, 1, 1, 1], [0], [0]>} : vector<4x4x8xbf16>, vector<4x4x8xbf16>, vector<4x4x4xf32> -> vector<4x4x4xf32>
    %cst_11 = arith.constant 0.353553385 : f32
    %7 = vector.broadcast %cst_11 : f32 to vector<4x4x4xf32>
    %8 = arith.mulf %6, %7 : vector<4x4x4xf32>
    %cst_12 = arith.constant dense<0xFF800000> : vector<4x4xf32>
    %9 = vector.multi_reduction <maximumf>, %8, %cst_12 [2] : vector<4x4x4xf32> to vector<4x4xf32>
    %10 = vector.shape_cast %9 : vector<4x4xf32> to vector<4x4x1xf32>
    %11 = vector.broadcast %10 : vector<4x4x1xf32> to vector<4x4x4xf32>
    %12 = arith.subf %8, %11 : vector<4x4x4xf32>
    %13 = math.exp %12 : vector<4x4x4xf32>
    %cst_13 = arith.constant dense<0.000000e+00> : vector<4x4xf32>
    %14 = vector.multi_reduction <add>, %13, %cst_13 [2] : vector<4x4x4xf32> to vector<4x4xf32>
    %15 = vector.shape_cast %14 : vector<4x4xf32> to vector<4x4x1xf32>
    %16 = tpu.reciprocal %15 {approx = true} : vector<4x4x1xf32> -> vector<4x4x1xf32>
    %17 = arith.truncf %13 : vector<4x4x4xf32> to vector<4x4x4xbf16>
    %cst_14 = arith.constant dense<0.000000e+00> : vector<4x4x8xf32>
    %18 = tpu.matmul %17, %5, %cst_14 {dimension_numbers = #tpu.dot_dimension_numbers<[2], [1], [1], [2], [0, 0, 0, 1, 1, 2], [0], [0]>} : vector<4x4x4xbf16>, vector<4x4x8xbf16>, vector<4x4x8xf32> -> vector<4x4x8xf32>
    %19 = vector.broadcast %16 : vector<4x4x1xf32> to vector<4x4x8xf32>
    %20 = arith.mulf %18, %19 : vector<4x4x8xf32>
    %21 = vector.shape_cast %20 : vector<4x4x8xf32> to vector<1x4x4x8xf32>
    %22 = arith.truncf %21 : vector<1x4x4x8xf32> to vector<1x4x4x8xbf16>
    %c0_15 = arith.constant 0 : index
    %c0_16 = arith.constant 0 : index
    %c0_17 = arith.constant 0 : index
    %c0_18 = arith.constant 0 : index
    %23 = vector.load %arg5[%c0_15, %c0_16, %c0_17, %c0_18] : memref<1x4x4x8xbf16, #tpu.memory_space<vmem>>, vector<1x4x4x8xbf16>
    tpu.vector_store %arg5[%c0_15, %c0_16, %c0_17, %c0_18], %22 {strides = array<i32>} : memref<1x4x4x8xbf16, #tpu.memory_space<vmem>>, vector<1x4x4x8xbf16>,
    return
  }
  func.func @transform_0(%arg0: i32, %arg1: i32) -> (i32, i32, i32, i32) {
    %c0_i32 = arith.constant 0 : i32
    %c0_i32_0 = arith.constant 0 : i32
    %c0_i32_1 = arith.constant 0 : i32
    return %arg0, %arg1, %c0_i32, %c0_i32_0 : i32, i32, i32, i32
  }
  func.func @transform_1(%arg0: i32, %arg1: i32) -> (i32, i32, i32, i32) {
    %c0_i32 = arith.constant 0 : i32
    %c0_i32_0 = arith.constant 0 : i32
    %c0_i32_1 = arith.constant 0 : i32
    return %arg0, %arg1, %c0_i32, %c0_i32_0 : i32, i32, i32, i32
  }
  func.func @transform_2(%arg0: i32, %arg1: i32) -> (i32, i32, i32, i32) {
    %c0_i32 = arith.constant 0 : i32
    %c0_i32_0 = arith.constant 0 : i32
    %c0_i32_1 = arith.constant 0 : i32
    return %arg0, %arg1, %c0_i32, %c0_i32_0 : i32, i32, i32, i32
  }
  func.func @transform_3(%arg0: i32, %arg1: i32) -> (i32, i32, i32, i32) {
    %c0_i32 = arith.constant 0 : i32
    %c0_i32_0 = arith.constant 0 : i32
    %c0_i32_1 = arith.constant 0 : i32
    return %arg0, %arg1, %c0_i32, %c0_i32_0 : i32, i32, i32, i32
  }
}

module attributes {stable_mosaic.version = 11 : i64} {
  func.func @_glu_kernel(%arg0: i32, %arg1: i32, %arg2: memref<8x32xbf16, #tpu.memory_space<vmem>>, %arg3: memref<1x32xf32, #tpu.memory_space<vmem>>, %arg4: memref<1x32xf32, #tpu.memory_space<vmem>>, %arg5: memref<32x32xbf16, #tpu.memory_space<vmem>>, %arg6: memref<32x32xbf16, #tpu.memory_space<vmem>>, %arg7: memref<8x32xbf16, #tpu.memory_space<vmem>>) attributes {dimension_semantics = [#tpu.dimension_semantics<parallel>, #tpu.dimension_semantics<parallel>], iteration_bounds = array<i64: 1, 1>, scalar_prefetch = 0 : i64, scratch_operands = 0 : i64, tpu.core_type = #tpu.core_type<tc>, window_params = [{transform_indices = @transform_0, window_bounds = array<i64: 8, 32>}, {pipeline_mode = #tpu.pipeline_mode<synchronous>, transform_indices = @transform_1, window_bounds = array<i64: 1, 32>}, {pipeline_mode = #tpu.pipeline_mode<synchronous>, transform_indices = @transform_2, window_bounds = array<i64: 1, 32>}, {transform_indices = @transform_3, window_bounds = array<i64: 32, 32>}, {transform_indices = @transform_4, window_bounds = array<i64: 32, 32>}, {transform_indices = @transform_5, window_bounds = array<i64: 8, 32>}]} {
    %c0 = arith.constant 0 : index
    %c0_0 = arith.constant 0 : index
    %0 = vector.load %arg2[%c0, %c0_0] : memref<8x32xbf16, #tpu.memory_space<vmem>>, vector<8x32xbf16>
    %1 = arith.extf %0 : vector<8x32xbf16> to vector<8x32xf32>
    %cst = arith.constant dense<0.000000e+00> : vector<8xf32>
    %2 = vector.multi_reduction <add>, %1, %cst [1] : vector<8x32xf32> to vector<8xf32>
    %3 = vector.shape_cast %2 : vector<8xf32> to vector<8x1xf32>
    %cst_1 = arith.constant 3.200000e+01 : f32
    %4 = vector.broadcast %cst_1 : f32 to vector<8x1xf32>
    %5 = arith.divf %3, %4 : vector<8x1xf32>
    %6 = vector.broadcast %5 : vector<8x1xf32> to vector<8x32xf32>
    %7 = arith.subf %1, %6 : vector<8x32xf32>
    %8 = arith.mulf %7, %7 : vector<8x32xf32>
    %cst_2 = arith.constant dense<0.000000e+00> : vector<8xf32>
    %9 = vector.multi_reduction <add>, %8, %cst_2 [1] : vector<8x32xf32> to vector<8xf32>
    %10 = vector.shape_cast %9 : vector<8xf32> to vector<8x1xf32>
    %cst_3 = arith.constant 3.200000e+01 : f32
    %11 = vector.broadcast %cst_3 : f32 to vector<8x1xf32>
    %12 = arith.divf %10, %11 : vector<8x1xf32>
    %13 = vector.broadcast %5 : vector<8x1xf32> to vector<8x32xf32>
    %14 = arith.subf %1, %13 : vector<8x32xf32>
    %cst_4 = arith.constant 9.99999974E-6 : f32
    %15 = vector.broadcast %cst_4 : f32 to vector<8x1xf32>
    %16 = arith.addf %12, %15 : vector<8x1xf32>
    %17 = math.rsqrt %16 : vector<8x1xf32>
    %18 = vector.broadcast %17 : vector<8x1xf32> to vector<8x32xf32>
    %19 = arith.mulf %14, %18 : vector<8x32xf32>
    %c0_5 = arith.constant 0 : index
    %c0_6 = arith.constant 0 : index
    %20 = vector.load %arg3[%c0_5, %c0_6] : memref<1x32xf32, #tpu.memory_space<vmem>>, vector<1x32xf32>
    %21 = vector.broadcast %20 : vector<1x32xf32> to vector<8x32xf32>
    %22 = arith.mulf %19, %21 : vector<8x32xf32>
    %c0_7 = arith.constant 0 : index
    %c0_8 = arith.constant 0 : index
    %23 = vector.load %arg4[%c0_7, %c0_8] : memref<1x32xf32, #tpu.memory_space<vmem>>, vector<1x32xf32>
    %24 = vector.broadcast %23 : vector<1x32xf32> to vector<8x32xf32>
    %25 = arith.addf %22, %24 : vector<8x32xf32>
    %26 = arith.truncf %25 : vector<8x32xf32> to vector<8x32xbf16>
    %c0_9 = arith.constant 0 : index
    %c0_10 = arith.constant 0 : index
    %27 = vector.load %arg5[%c0_9, %c0_10] : memref<32x32xbf16, #tpu.memory_space<vmem>>, vector<32x32xbf16>
    %cst_11 = arith.constant dense<0.000000e+00> : vector<8x32xf32>
    %28 = tpu.matmul %26, %27, %cst_11 {dimension_numbers = #tpu.dot_dimension_numbers<[1], [0], [0], [1], [0, 0, 1, 1], [], []>} : vector<8x32xbf16>, vector<32x32xbf16>, vector<8x32xf32> -> vector<8x32xf32>
    %c0_12 = arith.constant 0 : index
    %c0_13 = arith.constant 0 : index
    %29 = vector.load %arg6[%c0_12, %c0_13] : memref<32x32xbf16, #tpu.memory_space<vmem>>, vector<32x32xbf16>
    %cst_14 = arith.constant dense<0.000000e+00> : vector<8x32xf32>
    %30 = tpu.matmul %26, %29, %cst_14 {dimension_numbers = #tpu.dot_dimension_numbers<[1], [0], [0], [1], [0, 0, 1, 1], [], []>} : vector<8x32xbf16>, vector<32x32xbf16>, vector<8x32xf32> -> vector<8x32xf32>
    %31 = arith.negf %30 : vector<8x32xf32>
    %32 = math.exp %31 : vector<8x32xf32>
    %cst_15 = arith.constant 1.000000e+00 : f32
    %33 = vector.broadcast %cst_15 : f32 to vector<8x32xf32>
    %34 = arith.addf %33, %32 : vector<8x32xf32>
    %35 = arith.divf %33, %34 : vector<8x32xf32>
    %36 = arith.mulf %28, %35 : vector<8x32xf32>
    %37 = arith.truncf %36 : vector<8x32xf32> to vector<8x32xbf16>
    %c0_16 = arith.constant 0 : index
    %c0_17 = arith.constant 0 : index
    %38 = vector.load %arg7[%c0_16, %c0_17] : memref<8x32xbf16, #tpu.memory_space<vmem>>, vector<8x32xbf16>
    tpu.vector_store %arg7[%c0_16, %c0_17], %37 {strides = array<i32>} : memref<8x32xbf16, #tpu.memory_space<vmem>>, vector<8x32xbf16>,
    return
  }
  func.func @transform_0(%arg0: i32, %arg1: i32) -> (i32, i32) {
    %c0_i32 = arith.constant 0 : i32
    %c0_i32_0 = arith.constant 0 : i32
    return %arg0, %c0_i32 : i32, i32
  }
  func.func @transform_1(%arg0: i32, %arg1: i32) -> (i32, i32) {
    %c0_i32 = arith.constant 0 : i32
    %c0_i32_0 = arith.constant 0 : i32
    %c0_i32_1 = arith.constant 0 : i32
    return %c0_i32, %c0_i32_0 : i32, i32
  }
  func.func @transform_2(%arg0: i32, %arg1: i32) -> (i32, i32) {
    %c0_i32 = arith.constant 0 : i32
    %c0_i32_0 = arith.constant 0 : i32
    %c0_i32_1 = arith.constant 0 : i32
    return %c0_i32, %c0_i32_0 : i32, i32
  }
  func.func @transform_3(%arg0: i32, %arg1: i32) -> (i32, i32) {
    %c0_i32 = arith.constant 0 : i32
    %c0_i32_0 = arith.constant 0 : i32
    return %c0_i32, %arg1 : i32, i32
  }
  func.func @transform_4(%arg0: i32, %arg1: i32) -> (i32, i32) {
    %c0_i32 = arith.constant 0 : i32
    %c0_i32_0 = arith.constant 0 : i32
    return %c0_i32, %arg1 : i32, i32
  }
  func.func @transform_5(%arg0: i32, %arg1: i32) -> (i32, i32) {
    %c0_i32 = arith.constant 0 : i32
    return %arg0, %arg1 : i32, i32
  }
}

module attributes {stable_mosaic.version = 11 : i64} {
  func.func @_convmod_tail_kernel(%arg0: i32, %arg1: memref<1x8x32xbf16, #tpu.memory_space<vmem>>, %arg2: memref<5x32xf32, #tpu.memory_space<vmem>>, %arg3: memref<1x32xf32, #tpu.memory_space<vmem>>, %arg4: memref<1x32xf32, #tpu.memory_space<vmem>>, %arg5: memref<32x32xbf16, #tpu.memory_space<vmem>>, %arg6: memref<1x4x32xbf16, #tpu.memory_space<vmem>>) attributes {dimension_semantics = [#tpu.dimension_semantics<parallel>], iteration_bounds = array<i64: 2>, scalar_prefetch = 0 : i64, scratch_operands = 0 : i64, tpu.core_type = #tpu.core_type<tc>, window_params = [{transform_indices = @transform_0, window_bounds = array<i64: 1, 8, 32>}, {pipeline_mode = #tpu.pipeline_mode<synchronous>, transform_indices = @transform_1, window_bounds = array<i64: 5, 32>}, {pipeline_mode = #tpu.pipeline_mode<synchronous>, transform_indices = @transform_2, window_bounds = array<i64: 1, 32>}, {pipeline_mode = #tpu.pipeline_mode<synchronous>, transform_indices = @transform_3, window_bounds = array<i64: 1, 32>}, {pipeline_mode = #tpu.pipeline_mode<synchronous>, transform_indices = @transform_4, window_bounds = array<i64: 32, 32>}, {transform_indices = @transform_5, window_bounds = array<i64: 1, 4, 32>}]} {
    %c0 = arith.constant 0 : index
    %c0_0 = arith.constant 0 : index
    %c0_1 = arith.constant 0 : index
    %0 = vector.load %arg1[%c0, %c0_0, %c0_1] : memref<1x8x32xbf16, #tpu.memory_space<vmem>>, vector<1x8x32xbf16>
    %1 = vector.shape_cast %0 : vector<1x8x32xbf16> to vector<8x32xbf16>
    %2 = arith.extf %1 : vector<8x32xbf16> to vector<8x32xf32>
    %c0_2 = arith.constant 0 : index
    %c0_3 = arith.constant 0 : index
    %3 = vector.load %arg2[%c0_2, %c0_3] : memref<5x32xf32, #tpu.memory_space<vmem>>, vector<5x32xf32>
    %4 = vector.extract_strided_slice %2 {offsets = [0, 0], sizes = [4, 32], strides = [1, 1]} : vector<8x32xf32> to vector<4x32xf32>
    %5 = vector.extract_strided_slice %3 {offsets = [0, 0], sizes = [1, 32], strides = [1, 1]} : vector<5x32xf32> to vector<1x32xf32>
    %6 = vector.broadcast %5 : vector<1x32xf32> to vector<4x32xf32>
    %7 = arith.mulf %4, %6 : vector<4x32xf32>
    %8 = vector.extract_strided_slice %2 {offsets = [1, 0], sizes = [4, 32], strides = [1, 1]} : vector<8x32xf32> to vector<4x32xf32>
    %9 = vector.extract_strided_slice %3 {offsets = [1, 0], sizes = [1, 32], strides = [1, 1]} : vector<5x32xf32> to vector<1x32xf32>
    %10 = vector.broadcast %9 : vector<1x32xf32> to vector<4x32xf32>
    %11 = arith.mulf %8, %10 : vector<4x32xf32>
    %12 = arith.addf %7, %11 : vector<4x32xf32>
    %13 = vector.extract_strided_slice %2 {offsets = [2, 0], sizes = [4, 32], strides = [1, 1]} : vector<8x32xf32> to vector<4x32xf32>
    %14 = vector.extract_strided_slice %3 {offsets = [2, 0], sizes = [1, 32], strides = [1, 1]} : vector<5x32xf32> to vector<1x32xf32>
    %15 = vector.broadcast %14 : vector<1x32xf32> to vector<4x32xf32>
    %16 = arith.mulf %13, %15 : vector<4x32xf32>
    %17 = arith.addf %12, %16 : vector<4x32xf32>
    %18 = vector.extract_strided_slice %2 {offsets = [3, 0], sizes = [4, 32], strides = [1, 1]} : vector<8x32xf32> to vector<4x32xf32>
    %19 = vector.extract_strided_slice %3 {offsets = [3, 0], sizes = [1, 32], strides = [1, 1]} : vector<5x32xf32> to vector<1x32xf32>
    %20 = vector.broadcast %19 : vector<1x32xf32> to vector<4x32xf32>
    %21 = arith.mulf %18, %20 : vector<4x32xf32>
    %22 = arith.addf %17, %21 : vector<4x32xf32>
    %23 = vector.extract_strided_slice %2 {offsets = [4, 0], sizes = [4, 32], strides = [1, 1]} : vector<8x32xf32> to vector<4x32xf32>
    %24 = vector.extract_strided_slice %3 {offsets = [4, 0], sizes = [1, 32], strides = [1, 1]} : vector<5x32xf32> to vector<1x32xf32>
    %25 = vector.broadcast %24 : vector<1x32xf32> to vector<4x32xf32>
    %26 = arith.mulf %23, %25 : vector<4x32xf32>
    %27 = arith.addf %22, %26 : vector<4x32xf32>
    %c0_4 = arith.constant 0 : index
    %c0_5 = arith.constant 0 : index
    %28 = vector.load %arg3[%c0_4, %c0_5] : memref<1x32xf32, #tpu.memory_space<vmem>>, vector<1x32xf32>
    %29 = vector.broadcast %28 : vector<1x32xf32> to vector<4x32xf32>
    %30 = arith.mulf %27, %29 : vector<4x32xf32>
    %c0_6 = arith.constant 0 : index
    %c0_7 = arith.constant 0 : index
    %31 = vector.load %arg4[%c0_6, %c0_7] : memref<1x32xf32, #tpu.memory_space<vmem>>, vector<1x32xf32>
    %32 = vector.broadcast %31 : vector<1x32xf32> to vector<4x32xf32>
    %33 = arith.addf %30, %32 : vector<4x32xf32>
    %34 = arith.negf %33 : vector<4x32xf32>
    %35 = math.exp %34 : vector<4x32xf32>
    %cst = arith.constant 1.000000e+00 : f32
    %36 = vector.broadcast %cst : f32 to vector<4x32xf32>
    %37 = arith.addf %36, %35 : vector<4x32xf32>
    %38 = arith.divf %36, %37 : vector<4x32xf32>
    %39 = arith.mulf %33, %38 : vector<4x32xf32>
    %40 = arith.truncf %39 : vector<4x32xf32> to vector<4x32xbf16>
    %c0_8 = arith.constant 0 : index
    %c0_9 = arith.constant 0 : index
    %41 = vector.load %arg5[%c0_8, %c0_9] : memref<32x32xbf16, #tpu.memory_space<vmem>>, vector<32x32xbf16>
    %cst_10 = arith.constant dense<0.000000e+00> : vector<4x32xf32>
    %42 = tpu.matmul %40, %41, %cst_10 {dimension_numbers = #tpu.dot_dimension_numbers<[1], [0], [0], [1], [0, 0, 1, 1], [], []>} : vector<4x32xbf16>, vector<32x32xbf16>, vector<4x32xf32> -> vector<4x32xf32>
    %43 = vector.shape_cast %42 : vector<4x32xf32> to vector<1x4x32xf32>
    %44 = arith.truncf %43 : vector<1x4x32xf32> to vector<1x4x32xbf16>
    %c0_11 = arith.constant 0 : index
    %c0_12 = arith.constant 0 : index
    %c0_13 = arith.constant 0 : index
    %45 = vector.load %arg6[%c0_11, %c0_12, %c0_13] : memref<1x4x32xbf16, #tpu.memory_space<vmem>>, vector<1x4x32xbf16>
    tpu.vector_store %arg6[%c0_11, %c0_12, %c0_13], %44 {strides = array<i32>} : memref<1x4x32xbf16, #tpu.memory_space<vmem>>, vector<1x4x32xbf16>,
    return
  }
  func.func @transform_0(%arg0: i32) -> (i32, i32, i32) {
    %c0_i32 = arith.constant 0 : i32
    %c0_i32_0 = arith.constant 0 : i32
    %c0_i32_1 = arith.constant 0 : i32
    return %arg0, %c0_i32, %c0_i32_0 : i32, i32, i32
  }
  func.func @transform_1(%arg0: i32) -> (i32, i32) {
    %c0_i32 = arith.constant 0 : i32
    %c0_i32_0 = arith.constant 0 : i32
    %c0_i32_1 = arith.constant 0 : i32
    return %c0_i32, %c0_i32_0 : i32, i32
  }
  func.func @transform_2(%arg0: i32) -> (i32, i32) {
    %c0_i32 = arith.constant 0 : i32
    %c0_i32_0 = arith.constant 0 : i32
    %c0_i32_1 = arith.constant 0 : i32
    return %c0_i32, %c0_i32_0 : i32, i32
  }
  func.func @transform_3(%arg0: i32) -> (i32, i32) {
    %c0_i32 = arith.constant 0 : i32
    %c0_i32_0 = arith.constant 0 : i32
    %c0_i32_1 = arith.constant 0 : i32
    return %c0_i32, %c0_i32_0 : i32, i32
  }
  func.func @transform_4(%arg0: i32) -> (i32, i32) {
    %c0_i32 = arith.constant 0 : i32
    %c0_i32_0 = arith.constant 0 : i32
    %c0_i32_1 = arith.constant 0 : i32
    return %c0_i32, %c0_i32_0 : i32, i32
  }
  func.func @transform_5(%arg0: i32) -> (i32, i32, i32) {
    %c0_i32 = arith.constant 0 : i32
    %c0_i32_0 = arith.constant 0 : i32
    %c0_i32_1 = arith.constant 0 : i32
    return %arg0, %c0_i32, %c0_i32_0 : i32, i32, i32
  }
}

module attributes {stable_mosaic.version = 11 : i64} {
  func.func @_matmul_kernel(%arg0: i32, %arg1: i32, %arg2: i32, %arg3: memref<8x32xbf16, #tpu.memory_space<vmem>>, %arg4: memref<32x64xbf16, #tpu.memory_space<vmem>>, %arg5: memref<1x64xf32, #tpu.memory_space<vmem>>, %arg6: memref<8x64xf32, #tpu.memory_space<vmem>>) attributes {dimension_semantics = [#tpu.dimension_semantics<parallel>, #tpu.dimension_semantics<parallel>, #tpu.dimension_semantics<arbitrary>], iteration_bounds = array<i64: 1, 1, 1>, scalar_prefetch = 0 : i64, scratch_operands = 0 : i64, tpu.core_type = #tpu.core_type<tc>, window_params = [{transform_indices = @transform_0, window_bounds = array<i64: 8, 32>}, {transform_indices = @transform_1, window_bounds = array<i64: 32, 64>}, {transform_indices = @transform_2, window_bounds = array<i64: 1, 64>}, {transform_indices = @transform_3, window_bounds = array<i64: 8, 64>}]} {
    %c0 = arith.constant 0 : index
    %c0_0 = arith.constant 0 : index
    %0 = vector.load %arg3[%c0, %c0_0] : memref<8x32xbf16, #tpu.memory_space<vmem>>, vector<8x32xbf16>
    %c0_1 = arith.constant 0 : index
    %c0_2 = arith.constant 0 : index
    %1 = vector.load %arg4[%c0_1, %c0_2] : memref<32x64xbf16, #tpu.memory_space<vmem>>, vector<32x64xbf16>
    %cst = arith.constant dense<0.000000e+00> : vector<8x64xf32>
    %2 = tpu.matmul %0, %1, %cst {dimension_numbers = #tpu.dot_dimension_numbers<[1], [0], [0], [1], [0, 0, 1, 1], [], []>} : vector<8x32xbf16>, vector<32x64xbf16>, vector<8x64xf32> -> vector<8x64xf32>
    %c0_3 = arith.constant 0 : index
    %c0_4 = arith.constant 0 : index
    %3 = vector.load %arg5[%c0_3, %c0_4] : memref<1x64xf32, #tpu.memory_space<vmem>>, vector<1x64xf32>
    %4 = vector.broadcast %3 : vector<1x64xf32> to vector<8x64xf32>
    %5 = arith.addf %2, %4 : vector<8x64xf32>
    %c0_5 = arith.constant 0 : index
    %c0_6 = arith.constant 0 : index
    %6 = vector.load %arg6[%c0_5, %c0_6] : memref<8x64xf32, #tpu.memory_space<vmem>>, vector<8x64xf32>
    tpu.vector_store %arg6[%c0_5, %c0_6], %5 {strides = array<i32>} : memref<8x64xf32, #tpu.memory_space<vmem>>, vector<8x64xf32>,
    return
  }
  func.func @transform_0(%arg0: i32, %arg1: i32, %arg2: i32) -> (i32, i32) {
    %c0_i32 = arith.constant 0 : i32
    return %arg0, %arg2 : i32, i32
  }
  func.func @transform_1(%arg0: i32, %arg1: i32, %arg2: i32) -> (i32, i32) {
    %c0_i32 = arith.constant 0 : i32
    return %arg2, %arg1 : i32, i32
  }
  func.func @transform_2(%arg0: i32, %arg1: i32, %arg2: i32) -> (i32, i32) {
    %c0_i32 = arith.constant 0 : i32
    %c0_i32_0 = arith.constant 0 : i32
    return %c0_i32, %arg1 : i32, i32
  }
  func.func @transform_3(%arg0: i32, %arg1: i32, %arg2: i32) -> (i32, i32) {
    %c0_i32 = arith.constant 0 : i32
    return %arg0, %arg1 : i32, i32
  }
}

</mosaic_0001>

<llo_original>
// kernel: get_predictions.24
$region0: #{get_predictions.24}
  #allocation0 [shape = 'u32[]', space=smem, size = 0x4, offset = 0x4, fixed_abs, tag = 'smem constant byte address 0x4 - core index']
  #allocation1 [shape = 'u32[144,128]{1,0:T(1,128)}', space=vmem, size = 0x12000, scoped, tag = 'internal scratch']
  %s0 = inlined_call_operand.vmem [shape: f32[34,64], index: 0, kind: input, shape index: {}]
  %s1 = inlined_call_operand.vmem [shape: f32[64,33], index: 1, kind: input, shape index: {}]
  %s2 = inlined_call_operand.vmem [shape: f32[64,33], index: 2, kind: input, shape index: {}]
  %s3 = inlined_call_operand.vmem [shape: f32[33,16], index: 3, kind: input, shape index: {}]
  %s4 = inlined_call_operand.vmem [shape: f32[34,16], index: 4, kind: output, shape index: {}]
  %s5 = sld [smem:[#allocation0]]
  $region26: #{get_predictions.24} parent=0
    _
  %s7 = ssub.s32 1, %s5
  %s8 = scalar_select 0, %s7, %s5
  // Predicated region
  $region2: #{get_predictions.24} parent=0 // pred_check
    _
  $region3: #{get_predictions.24} parent=0 // pred_check_branch
    %10 = sbr.rel (0) target = $region5
  $region4: #{get_predictions.24} parent=0 // pred_region
    _
  $region5: #{get_predictions.24} parent=0 // pred_fallthru
    _
  // Predicated region
  $region6: #{get_predictions.24} parent=0 // pred_check
    _
  $region7: #{get_predictions.24} parent=0 // pred_check_branch
    %12 = sbr.rel (0) target = $region9
  $region8: #{get_predictions.24} parent=0 // pred_region
    _
  $region9: #{get_predictions.24} parent=0 // pred_fallthru
    _
  // Predicated region
  $region10: #{get_predictions.24} parent=0 // pred_check
    _
  $region11: #{get_predictions.24} parent=0 // pred_check_branch
    %14 = sbr.rel (0) target = $region13
  $region12: #{get_predictions.24} parent=0 // pred_region
    _
  $region13: #{get_predictions.24} parent=0 // pred_fallthru
    _
  // Predicated region
  $region14: #{get_predictions.24} parent=0 // pred_check
    _
  $region15: #{get_predictions.24} parent=0 // pred_check_branch
    %16 = sbr.rel (0) target = $region17
  $region16: #{get_predictions.24} parent=0 // pred_region
    _
  $region17: #{get_predictions.24} parent=0 // pred_fallthru
    _
  %v17 = vld [vmem:[%s0] sm:$0xff]
  %v18 = vld [vmem:[%s0 + $0x8] sm:$0xff]
  %v19 = vld [vmem:[%s0 + $0x10] sm:$0xff]
  %v20 = vld [vmem:[%s0 + $0x18] sm:$0xff]
  %v21 = vld [vmem:[%s0 + $0x20] sm:$0x3]
  %v22 = vld [vmem:[%s1] sm:$0xff]
  %v23 = vld [vmem:[%s1 + $0x8] sm:$0xff]
  %v24 = vld [vmem:[%s1 + $0x10] sm:$0xff]
  %v25 = vld [vmem:[%s1 + $0x18] sm:$0xff]
  %v26 = vld [vmem:[%s1 + $0x20] sm:$0xff]
  %v27 = vld [vmem:[%s1 + $0x28] sm:$0xff]
  %v28 = vld [vmem:[%s1 + $0x30] sm:$0xff]
  %v29 = vld [vmem:[%s1 + $0x38] sm:$0xff]
  %vm30 = vcmask 523264
  %v32 = vsel %vm30, %v17, 0
  %v35 = vsel %vm30, %v18, 0
  %v38 = vsel %vm30, %v19, 0
  %v41 = vsel %vm30, %v20, 0
  %v44 = vsel %vm30, %v21, 0
  %46 = vmatprep.subr.mxu0 0.0
  %47 = vmatpush1.msra.mxu0 0.0
  %48 = vmatprep.subr.mxu0 0.0
  %49 = vmatpush1.msra.mxu0 0.0
  %50 = vmatprep.subr.mxu0 0.0
  %51 = vmatpush1.msra.mxu0 0.0
  %52 = vmatprep.subr.mxu0 0.0
  %53 = vmatpush1.msra.mxu0 0.0
  %54 = vmatprep.subr.mxu0 0.0
  %55 = vmatpush1.msra.mxu0 0.0
  %56 = vmatprep.subr.mxu0 0.0
  %57 = vmatpush1.msra.mxu0 0.0
  %58 = vmatprep.subr.mxu0 0.0
  %59 = vmatpush1.msra.mxu0 0.0
  %60 = vmatprep.subr.mxu0 0.0
  %61 = vmatpush1.msra.mxu0 0.0
  %62 = vmatprep.subr.mxu0 0.0
  %63 = vmatpush1.msra.mxu0 %v29
  %64 = vmatprep.subr.mxu0 0.0
  %65 = vmatpush1.msra.mxu0 %v28
  %66 = vmatprep.subr.mxu0 0.0
  %67 = vmatpush1.msra.mxu0 %v27
  %68 = vmatprep.subr.mxu0 0.0
  %69 = vmatpush1.msra.mxu0 %v26
  %70 = vmatprep.subr.mxu0 0.0
  %71 = vmatpush1.msra.mxu0 %v25
  %72 = vmatprep.subr.mxu0 0.0
  %73 = vmatpush1.msra.mxu0 %v24
  %74 = vmatprep.subr.mxu0 0.0
  %75 = vmatpush1.msra.mxu0 %v23
  %76 = vmatprep.subr.mxu0 0.0
  %77 = vmatpush1.msra.mxu0 %v22
  %78 = vmatprep.subr.mxu0 0.0
  %79 = vmatpush2.msra.mxu0 0.0
  %80 = vmatprep.subr.mxu0 0.0
  %81 = vmatpush2.msra.mxu0 0.0
  %82 = vmatprep.subr.mxu0 0.0
  %83 = vmatpush2.msra.mxu0 0.0
  %84 = vmatprep.subr.mxu0 0.0
  %85 = vmatpush2.msra.mxu0 0.0
  %86 = vmatprep.subr.mxu0 0.0
  %87 = vmatpush2.msra.mxu0 0.0
  %88 = vmatprep.subr.mxu0 0.0
  %89 = vmatpush2.msra.mxu0 0.0
  %90 = vmatprep.subr.mxu0 0.0
  %91 = vmatpush2.msra.mxu0 0.0
  %92 = vmatprep.subr.mxu0 0.0
  %93 = vmatpush2.msra.mxu0 0.0
  %94 = vmatprep.subr.mxu0 0.0
  %95 = vmatpush2.msra.mxu0 0.0
  %96 = vmatprep.subr.mxu0 0.0
  %97 = vmatpush2.msra.mxu0 0.0
  %98 = vmatprep.subr.mxu0 0.0
  %99 = vmatpush2.msra.mxu0 0.0
  %100 = vmatprep.subr.mxu0 0.0
  %101 = vmatpush2.msra.mxu0 0.0
  %102 = vmatprep.subr.mxu0 0.0
  %103 = vmatpush2.msra.mxu0 0.0
  %104 = vmatprep.subr.mxu0 0.0
  %105 = vmatpush2.msra.mxu0 0.0
  %106 = vmatprep.subr.mxu0 0.0
  %107 = vmatpush2.msra.mxu0 0.0
  %108 = vmatprep.subr.mxu0 0.0
  %109 = vmatpush2.msra.mxu0 0.0
  %110 = vmatprep.mubr.f32.mxu0 0.0
  %111 = vmatmul.mubr.f32.gmra.mxu0 %v32
  %v112 = vpop.f32.mrf.mxu0
  %v113 = vadd.f32 0.0, %v112
  %v114 = vpop.f32.mrf.mxu0
  %115 = vmatprep.mubr.f32.mxu0 0.0
  %116 = vmatmul.mubr.f32.gmra.mxu0 %v35
  %v117 = vpop.f32.mrf.mxu0
  %v118 = vadd.f32 0.0, %v117
  %v119 = vpop.f32.mrf.mxu0
  %120 = vmatprep.mubr.f32.mxu0 0.0
  %121 = vmatmul.mubr.f32.gmra.mxu0 %v38
  %v122 = vpop.f32.mrf.mxu0
  %v123 = vadd.f32 0.0, %v122
  %v124 = vpop.f32.mrf.mxu0
  %125 = vmatprep.mubr.f32.mxu0 0.0
  %126 = vmatmul.mubr.f32.gmra.mxu0 %v41
  %v127 = vpop.f32.mrf.mxu0
  %v128 = vadd.f32 0.0, %v127
  %v129 = vpop.f32.mrf.mxu0
  %130 = vmatprep.mubr.f32.mxu0 0.0
  %131 = vmatmul.mubr.f32.gmra.mxu0 %v44
  %v132 = vpop.f32.mrf.mxu0
  %v133 = vadd.f32 0.0, %v132
  %v134 = vpop.f32.mrf.mxu0
  %135 = vdwg.mxu0
  %v136 = vld [vmem:[%s2] sm:$0xff]
  %v137 = vld [vmem:[%s2 + $0x8] sm:$0xff]
  %v138 = vld [vmem:[%s2 + $0x10] sm:$0xff]
  %v139 = vld [vmem:[%s2 + $0x18] sm:$0xff]
  %v140 = vld [vmem:[%s2 + $0x20] sm:$0xff]
  %v141 = vld [vmem:[%s2 + $0x28] sm:$0xff]
  %v142 = vld [vmem:[%s2 + $0x30] sm:$0xff]
  %v143 = vld [vmem:[%s2 + $0x38] sm:$0xff]
  %144 = vmatprep.subr.mxu0 0.0
  %145 = vmatpush1.msra.mxu0 0.0
  %146 = vmatprep.subr.mxu0 0.0
  %147 = vmatpush1.msra.mxu0 0.0
  %148 = vmatprep.subr.mxu0 0.0
  %149 = vmatpush1.msra.mxu0 0.0
  %150 = vmatprep.subr.mxu0 0.0
  %151 = vmatpush1.msra.mxu0 0.0
  %152 = vmatprep.subr.mxu0 0.0
  %153 = vmatpush1.msra.mxu0 0.0
  %154 = vmatprep.subr.mxu0 0.0
  %155 = vmatpush1.msra.mxu0 0.0
  %156 = vmatprep.subr.mxu0 0.0
  %157 = vmatpush1.msra.mxu0 0.0
  %158 = vmatprep.subr.mxu0 0.0
  %159 = vmatpush1.msra.mxu0 0.0
  %160 = vmatprep.subr.mxu0 0.0
  %161 = vmatpush1.msra.mxu0 %v143
  %162 = vmatprep.subr.mxu0 0.0
  %163 = vmatpush1.msra.mxu0 %v142
  %164 = vmatprep.subr.mxu0 0.0
  %165 = vmatpush1.msra.mxu0 %v141
  %166 = vmatprep.subr.mxu0 0.0
  %167 = vmatpush1.msra.mxu0 %v140
  %168 = vmatprep.subr.mxu0 0.0
  %169 = vmatpush1.msra.mxu0 %v139
  %170 = vmatprep.subr.mxu0 0.0
  %171 = vmatpush1.msra.mxu0 %v138
  %172 = vmatprep.subr.mxu0 0.0
  %173 = vmatpush1.msra.mxu0 %v137
  %174 = vmatprep.subr.mxu0 0.0
  %175 = vmatpush1.msra.mxu0 %v136
  %176 = vmatprep.subr.mxu0 0.0
  %177 = vmatpush2.msra.mxu0 0.0
  %178 = vmatprep.subr.mxu0 0.0
  %179 = vmatpush2.msra.mxu0 0.0
  %180 = vmatprep.subr.mxu0 0.0
  %181 = vmatpush2.msra.mxu0 0.0
  %182 = vmatprep.subr.mxu0 0.0
  %183 = vmatpush2.msra.mxu0 0.0
  %184 = vmatprep.subr.mxu0 0.0
  %185 = vmatpush2.msra.mxu0 0.0
  %186 = vmatprep.subr.mxu0 0.0
  %187 = vmatpush2.msra.mxu0 0.0
  %188 = vmatprep.subr.mxu0 0.0
  %189 = vmatpush2.msra.mxu0 0.0
  %190 = vmatprep.subr.mxu0 0.0
  %191 = vmatpush2.msra.mxu0 0.0
  %192 = vmatprep.subr.mxu0 0.0
  %193 = vmatpush2.msra.mxu0 0.0
  %194 = vmatprep.subr.mxu0 0.0
  %195 = vmatpush2.msra.mxu0 0.0
  %196 = vmatprep.subr.mxu0 0.0
  %197 = vmatpush2.msra.mxu0 0.0
  %198 = vmatprep.subr.mxu0 0.0
  %199 = vmatpush2.msra.mxu0 0.0
  %200 = vmatprep.subr.mxu0 0.0
  %201 = vmatpush2.msra.mxu0 0.0
  %202 = vmatprep.subr.mxu0 0.0
  %203 = vmatpush2.msra.mxu0 0.0
  %204 = vmatprep.subr.mxu0 0.0
  %205 = vmatpush2.msra.mxu0 0.0
  %206 = vmatprep.subr.mxu0 0.0
  %207 = vmatpush2.msra.mxu0 0.0
  %208 = vmatprep.mubr.f32.mxu0 0.0
  %209 = vmatmul.mubr.f32.gmra.mxu0 %v32
  %v210 = vpop.f32.mrf.mxu0
  %v211 = vadd.f32 0.0, %v210
  %v212 = vpop.f32.mrf.mxu0
  %213 = vmatprep.mubr.f32.mxu0 0.0
  %214 = vmatmul.mubr.f32.gmra.mxu0 %v35
  %v215 = vpop.f32.mrf.mxu0
  %v216 = vadd.f32 0.0, %v215
  %v217 = vpop.f32.mrf.mxu0
  %218 = vmatprep.mubr.f32.mxu0 0.0
  %219 = vmatmul.mubr.f32.gmra.mxu0 %v38
  %v220 = vpop.f32.mrf.mxu0
  %v221 = vadd.f32 0.0, %v220
  %v222 = vpop.f32.mrf.mxu0
  %223 = vmatprep.mubr.f32.mxu0 0.0
  %224 = vmatmul.mubr.f32.gmra.mxu0 %v41
  %v225 = vpop.f32.mrf.mxu0
  %v226 = vadd.f32 0.0, %v225
  %v227 = vpop.f32.mrf.mxu0
  %228 = vmatprep.mubr.f32.mxu0 0.0
  %229 = vmatmul.mubr.f32.gmra.mxu0 %v44
  %v230 = vpop.f32.mrf.mxu0
  %v231 = vadd.f32 0.0, %v230
  %v232 = vpop.f32.mrf.mxu0
  %233 = vdwg.mxu0
  %v234 = vmul.f32 %v113, %v113
  %v235 = vmul.f32 %v118, %v118
  %v236 = vmul.f32 %v123, %v123
  %v237 = vmul.f32 %v128, %v128
  %v238 = vmul.f32 %v133, %v133
  %v239 = vmul.f32 %v211, %v211
  %v240 = vmul.f32 %v216, %v216
  %v241 = vmul.f32 %v221, %v221
  %v242 = vmul.f32 %v226, %v226
  %v243 = vmul.f32 %v231, %v231
  %v244 = vadd.f32 %v234, %v239
  %v245 = vadd.f32 %v235, %v240
  %v246 = vadd.f32 %v236, %v241
  %v247 = vadd.f32 %v237, %v242
  %v248 = vadd.f32 %v238, %v243
  %v249 = vld [vmem:[%s3] sm:$0xff]
  %v250 = vld [vmem:[%s3 + $0x8] sm:$0xff]
  %v251 = vld [vmem:[%s3 + $0x10] sm:$0xff]
  %v252 = vld [vmem:[%s3 + $0x18] sm:$0xff]
  %v253 = vld [vmem:[%s3 + $0x20] sm:$0x1]
  %vm254 = vcmask 269312
  %v256 = vsel %vm254, %v244, 0
  %v259 = vsel %vm254, %v245, 0
  %v262 = vsel %vm254, %v246, 0
  %v265 = vsel %vm254, %v247, 0
  %v268 = vsel %vm254, %v248, 0
  %vm270 = vcmask 1040384
  %v272 = vsel %vm270, %v253, 0
  %274 = vmatprep.subr.mxu0 0.0
  %275 = vmatpush1.msra.mxu0 0.0
  %276 = vmatprep.subr.mxu0 0.0
  %277 = vmatpush1.msra.mxu0 0.0
  %278 = vmatprep.subr.mxu0 0.0
  %279 = vmatpush1.msra.mxu0 0.0
  %280 = vmatprep.subr.mxu0 0.0
  %281 = vmatpush1.msra.mxu0 0.0
  %282 = vmatprep.subr.mxu0 0.0
  %283 = vmatpush1.msra.mxu0 0.0
  %284 = vmatprep.subr.mxu0 0.0
  %285 = vmatpush1.msra.mxu0 0.0
  %286 = vmatprep.subr.mxu0 0.0
  %287 = vmatpush1.msra.mxu0 0.0
  %288 = vmatprep.subr.mxu0 0.0
  %289 = vmatpush1.msra.mxu0 0.0
  %290 = vmatprep.subr.mxu0 0.0
  %291 = vmatpush1.msra.mxu0 0.0
  %292 = vmatprep.subr.mxu0 0.0
  %293 = vmatpush1.msra.mxu0 0.0
  %294 = vmatprep.subr.mxu0 0.0
  %295 = vmatpush1.msra.mxu0 0.0
  %296 = vmatprep.subr.mxu0 0.0
  %297 = vmatpush1.msra.mxu0 %v272
  %298 = vmatprep.subr.mxu0 0.0
  %299 = vmatpush1.msra.mxu0 %v252
  %300 = vmatprep.subr.mxu0 0.0
  %301 = vmatpush1.msra.mxu0 %v251
  %302 = vmatprep.subr.mxu0 0.0
  %303 = vmatpush1.msra.mxu0 %v250
  %304 = vmatprep.subr.mxu0 0.0
  %305 = vmatpush1.msra.mxu0 %v249
  %306 = vmatprep.subr.mxu0 0.0
  %307 = vmatpush2.msra.mxu0 0.0
  %308 = vmatprep.subr.mxu0 0.0
  %309 = vmatpush2.msra.mxu0 0.0
  %310 = vmatprep.subr.mxu0 0.0
  %311 = vmatpush2.msra.mxu0 0.0
  %312 = vmatprep.subr.mxu0 0.0
  %313 = vmatpush2.msra.mxu0 0.0
  %314 = vmatprep.subr.mxu0 0.0
  %315 = vmatpush2.msra.mxu0 0.0
  %316 = vmatprep.subr.mxu0 0.0
  %317 = vmatpush2.msra.mxu0 0.0
  %318 = vmatprep.subr.mxu0 0.0
  %319 = vmatpush2.msra.mxu0 0.0
  %320 = vmatprep.subr.mxu0 0.0
  %321 = vmatpush2.msra.mxu0 0.0
  %322 = vmatprep.subr.mxu0 0.0
  %323 = vmatpush2.msra.mxu0 0.0
  %324 = vmatprep.subr.mxu0 0.0
  %325 = vmatpush2.msra.mxu0 0.0
  %326 = vmatprep.subr.mxu0 0.0
  %327 = vmatpush2.msra.mxu0 0.0
  %328 = vmatprep.subr.mxu0 0.0
  %329 = vmatpush2.msra.mxu0 0.0
  %330 = vmatprep.subr.mxu0 0.0
  %331 = vmatpush2.msra.mxu0 0.0
  %332 = vmatprep.subr.mxu0 0.0
  %333 = vmatpush2.msra.mxu0 0.0
  %334 = vmatprep.subr.mxu0 0.0
  %335 = vmatpush2.msra.mxu0 0.0
  %336 = vmatprep.subr.mxu0 0.0
  %337 = vmatpush2.msra.mxu0 0.0
  %338 = vmatprep.mubr.f32.mxu0 0.0
  %339 = vmatmul.mubr.f32.gmra.mxu0 %v256
  %v340 = vpop.f32.mrf.mxu0
  %v341 = vadd.f32 0.0, %v340
  %v342 = vpop.f32.mrf.mxu0
  %343 = vmatprep.mubr.f32.mxu0 0.0
  %344 = vmatmul.mubr.f32.gmra.mxu0 %v259
  %v345 = vpop.f32.mrf.mxu0
  %v346 = vadd.f32 0.0, %v345
  %v347 = vpop.f32.mrf.mxu0
  %348 = vmatprep.mubr.f32.mxu0 0.0
  %349 = vmatmul.mubr.f32.gmra.mxu0 %v262
  %v350 = vpop.f32.mrf.mxu0
  %v351 = vadd.f32 0.0, %v350
  %v352 = vpop.f32.mrf.mxu0
  %353 = vmatprep.mubr.f32.mxu0 0.0
  %354 = vmatmul.mubr.f32.gmra.mxu0 %v265
  %v355 = vpop.f32.mrf.mxu0
  %v356 = vadd.f32 0.0, %v355
  %v357 = vpop.f32.mrf.mxu0
  %358 = vmatprep.mubr.f32.mxu0 0.0
  %359 = vmatmul.mubr.f32.gmra.mxu0 %v268
  %v360 = vpop.f32.mrf.mxu0
  %v361 = vadd.f32 0.0, %v360
  %v362 = vpop.f32.mrf.mxu0
  %363 = vdwg.mxu0
  %v364 = vmax.f32 %v341, 1e-10
  %v365 = vmax.f32 %v346, 1e-10
  %v366 = vmax.f32 %v351, 1e-10
  %v367 = vmax.f32 %v356, 1e-10
  %v368 = vmax.f32 %v361, 1e-10
  %v369 = vlog2.pop %v364
  %v370 = vmul.f32 %v369, 0.6931472
  %v371 = vlog2.pop %v365
  %v372 = vmul.f32 %v371, 0.6931472
  %v373 = vlog2.pop %v366
  %v374 = vmul.f32 %v373, 0.6931472
  %v375 = vlog2.pop %v367
  %v376 = vmul.f32 %v375, 0.6931472
  %v377 = vlog2.pop %v368
  %v378 = vmul.f32 %v377, 0.6931472
  %v379 = vmul.f32 %v370, 0.4342945
  %v380 = vmul.f32 %v372, 0.4342945
  %v381 = vmul.f32 %v374, 0.4342945
  %v382 = vmul.f32 %v376, 0.4342945
  %v383 = vmul.f32 %v378, 0.4342945
  %v384 = vmul.f32 %v379, 10.0
  %v385 = vmul.f32 %v380, 10.0
  %v386 = vmul.f32 %v381, 10.0
  %v387 = vmul.f32 %v382, 10.0
  %v388 = vmul.f32 %v383, 10.0
  %v389 = vsub.f32 %v384, 6.768445
  %v390 = vsub.f32 %v385, 6.768445
  %v391 = vsub.f32 %v386, 6.768445
  %v392 = vsub.f32 %v387, 6.768445
  %v393 = vsub.f32 %v388, 6.768445
  %v394 = vrcp.pop 18.417923
  %v395 = vmul.f32 %v389, %v394
  %v396 = vmul.f32 %v390, %v394
  %v397 = vmul.f32 %v391, %v394
  %v398 = vmul.f32 %v392, %v394
  %v399 = vmul.f32 %v393, %v394
  %vm400 = vcmask 130048
  %401 = vst.msk [vmem:[%s4] sm:$0xff] %vm400, %v395
  %402 = vst.msk [vmem:[%s4 + $0x8] sm:$0xff] %vm400, %v396
  %403 = vst.msk [vmem:[%s4 + $0x10] sm:$0xff] %vm400, %v397
  %404 = vst.msk [vmem:[%s4 + $0x18] sm:$0xff] %vm400, %v398
  %vm405 = vcmask 123904
  %406 = vst.msk [vmem:[%s4 + $0x20] sm:$0x3] %vm405, %v399
  // Predicated region
  $region18: #{get_predictions.24} parent=0 // pred_check
    _
  $region19: #{get_predictions.24} parent=0 // pred_check_branch
    %408 = sbr.rel (0) target = $region21
  $region20: #{get_predictions.24} parent=0 // pred_region
    _
  $region21: #{get_predictions.24} parent=0 // pred_fallthru
    _
  // Predicated region
  $region22: #{get_predictions.24} parent=0 // pred_check
    _
  $region23: #{get_predictions.24} parent=0 // pred_check_branch
    %410 = sbr.rel (0) target = $region25
  $region24: #{get_predictions.24} parent=0 // pred_region
    _
  $region25: #{get_predictions.24} parent=0 // pred_fallthru
    _

// kernel: get_predictions.25
$region0: #{get_predictions.25}
  #allocation0 [shape = 'u32[]', space=smem, size = 0x4, offset = 0x4, fixed_abs, tag = 'smem constant byte address 0x4 - core index']
  #allocation1 [shape = 'u32[144,128]{1,0:T(1,128)}', space=vmem, size = 0x12000, scoped, tag = 'internal scratch']
  %s0 = inlined_call_operand.vmem [shape: f32[8,32], index: 0, kind: input, shape index: {}]
  %s1 = inlined_call_operand.vmem [shape: f32[32,32], index: 1, kind: input, shape index: {}]
  %s2 = inlined_call_operand.vmem [shape: f32[1,32], index: 2, kind: input, shape index: {}]
  %s3 = inlined_call_operand.vmem [shape: bf16[8,32], index: 3, kind: output, shape index: {}]
  %s4 = sld [smem:[#allocation0]]
  $region22: #{get_predictions.25} parent=0
    _
  %s6 = ssub.s32 1, %s4
  %s7 = scalar_select 0, %s6, %s4
  // Predicated region
  $region2: #{get_predictions.25} parent=0 // pred_check
    _
  $region3: #{get_predictions.25} parent=0 // pred_check_branch
    %9 = sbr.rel (0) target = $region5
  $region4: #{get_predictions.25} parent=0 // pred_region
    _
  $region5: #{get_predictions.25} parent=0 // pred_fallthru
    _
  // Predicated region
  $region6: #{get_predictions.25} parent=0 // pred_check
    _
  $region7: #{get_predictions.25} parent=0 // pred_check_branch
    %11 = sbr.rel (0) target = $region9
  $region8: #{get_predictions.25} parent=0 // pred_region
    _
  $region9: #{get_predictions.25} parent=0 // pred_fallthru
    _
  // Predicated region
  $region10: #{get_predictions.25} parent=0 // pred_check
    _
  $region11: #{get_predictions.25} parent=0 // pred_check_branch
    %13 = sbr.rel (0) target = $region13
  $region12: #{get_predictions.25} parent=0 // pred_region
    _
  $region13: #{get_predictions.25} parent=0 // pred_fallthru
    _
  %v14 = vld [vmem:[%s0] sm:$0xff]
  %v15 = vld [vmem:[%s1] sm:$0xff]
  %v16 = vld [vmem:[%s1 + $0x8] sm:$0xff]
  %v17 = vld [vmem:[%s1 + $0x10] sm:$0xff]
  %v18 = vld [vmem:[%s1 + $0x18] sm:$0xff]
  %v19 = vld [vmem:[%s2] sm:$0x1]
  %v21 = vlaneseq
  %v22 = vshrl.u32 %v21, 7
  %v23 = vsub.s32 0, %v22
  %v24 = vrot.slane %v19, %v23
  %vm26 = vcmask 261120
  %v28 = vsel %vm26, %v14, 0
  %30 = vmatprep.subr.mxu0 0.0
  %31 = vmatpush1.msra.mxu0 0.0
  %32 = vmatprep.subr.mxu0 0.0
  %33 = vmatpush1.msra.mxu0 0.0
  %34 = vmatprep.subr.mxu0 0.0
  %35 = vmatpush1.msra.mxu0 0.0
  %36 = vmatprep.subr.mxu0 0.0
  %37 = vmatpush1.msra.mxu0 0.0
  %38 = vmatprep.subr.mxu0 0.0
  %39 = vmatpush1.msra.mxu0 0.0
  %40 = vmatprep.subr.mxu0 0.0
  %41 = vmatpush1.msra.mxu0 0.0
  %42 = vmatprep.subr.mxu0 0.0
  %43 = vmatpush1.msra.mxu0 0.0
  %44 = vmatprep.subr.mxu0 0.0
  %45 = vmatpush1.msra.mxu0 0.0
  %46 = vmatprep.subr.mxu0 0.0
  %47 = vmatpush1.msra.mxu0 0.0
  %48 = vmatprep.subr.mxu0 0.0
  %49 = vmatpush1.msra.mxu0 0.0
  %50 = vmatprep.subr.mxu0 0.0
  %51 = vmatpush1.msra.mxu0 0.0
  %52 = vmatprep.subr.mxu0 0.0
  %53 = vmatpush1.msra.mxu0 0.0
  %54 = vmatprep.subr.mxu0 0.0
  %55 = vmatpush1.msra.mxu0 %v18
  %56 = vmatprep.subr.mxu0 0.0
  %57 = vmatpush1.msra.mxu0 %v17
  %58 = vmatprep.subr.mxu0 0.0
  %59 = vmatpush1.msra.mxu0 %v16
  %60 = vmatprep.subr.mxu0 0.0
  %61 = vmatpush1.msra.mxu0 %v15
  %62 = vmatprep.subr.mxu0 0.0
  %63 = vmatpush2.msra.mxu0 0.0
  %64 = vmatprep.subr.mxu0 0.0
  %65 = vmatpush2.msra.mxu0 0.0
  %66 = vmatprep.subr.mxu0 0.0
  %67 = vmatpush2.msra.mxu0 0.0
  %68 = vmatprep.subr.mxu0 0.0
  %69 = vmatpush2.msra.mxu0 0.0
  %70 = vmatprep.subr.mxu0 0.0
  %71 = vmatpush2.msra.mxu0 0.0
  %72 = vmatprep.subr.mxu0 0.0
  %73 = vmatpush2.msra.mxu0 0.0
  %74 = vmatprep.subr.mxu0 0.0
  %75 = vmatpush2.msra.mxu0 0.0
  %76 = vmatprep.subr.mxu0 0.0
  %77 = vmatpush2.msra.mxu0 0.0
  %78 = vmatprep.subr.mxu0 0.0
  %79 = vmatpush2.msra.mxu0 0.0
  %80 = vmatprep.subr.mxu0 0.0
  %81 = vmatpush2.msra.mxu0 0.0
  %82 = vmatprep.subr.mxu0 0.0
  %83 = vmatpush2.msra.mxu0 0.0
  %84 = vmatprep.subr.mxu0 0.0
  %85 = vmatpush2.msra.mxu0 0.0
  %86 = vmatprep.subr.mxu0 0.0
  %87 = vmatpush2.msra.mxu0 0.0
  %88 = vmatprep.subr.mxu0 0.0
  %89 = vmatpush2.msra.mxu0 0.0
  %90 = vmatprep.subr.mxu0 0.0
  %91 = vmatpush2.msra.mxu0 0.0
  %92 = vmatprep.subr.mxu0 0.0
  %93 = vmatpush2.msra.mxu0 0.0
  %94 = vmatprep.mubr.f32.mxu0 0.0
  %95 = vmatmul.mubr.f32.gmra.mxu0 %v28
  %v96 = vpop.f32.mrf.mxu0
  %v97 = vadd.f32 %v24, %v96
  %v98 = vpop.f32.mrf.mxu0
  %99 = vdwg.mxu0
  %v100 = vpack.c.bf16 %v97, %v97
  %vm101 = vcmask 257024
  %102 = vst.msk [vmem:[%s3] sm:$0xf] %vm101, %v100
  // Predicated region
  $region14: #{get_predictions.25} parent=0 // pred_check
    _
  $region15: #{get_predictions.25} parent=0 // pred_check_branch
    %104 = sbr.rel (0) target = $region17
  $region16: #{get_predictions.25} parent=0 // pred_region
    _
  $region17: #{get_predictions.25} parent=0 // pred_fallthru
    _
  // Predicated region
  $region18: #{get_predictions.25} parent=0 // pred_check
    _
  $region19: #{get_predictions.25} parent=0 // pred_check_branch
    %106 = sbr.rel (0) target = $region21
  $region20: #{get_predictions.25} parent=0 // pred_region
    _
  $region21: #{get_predictions.25} parent=0 // pred_fallthru
    _

// kernel: get_predictions.27
$region0: #{get_predictions.27}
  #allocation0 [shape = 'u32[]', space=smem, size = 0x4, offset = 0x4, fixed_abs, tag = 'smem constant byte address 0x4 - core index']
  #allocation1 [shape = 'u32[144,128]{1,0:T(1,128)}', space=vmem, size = 0x12000, scoped, tag = 'internal scratch']
  %s0 = inlined_call_operand.vmem [shape: bf16[8,32], index: 0, kind: input, shape index: {}]
  %s1 = inlined_call_operand.vmem [shape: f32[1,32], index: 1, kind: input, shape index: {}]
  %s2 = inlined_call_operand.vmem [shape: f32[1,32], index: 2, kind: input, shape index: {}]
  %s3 = inlined_call_operand.vmem [shape: bf16[8,32], index: 3, kind: output, shape index: {}]
  %s4 = sld [smem:[#allocation0]]
  $region22: #{get_predictions.27} parent=0
    _
  %s6 = ssub.s32 1, %s4
  %s7 = scalar_select 0, %s6, %s4
  // Predicated region
  $region2: #{get_predictions.27} parent=0 // pred_check
    _
  $region3: #{get_predictions.27} parent=0 // pred_check_branch
    %9 = sbr.rel (0) target = $region5
  $region4: #{get_predictions.27} parent=0 // pred_region
    _
  $region5: #{get_predictions.27} parent=0 // pred_fallthru
    _
  // Predicated region
  $region6: #{get_predictions.27} parent=0 // pred_check
    _
  $region7: #{get_predictions.27} parent=0 // pred_check_branch
    %11 = sbr.rel (0) target = $region9
  $region8: #{get_predictions.27} parent=0 // pred_region
    _
  $region9: #{get_predictions.27} parent=0 // pred_fallthru
    _
  // Predicated region
  $region10: #{get_predictions.27} parent=0 // pred_check
    _
  $region11: #{get_predictions.27} parent=0 // pred_check_branch
    %13 = sbr.rel (0) target = $region13
  $region12: #{get_predictions.27} parent=0 // pred_region
    _
  $region13: #{get_predictions.27} parent=0 // pred_fallthru
    _
  %v14 = vld [vmem:[%s0] sm:$0xf]
  %v15 = vunpack.c.l.bf16 %v14
  %vm16 = vcmask 261120
  %v17 = vsel %vm16, %v15, 0.0
  %18 = vadd.xlane.f32.xlu0 %v17
  %v19 = vpop.xlane.xlu0 %18
  %v20 = vrcp.pop 32.0
  %v21 = vmul.f32 %v19, %v20
  %v22 = vsub.f32 %v15, %v21
  %v23 = vmul.f32 %v22, %v22
  %v24 = vsel %vm16, %v23, 0.0
  %25 = vadd.xlane.f32.xlu0 %v24
  %v26 = vpop.xlane.xlu0 %25
  %v27 = vmul.f32 %v26, %v20
  %v28 = vadd.f32 %v27, 1e-05
  %v29 = vrsqrt.pop %v28
  %v30 = vmul.f32 %v22, %v29
  %v31 = vld [vmem:[%s1] sm:$0x1]
  %v33 = vlaneseq
  %v34 = vshrl.u32 %v33, 7
  %v35 = vsub.s32 0, %v34
  %v36 = vrot.slane %v31, %v35
  %v38 = vmul.f32 %v30, %v36
  %v39 = vld [vmem:[%s2] sm:$0x1]
  %v41 = vlaneseq
  %v42 = vshrl.u32 %v41, 7
  %v43 = vsub.s32 0, %v42
  %v44 = vrot.slane %v39, %v43
  %v46 = vadd.f32 %v38, %v44
  %v47 = vpack.c.bf16 %v46, %v46
  %vm48 = vcmask 257024
  %49 = vst.msk [vmem:[%s3] sm:$0xf] %vm48, %v47
  // Predicated region
  $region14: #{get_predictions.27} parent=0 // pred_check
    _
  $region15: #{get_predictions.27} parent=0 // pred_check_branch
    %51 = sbr.rel (0) target = $region17
  $region16: #{get_predictions.27} parent=0 // pred_region
    _
  $region17: #{get_predictions.27} parent=0 // pred_fallthru
    _
  // Predicated region
  $region18: #{get_predictions.27} parent=0 // pred_check
    _
  $region19: #{get_predictions.27} parent=0 // pred_check_branch
    %53 = sbr.rel (0) target = $region21
  $region20: #{get_predictions.27} parent=0 // pred_region
    _
  $region21: #{get_predictions.27} parent=0 // pred_fallthru
    _

// kernel: get_predictions.26
$region0: #{get_predictions.26}
  #allocation0 [shape = 'u32[]', space=smem, size = 0x4, offset = 0x4, fixed_abs, tag = 'smem constant byte address 0x4 - core index']
  #allocation1 [shape = 'u32[144,128]{1,0:T(1,128)}', space=vmem, size = 0x12000, scoped, tag = 'internal scratch']
  #allocation2 [shape = 'f32[8,32]{1,0:T(8,128)}', space=vmem, size = 0x1000, scoped, tag = 'scratch operand']
  %s0 = inlined_call_operand.vmem [shape: bf16[8,32], index: 0, kind: input, shape index: {}]
  %s1 = inlined_call_operand.vmem [shape: f32[1,32], index: 1, kind: input, shape index: {}]
  %s2 = inlined_call_operand.vmem [shape: f32[1,32], index: 2, kind: input, shape index: {}]
  %s3 = inlined_call_operand.vmem [shape: bf16[32,128], index: 3, kind: input, shape index: {}]
  %s4 = inlined_call_operand.vmem [shape: f32[1,128], index: 4, kind: input, shape index: {}]
  %s5 = inlined_call_operand.vmem [shape: bf16[128,32], index: 5, kind: input, shape index: {}]
  %s6 = inlined_call_operand.vmem [shape: f32[1,32], index: 6, kind: input, shape index: {}]
  %s7 = inlined_call_operand.vmem [shape: bf16[8,32], index: 7, kind: output, shape index: {}]
  %s8 = sld [smem:[#allocation0]]
  $region46: #{get_predictions.26} parent=0
    _
  %s10 = ssub.s32 1, %s8
  %s11 = scalar_select 0, %s10, %s8
  // Predicated region
  $region2: #{get_predictions.26} parent=0 // pred_check
    _
  $region3: #{get_predictions.26} parent=0 // pred_check_branch
    %13 = sbr.rel (0) target = $region5
  $region4: #{get_predictions.26} parent=0 // pred_region
    _
  $region5: #{get_predictions.26} parent=0 // pred_fallthru
    _
  // Predicated region
  $region6: #{get_predictions.26} parent=0 // pred_check
    _
  $region7: #{get_predictions.26} parent=0 // pred_check_branch
    %15 = sbr.rel (0) target = $region9
  $region8: #{get_predictions.26} parent=0 // pred_region
    _
  $region9: #{get_predictions.26} parent=0 // pred_fallthru
    _
  // Predicated region
  $region10: #{get_predictions.26} parent=0 // pred_check
    _
  $region11: #{get_predictions.26} parent=0 // pred_check_branch
    %17 = sbr.rel (0) target = $region13
  $region12: #{get_predictions.26} parent=0 // pred_region
    _
  $region13: #{get_predictions.26} parent=0 // pred_fallthru
    _
  // Predicated region
  $region14: #{get_predictions.26} parent=0 // pred_check
    _
  $region15: #{get_predictions.26} parent=0 // pred_check_branch
    %19 = sbr.rel (0) target = $region17
  $region16: #{get_predictions.26} parent=0 // pred_region
    _
  $region17: #{get_predictions.26} parent=0 // pred_fallthru
    _
  // Predicated region
  $region18: #{get_predictions.26} parent=0 // pred_check
    _
  $region19: #{get_predictions.26} parent=0 // pred_check_branch
    %21 = sbr.rel (0) target = $region21
  $region20: #{get_predictions.26} parent=0 // pred_region
    _
  $region21: #{get_predictions.26} parent=0 // pred_fallthru
    _
  // Predicated region
  $region22: #{get_predictions.26} parent=0 // pred_check
    _
  $region23: #{get_predictions.26} parent=0 // pred_check_branch
    %23 = sbr.rel (0) target = $region25
  $region24: #{get_predictions.26} parent=0 // pred_region
    _
  $region25: #{get_predictions.26} parent=0 // pred_fallthru
    _
  // Predicated region
  $region26: #{get_predictions.26} parent=0 // pred_check
    _
  $region27: #{get_predictions.26} parent=0 // pred_check_branch
    %25 = sbr.rel (0) target = $region29
  $region28: #{get_predictions.26} parent=0 // pred_region
    _
  $region29: #{get_predictions.26} parent=0 // pred_fallthru
    _
  %p27 = scmp.eq.s32.totalorder 0, 0
  // Predicated region
  $region30: #{get_predictions.26} parent=0 // pred_check
    %p28 = pneg %p27
  $region31: #{get_predictions.26} parent=0 // pred_check_branch
    %30 = sbr.rel (%p28) target = $region33
  $region32: #{get_predictions.26} parent=0 // pred_region
    %vm31 = vcmask 261120
    %32 = vst.msk [vmem:[#allocation2] sm:$0xff] %vm31, 0.0
  $region33: #{get_predictions.26} parent=0 // pred_fallthru
    _
  %v33 = vld [vmem:[%s0] sm:$0xf]
  %v34 = vunpack.c.l.bf16 %v33
  %vm35 = vcmask 261120
  %v36 = vsel %vm35, %v34, 0.0
  %37 = vadd.xlane.f32.xlu0 %v36
  %v38 = vpop.xlane.xlu0 %37
  %v39 = vrcp.pop 32.0
  %v40 = vmul.f32 %v38, %v39
  %v41 = vsub.f32 %v34, %v40
  %v42 = vmul.f32 %v41, %v41
  %v43 = vsel %vm35, %v42, 0.0
  %44 = vadd.xlane.f32.xlu0 %v43
  %v45 = vpop.xlane.xlu0 %44
  %v46 = vmul.f32 %v45, %v39
  %v47 = vadd.f32 %v46, 1e-05
  %v48 = vrsqrt.pop %v47
  %v49 = vmul.f32 %v41, %v48
  %v50 = vld [vmem:[%s1] sm:$0x1]
  %v52 = vlaneseq
  %v53 = vshrl.u32 %v52, 7
  %v54 = vsub.s32 0, %v53
  %v55 = vrot.slane %v50, %v54
  %v57 = vmul.f32 %v49, %v55
  %v58 = vld [vmem:[%s2] sm:$0x1]
  %v60 = vlaneseq
  %v61 = vshrl.u32 %v60, 7
  %v62 = vsub.s32 0, %v61
  %v63 = vrot.slane %v58, %v62
  %v65 = vadd.f32 %v57, %v63
  %v66 = vpack.c.bf16 %v65, %v65
  %v67 = vld [vmem:[%s3] sm:$0xf]
  %v68 = vld [vmem:[%s3 + $0x4] sm:$0xf]
  %v69 = vld [vmem:[%s3 + $0x8] sm:$0xf]
  %v70 = vld [vmem:[%s3 + $0xc] sm:$0xf]
  %v71 = vld [vmem:[%s4] sm:$0x1]
  %v73 = vlaneseq
  %v74 = vshrl.u32 %v73, 7
  %v75 = vsub.s32 0, %v74
  %v76 = vrot.slane %v71, %v75
  %v82 = vunpack.c.l.b16 %v67
  %v83 = vunpack.c.l.b16 %v68
  %v84 = vunpack.c.l.b16 %v69
  %v85 = vunpack.c.l.b16 %v70
  %v86 = vpack.c.b16 %v83, %v82
  %v87 = vpack.c.b16 %v85, %v84
  %v91 = vsel %vm35, %v66, 0
  %93 = vmatprep.subr.bf16.mxu0 0
  %94 = vmatpush1.bf16.msra.mxu0 0
  %95 = vmatprep.subr.bf16.mxu0 0
  %96 = vmatpush1.bf16.msra.mxu0 0
  %97 = vmatprep.subr.bf16.mxu0 0
  %98 = vmatpush1.bf16.msra.mxu0 0
  %99 = vmatprep.subr.bf16.mxu0 0
  %100 = vmatpush1.bf16.msra.mxu0 0
  %101 = vmatprep.subr.bf16.mxu0 0
  %102 = vmatpush1.bf16.msra.mxu0 0
  %103 = vmatprep.subr.bf16.mxu0 0
  %104 = vmatpush1.bf16.msra.mxu0 0
  %105 = vmatprep.subr.bf16.mxu0 0
  %106 = vmatpush1.bf16.msra.mxu0 %v87
  %107 = vmatprep.subr.bf16.mxu0 0
  %108 = vmatpush1.bf16.msra.mxu0 %v86
  %109 = vmatprep.subr.bf16.mxu0 0
  %110 = vmatpush2.bf16.msra.mxu0 0
  %111 = vmatprep.subr.bf16.mxu0 0
  %112 = vmatpush2.bf16.msra.mxu0 0
  %113 = vmatprep.subr.bf16.mxu0 0
  %114 = vmatpush2.bf16.msra.mxu0 0
  %115 = vmatprep.subr.bf16.mxu0 0
  %116 = vmatpush2.bf16.msra.mxu0 0
  %117 = vmatprep.subr.bf16.mxu0 0
  %118 = vmatpush2.bf16.msra.mxu0 0
  %119 = vmatprep.subr.bf16.mxu0 0
  %120 = vmatpush2.bf16.msra.mxu0 0
  %121 = vmatprep.subr.bf16.mxu0 0
  %122 = vmatpush2.bf16.msra.mxu0 0
  %123 = vmatprep.subr.bf16.mxu0 0
  %124 = vmatpush2.bf16.msra.mxu0 0
  %125 = vmatprep.mubr.bf16.mxu0 0
  %126 = vmatmul.mubr.bf16.gmra.mxu0 %v91
  %v127 = vpop.f32.mrf.mxu0
  %v128 = vadd.f32 %v76, %v127
  %v129 = vpop.f32.mrf.mxu0
  %v130 = vpop.f32.mrf.mxu0
  %v131 = vpop.f32.mrf.mxu0
  %132 = vdwg.mxu0
  %v133 = vxor.u32 %v128, 2147483648
  %v134 = vmul.f32 %v133, 1.442695
  %v135 = vpow.pop %v134
  %v136 = vadd.f32 %v135, 1.0
  %v137 = vrcp.pop %v136
  %v138 = vmul.f32 1.0, %v137
  %v139 = vmul.f32 %v128, %v138
  %v140 = vld [vmem:[#allocation2] sm:$0xff]
  %v141 = vpack.c.bf16 %v139, %v139
  %v142 = vld [vmem:[%s5] sm:$0xf]
  %v143 = vld [vmem:[%s5 + $0x4] sm:$0xf]
  %v144 = vld [vmem:[%s5 + $0x8] sm:$0xf]
  %v145 = vld [vmem:[%s5 + $0xc] sm:$0xf]
  %v146 = vld [vmem:[%s5 + $0x10] sm:$0xf]
  %v147 = vld [vmem:[%s5 + $0x14] sm:$0xf]
  %v148 = vld [vmem:[%s5 + $0x18] sm:$0xf]
  %v149 = vld [vmem:[%s5 + $0x1c] sm:$0xf]
  %v150 = vld [vmem:[%s5 + $0x20] sm:$0xf]
  %v151 = vld [vmem:[%s5 + $0x24] sm:$0xf]
  %v152 = vld [vmem:[%s5 + $0x28] sm:$0xf]
  %v153 = vld [vmem:[%s5 + $0x2c] sm:$0xf]
  %v154 = vld [vmem:[%s5 + $0x30] sm:$0xf]
  %v155 = vld [vmem:[%s5 + $0x34] sm:$0xf]
  %v156 = vld [vmem:[%s5 + $0x38] sm:$0xf]
  %v157 = vld [vmem:[%s5 + $0x3c] sm:$0xf]
  %v174 = vunpack.c.l.b16 %v142
  %v175 = vunpack.c.l.b16 %v143
  %v176 = vunpack.c.l.b16 %v144
  %v177 = vunpack.c.l.b16 %v145
  %v178 = vunpack.c.l.b16 %v146
  %v179 = vunpack.c.l.b16 %v147
  %v180 = vunpack.c.l.b16 %v148
  %v181 = vunpack.c.l.b16 %v149
  %v182 = vunpack.c.l.b16 %v150
  %v183 = vunpack.c.l.b16 %v151
  %v184 = vunpack.c.l.b16 %v152
  %v185 = vunpack.c.l.b16 %v153
  %v186 = vunpack.c.l.b16 %v154
  %v187 = vunpack.c.l.b16 %v155
  %v188 = vunpack.c.l.b16 %v156
  %v189 = vunpack.c.l.b16 %v157
  %v190 = vpack.c.b16 %v175, %v174
  %v191 = vpack.c.b16 %v177, %v176
  %v192 = vpack.c.b16 %v179, %v178
  %v193 = vpack.c.b16 %v181, %v180
  %v194 = vpack.c.b16 %v183, %v182
  %v195 = vpack.c.b16 %v185, %v184
  %v196 = vpack.c.b16 %v187, %v186
  %v197 = vpack.c.b16 %v189, %v188
  %206 = vmatprep.subr.bf16.mxu0 0
  %207 = vmatpush1.bf16.msra.mxu0 %v197
  %208 = vmatprep.subr.bf16.mxu0 0
  %209 = vmatpush1.bf16.msra.mxu0 %v196
  %210 = vmatprep.subr.bf16.mxu0 0
  %211 = vmatpush1.bf16.msra.mxu0 %v195
  %212 = vmatprep.subr.bf16.mxu0 0
  %213 = vmatpush1.bf16.msra.mxu0 %v194
  %214 = vmatprep.subr.bf16.mxu0 0
  %215 = vmatpush1.bf16.msra.mxu0 %v193
  %216 = vmatprep.subr.bf16.mxu0 0
  %217 = vmatpush1.bf16.msra.mxu0 %v192
  %218 = vmatprep.subr.bf16.mxu0 0
  %219 = vmatpush1.bf16.msra.mxu0 %v191
  %220 = vmatprep.subr.bf16.mxu0 0
  %221 = vmatpush1.bf16.msra.mxu0 %v190
  %222 = vmatprep.subr.bf16.mxu0 0
  %223 = vmatpush2.bf16.msra.mxu0 0
  %224 = vmatprep.subr.bf16.mxu0 0
  %225 = vmatpush2.bf16.msra.mxu0 0
  %226 = vmatprep.subr.bf16.mxu0 0
  %227 = vmatpush2.bf16.msra.mxu0 0
  %228 = vmatprep.subr.bf16.mxu0 0
  %229 = vmatpush2.bf16.msra.mxu0 0
  %230 = vmatprep.subr.bf16.mxu0 0
  %231 = vmatpush2.bf16.msra.mxu0 0
  %232 = vmatprep.subr.bf16.mxu0 0
  %233 = vmatpush2.bf16.msra.mxu0 0
  %234 = vmatprep.subr.bf16.mxu0 0
  %235 = vmatpush2.bf16.msra.mxu0 0
  %236 = vmatprep.subr.bf16.mxu0 0
  %237 = vmatpush2.bf16.msra.mxu0 0
  %238 = vmatprep.mubr.bf16.mxu0 0
  %239 = vmatmul.mubr.bf16.gmra.mxu0 %v141
  %v240 = vpop.f32.mrf.mxu0
  %v241 = vadd.f32 0.0, %v240
  %v242 = vpop.f32.mrf.mxu0
  %v243 = vpop.f32.mrf.mxu0
  %v244 = vpop.f32.mrf.mxu0
  %245 = vdwg.mxu0
  %v246 = vadd.f32 %v140, %v241
  %247 = vst.msk [vmem:[#allocation2] sm:$0xff] %vm35, %v246
  // Predicated region
  $region34: #{get_predictions.26} parent=0 // pred_check
    %p248 = pneg %p27
  $region35: #{get_predictions.26} parent=0 // pred_check_branch
    %250 = sbr.rel (%p248) target = $region37
  $region36: #{get_predictions.26} parent=0 // pred_region
    %v251 = vld [vmem:[#allocation2] sm:$0xff]
    %v252 = vld [vmem:[%s6] sm:$0x1]
    %v254 = vlaneseq
    %v255 = vshrl.u32 %v254, 7
    %v256 = vsub.s32 0, %v255
    %v257 = vrot.slane %v252, %v256
    %v259 = vadd.f32 %v251, %v257
    %v260 = vmul.f32 %v259, 0.5
    %v261 = vpack.c.bf16 %v260, %v260
    %vm262 = vcmask 257024
    %263 = vst.msk [vmem:[%s7] sm:$0xf] %vm262, %v261
  $region37: #{get_predictions.26} parent=0 // pred_fallthru
    _
  // Predicated region
  $region38: #{get_predictions.26} parent=0 // pred_check
    _
  $region39: #{get_predictions.26} parent=0 // pred_check_branch
    %265 = sbr.rel (0) target = $region41
  $region40: #{get_predictions.26} parent=0 // pred_region
    _
  $region41: #{get_predictions.26} parent=0 // pred_fallthru
    _
  // Predicated region
  $region42: #{get_predictions.26} parent=0 // pred_check
    _
  $region43: #{get_predictions.26} parent=0 // pred_check_branch
    %267 = sbr.rel (0) target = $region45
  $region44: #{get_predictions.26} parent=0 // pred_region
    _
  $region45: #{get_predictions.26} parent=0 // pred_fallthru
    _

// kernel: get_predictions.28
$region0: #{get_predictions.28}
  #allocation0 [shape = 'u32[]', space=smem, size = 0x4, offset = 0x4, fixed_abs, tag = 'smem constant byte address 0x4 - core index']
  #allocation1 [shape = 'u32[144,128]{1,0:T(1,128)}', space=vmem, size = 0x12000, scoped, tag = 'internal scratch']
  %s0 = inlined_call_operand.vmem [shape: bf16[8,32], index: 0, kind: input, shape index: {}]
  %s1 = inlined_call_operand.vmem [shape: bf16[32,64], index: 1, kind: input, shape index: {}]
  %s2 = inlined_call_operand.vmem [shape: f32[1,64], index: 2, kind: input, shape index: {}]
  %s3 = inlined_call_operand.vmem [shape: bf16[8,64], index: 3, kind: output, shape index: {}]
  %s4 = sld [smem:[#allocation0]]
  $region22: #{get_predictions.28} parent=0
    _
  %s6 = ssub.s32 1, %s4
  %s7 = scalar_select 0, %s6, %s4
  // Predicated region
  $region2: #{get_predictions.28} parent=0 // pred_check
    _
  $region3: #{get_predictions.28} parent=0 // pred_check_branch
    %9 = sbr.rel (0) target = $region5
  $region4: #{get_predictions.28} parent=0 // pred_region
    _
  $region5: #{get_predictions.28} parent=0 // pred_fallthru
    _
  // Predicated region
  $region6: #{get_predictions.28} parent=0 // pred_check
    _
  $region7: #{get_predictions.28} parent=0 // pred_check_branch
    %11 = sbr.rel (0) target = $region9
  $region8: #{get_predictions.28} parent=0 // pred_region
    _
  $region9: #{get_predictions.28} parent=0 // pred_fallthru
    _
  // Predicated region
  $region10: #{get_predictions.28} parent=0 // pred_check
    _
  $region11: #{get_predictions.28} parent=0 // pred_check_branch
    %13 = sbr.rel (0) target = $region13
  $region12: #{get_predictions.28} parent=0 // pred_region
    _
  $region13: #{get_predictions.28} parent=0 // pred_fallthru
    _
  %v15 = vld [vmem:[%s0] sm:$0xf]
  %v16 = vld [vmem:[%s1] sm:$0xf]
  %v17 = vld [vmem:[%s1 + $0x4] sm:$0xf]
  %v18 = vld [vmem:[%s1 + $0x8] sm:$0xf]
  %v19 = vld [vmem:[%s1 + $0xc] sm:$0xf]
  %v20 = vld [vmem:[%s2] sm:$0x1]
  %v22 = vlaneseq
  %v23 = vshrl.u32 %v22, 7
  %v24 = vsub.s32 0, %v23
  %v25 = vrot.slane %v20, %v24
  %v31 = vunpack.c.l.b16 %v16
  %v32 = vunpack.c.l.b16 %v17
  %v33 = vunpack.c.l.b16 %v18
  %v34 = vunpack.c.l.b16 %v19
  %v35 = vpack.c.b16 %v32, %v31
  %v36 = vpack.c.b16 %v34, %v33
  %vm39 = vcmask 261120
  %v41 = vsel %vm39, %v15, 0
  %43 = vmatprep.subr.bf16.mxu0 0
  %44 = vmatpush1.bf16.msra.mxu0 0
  %45 = vmatprep.subr.bf16.mxu0 0
  %46 = vmatpush1.bf16.msra.mxu0 0
  %47 = vmatprep.subr.bf16.mxu0 0
  %48 = vmatpush1.bf16.msra.mxu0 0
  %49 = vmatprep.subr.bf16.mxu0 0
  %50 = vmatpush1.bf16.msra.mxu0 0
  %51 = vmatprep.subr.bf16.mxu0 0
  %52 = vmatpush1.bf16.msra.mxu0 0
  %53 = vmatprep.subr.bf16.mxu0 0
  %54 = vmatpush1.bf16.msra.mxu0 0
  %55 = vmatprep.subr.bf16.mxu0 0
  %56 = vmatpush1.bf16.msra.mxu0 %v36
  %57 = vmatprep.subr.bf16.mxu0 0
  %58 = vmatpush1.bf16.msra.mxu0 %v35
  %59 = vmatprep.subr.bf16.mxu0 0
  %60 = vmatpush2.bf16.msra.mxu0 0
  %61 = vmatprep.subr.bf16.mxu0 0
  %62 = vmatpush2.bf16.msra.mxu0 0
  %63 = vmatprep.subr.bf16.mxu0 0
  %64 = vmatpush2.bf16.msra.mxu0 0
  %65 = vmatprep.subr.bf16.mxu0 0
  %66 = vmatpush2.bf16.msra.mxu0 0
  %67 = vmatprep.subr.bf16.mxu0 0
  %68 = vmatpush2.bf16.msra.mxu0 0
  %69 = vmatprep.subr.bf16.mxu0 0
  %70 = vmatpush2.bf16.msra.mxu0 0
  %71 = vmatprep.subr.bf16.mxu0 0
  %72 = vmatpush2.bf16.msra.mxu0 0
  %73 = vmatprep.subr.bf16.mxu0 0
  %74 = vmatpush2.bf16.msra.mxu0 0
  %75 = vmatprep.mubr.bf16.mxu0 0
  %76 = vmatmul.mubr.bf16.gmra.mxu0 %v41
  %v77 = vpop.f32.mrf.mxu0
  %v78 = vadd.f32 %v25, %v77
  %v79 = vpop.f32.mrf.mxu0
  %v80 = vpop.f32.mrf.mxu0
  %v81 = vpop.f32.mrf.mxu0
  %82 = vdwg.mxu0
  %v83 = vpack.c.bf16 %v78, %v78
  %vm84 = vcmask 519168
  %85 = vst.msk [vmem:[%s3] sm:$0xf] %vm84, %v83
  // Predicated region
  $region14: #{get_predictions.28} parent=0 // pred_check
    _
  $region15: #{get_predictions.28} parent=0 // pred_check_branch
    %87 = sbr.rel (0) target = $region17
  $region16: #{get_predictions.28} parent=0 // pred_region
    _
  $region17: #{get_predictions.28} parent=0 // pred_fallthru
    _
  // Predicated region
  $region18: #{get_predictions.28} parent=0 // pred_check
    _
  $region19: #{get_predictions.28} parent=0 // pred_check_branch
    %89 = sbr.rel (0) target = $region21
  $region20: #{get_predictions.28} parent=0 // pred_region
    _
  $region21: #{get_predictions.28} parent=0 // pred_fallthru
    _

// kernel: get_predictions.29
$region0: #{get_predictions.29}
  #allocation0 [shape = 'u32[]', space=smem, size = 0x4, offset = 0x4, fixed_abs, tag = 'smem constant byte address 0x4 - core index']
  #allocation1 [shape = 'u32[144,128]{1,0:T(1,128)}', space=vmem, size = 0x12000, scoped, tag = 'internal scratch']
  %s0 = inlined_call_operand.vmem [shape: bf16[8,32], index: 0, kind: input, shape index: {}]
  %s1 = inlined_call_operand.vmem [shape: bf16[32,32], index: 1, kind: input, shape index: {}]
  %s2 = inlined_call_operand.vmem [shape: f32[1,32], index: 2, kind: input, shape index: {}]
  %s3 = inlined_call_operand.vmem [shape: bf16[8,32], index: 3, kind: output, shape index: {}]
  %s4 = sld [smem:[#allocation0]]
  $region22: #{get_predictions.29} parent=0
    _
  %s6 = ssub.s32 1, %s4
  %s7 = scalar_select 0, %s6, %s4
  // Predicated region
  $region2: #{get_predictions.29} parent=0 // pred_check
    _
  $region3: #{get_predictions.29} parent=0 // pred_check_branch
    %9 = sbr.rel (0) target = $region5
  $region4: #{get_predictions.29} parent=0 // pred_region
    _
  $region5: #{get_predictions.29} parent=0 // pred_fallthru
    _
  // Predicated region
  $region6: #{get_predictions.29} parent=0 // pred_check
    _
  $region7: #{get_predictions.29} parent=0 // pred_check_branch
    %11 = sbr.rel (0) target = $region9
  $region8: #{get_predictions.29} parent=0 // pred_region
    _
  $region9: #{get_predictions.29} parent=0 // pred_fallthru
    _
  // Predicated region
  $region10: #{get_predictions.29} parent=0 // pred_check
    _
  $region11: #{get_predictions.29} parent=0 // pred_check_branch
    %13 = sbr.rel (0) target = $region13
  $region12: #{get_predictions.29} parent=0 // pred_region
    _
  $region13: #{get_predictions.29} parent=0 // pred_fallthru
    _
  %v15 = vld [vmem:[%s0] sm:$0xf]
  %v16 = vld [vmem:[%s1] sm:$0xf]
  %v17 = vld [vmem:[%s1 + $0x4] sm:$0xf]
  %v18 = vld [vmem:[%s1 + $0x8] sm:$0xf]
  %v19 = vld [vmem:[%s1 + $0xc] sm:$0xf]
  %v20 = vld [vmem:[%s2] sm:$0x1]
  %v22 = vlaneseq
  %v23 = vshrl.u32 %v22, 7
  %v24 = vsub.s32 0, %v23
  %v25 = vrot.slane %v20, %v24
  %v31 = vunpack.c.l.b16 %v16
  %v32 = vunpack.c.l.b16 %v17
  %v33 = vunpack.c.l.b16 %v18
  %v34 = vunpack.c.l.b16 %v19
  %v35 = vpack.c.b16 %v32, %v31
  %v36 = vpack.c.b16 %v34, %v33
  %vm39 = vcmask 261120
  %v41 = vsel %vm39, %v15, 0
  %43 = vmatprep.subr.bf16.mxu0 0
  %44 = vmatpush1.bf16.msra.mxu0 0
  %45 = vmatprep.subr.bf16.mxu0 0
  %46 = vmatpush1.bf16.msra.mxu0 0
  %47 = vmatprep.subr.bf16.mxu0 0
  %48 = vmatpush1.bf16.msra.mxu0 0
  %49 = vmatprep.subr.bf16.mxu0 0
  %50 = vmatpush1.bf16.msra.mxu0 0
  %51 = vmatprep.subr.bf16.mxu0 0
  %52 = vmatpush1.bf16.msra.mxu0 0
  %53 = vmatprep.subr.bf16.mxu0 0
  %54 = vmatpush1.bf16.msra.mxu0 0
  %55 = vmatprep.subr.bf16.mxu0 0
  %56 = vmatpush1.bf16.msra.mxu0 %v36
  %57 = vmatprep.subr.bf16.mxu0 0
  %58 = vmatpush1.bf16.msra.mxu0 %v35
  %59 = vmatprep.subr.bf16.mxu0 0
  %60 = vmatpush2.bf16.msra.mxu0 0
  %61 = vmatprep.subr.bf16.mxu0 0
  %62 = vmatpush2.bf16.msra.mxu0 0
  %63 = vmatprep.subr.bf16.mxu0 0
  %64 = vmatpush2.bf16.msra.mxu0 0
  %65 = vmatprep.subr.bf16.mxu0 0
  %66 = vmatpush2.bf16.msra.mxu0 0
  %67 = vmatprep.subr.bf16.mxu0 0
  %68 = vmatpush2.bf16.msra.mxu0 0
  %69 = vmatprep.subr.bf16.mxu0 0
  %70 = vmatpush2.bf16.msra.mxu0 0
  %71 = vmatprep.subr.bf16.mxu0 0
  %72 = vmatpush2.bf16.msra.mxu0 0
  %73 = vmatprep.subr.bf16.mxu0 0
  %74 = vmatpush2.bf16.msra.mxu0 0
  %75 = vmatprep.mubr.bf16.mxu0 0
  %76 = vmatmul.mubr.bf16.gmra.mxu0 %v41
  %v77 = vpop.f32.mrf.mxu0
  %v78 = vadd.f32 %v25, %v77
  %v79 = vpop.f32.mrf.mxu0
  %v80 = vpop.f32.mrf.mxu0
  %v81 = vpop.f32.mrf.mxu0
  %82 = vdwg.mxu0
  %v83 = vpack.c.bf16 %v78, %v78
  %vm84 = vcmask 257024
  %85 = vst.msk [vmem:[%s3] sm:$0xf] %vm84, %v83
  // Predicated region
  $region14: #{get_predictions.29} parent=0 // pred_check
    _
  $region15: #{get_predictions.29} parent=0 // pred_check_branch
    %87 = sbr.rel (0) target = $region17
  $region16: #{get_predictions.29} parent=0 // pred_region
    _
  $region17: #{get_predictions.29} parent=0 // pred_fallthru
    _
  // Predicated region
  $region18: #{get_predictions.29} parent=0 // pred_check
    _
  $region19: #{get_predictions.29} parent=0 // pred_check_branch
    %89 = sbr.rel (0) target = $region21
  $region20: #{get_predictions.29} parent=0 // pred_region
    _
  $region21: #{get_predictions.29} parent=0 // pred_fallthru
    _

// kernel: get_predictions.30
$region0: #{get_predictions.30}
  #allocation0 [shape = 'u32[]', space=smem, size = 0x4, offset = 0x4, fixed_abs, tag = 'smem constant byte address 0x4 - core index']
  #allocation1 [shape = 'u32[144,128]{1,0:T(1,128)}', space=vmem, size = 0x12000, scoped, tag = 'internal scratch']
  %s0 = inlined_call_operand.vmem [shape: bf16[2,4,4,8], index: 0, kind: input, shape index: {}]
  %s1 = inlined_call_operand.vmem [shape: bf16[2,4,4,8], index: 1, kind: input, shape index: {}]
  %s2 = inlined_call_operand.vmem [shape: bf16[2,4,4,8], index: 2, kind: input, shape index: {}]
  %s3 = inlined_call_operand.vmem [shape: bf16[2,4,4,8], index: 3, kind: output, shape index: {}]
  %s4 = sld [smem:[#allocation0]]
  $region45: #{get_predictions.30} parent=0
    _
  %s6 = ssub.s32 1, %s4
  %s7 = scalar_select 0, %s6, %s4
  loop: start=0, step=1, limit=4
  $region2: #{get_predictions.30} parent=0 // loop_pre_header
    _
  $region3: #{get_predictions.30} parent=0 // loop_header
    %s9 = sphi 0, %s13
    %p10 = scmp.ge.s32.totalorder %s9, 4
    %s16 = sphi 0, %s28
    %s17 = sphi 0, %s24
    %s18 = sphi 0, %s16
    %s19 = sphi 0, %s17
    %s20 = sphi 0, %s18
    %s21 = sphi 0, %s19
    %s33 = sphi 0, %s35
    %s36 = sphi 0, %s33
    %s37 = sphi 0, %s36
    %s53 = sphi 0, %s37
    %s61 = sphi 0, %s63
    %s64 = sphi 0, %s61
    %s65 = sphi 0, %s64
    %s81 = sphi 0, %s65
    %s89 = sphi 0, %s91
    %s92 = sphi 0, %s89
    %s93 = sphi 0, %s92
    %s109 = sphi 0, %s93
    %s117 = sphi 0, %s119
    %s120 = sphi 0, %s117
    %s121 = sphi 0, %s120
    %s137 = sphi 0, %s121
  $region4: #{get_predictions.30} parent=0 // loop_header_branch
    %12 = sbr.rel (%p10) target = $region8
  $region5: #{get_predictions.30} parent=0 // loop_body
    %s14 = ssub.s32 %s9, 1
    %s15 = ssub.s32 %s9, 2
    %s22 = sadd.s32 1, %s17
    %p23 = scmp.ge.s32.totalorder %s22, 1
    %s24 = scalar_select %p23, 0, %s22
    %s25 = sadd.s32 1, %s16
    %s26 = scalar_select %p23, %s25, %s16
    %p27 = scmp.ge.s32.totalorder %s26, 2
    %s28 = scalar_select %p27, 0, %s26
    %s29 = ssub.s32 %s16, %s28
    %s30 = ssub.s32 %s17, %s24
    %s31 = sor.u32 %s29, %s30
    %p32 = scmp.eq.s32.totalorder %s31, 0
    %s34 = sadd.s32 %s33, 1
    %s35 = scalar_select %p32, %s33, %s34
    %p38 = pneg %p32
    %p39 = scmp.eq.s32.totalorder %s9, 1
    %p40 = por %p38, %p39
    %p41 = scmp.ne.s32.totalorder %s33, %s36
    %p42 = scmp.eq.s32.totalorder %s9, 0
    %p43 = por %p41, %p42
    %p44 = scmp.ne.s32.totalorder %s33, %s36
    %p45 = scmp.eq.s32.totalorder %s14, 1
    %p46 = por %p44, %p45
    %p47 = scmp.ne.s32.totalorder %s36, %s37
    %p48 = scmp.eq.s32.totalorder %s14, 0
    %p49 = por %p47, %p48
    %p50 = scmp.ne.s32.totalorder %s36, %s37
    %p51 = scmp.eq.s32.totalorder %s15, 1
    %p52 = por %p50, %p51
    %p54 = scmp.ne.s32.totalorder %s37, %s53
    %p55 = scmp.eq.s32.totalorder %s15, 0
    %p56 = por %p54, %p55
    %s57 = ssub.s32 %s16, %s28
    %s58 = ssub.s32 %s17, %s24
    %s59 = sor.u32 %s57, %s58
    %p60 = scmp.eq.s32.totalorder %s59, 0
    %s62 = sadd.s32 %s61, 1
    %s63 = scalar_select %p60, %s61, %s62
    %p66 = pneg %p60
    %p67 = scmp.eq.s32.totalorder %s9, 1
    %p68 = por %p66, %p67
    %p69 = scmp.ne.s32.totalorder %s61, %s64
    %p70 = scmp.eq.s32.totalorder %s9, 0
    %p71 = por %p69, %p70
    %p72 = scmp.ne.s32.totalorder %s61, %s64
    %p73 = scmp.eq.s32.totalorder %s14, 1
    %p74 = por %p72, %p73
    %p75 = scmp.ne.s32.totalorder %s64, %s65
    %p76 = scmp.eq.s32.totalorder %s14, 0
    %p77 = por %p75, %p76
    %p78 = scmp.ne.s32.totalorder %s64, %s65
    %p79 = scmp.eq.s32.totalorder %s15, 1
    %p80 = por %p78, %p79
    %p82 = scmp.ne.s32.totalorder %s65, %s81
    %p83 = scmp.eq.s32.totalorder %s15, 0
    %p84 = por %p82, %p83
    %s85 = ssub.s32 %s16, %s28
    %s86 = ssub.s32 %s17, %s24
    %s87 = sor.u32 %s85, %s86
    %p88 = scmp.eq.s32.totalorder %s87, 0
    %s90 = sadd.s32 %s89, 1
    %s91 = scalar_select %p88, %s89, %s90
    %p94 = pneg %p88
    %p95 = scmp.eq.s32.totalorder %s9, 1
    %p96 = por %p94, %p95
    %p97 = scmp.ne.s32.totalorder %s89, %s92
    %p98 = scmp.eq.s32.totalorder %s9, 0
    %p99 = por %p97, %p98
    %p100 = scmp.ne.s32.totalorder %s89, %s92
    %p101 = scmp.eq.s32.totalorder %s14, 1
    %p102 = por %p100, %p101
    %p103 = scmp.ne.s32.totalorder %s92, %s93
    %p104 = scmp.eq.s32.totalorder %s14, 0
    %p105 = por %p103, %p104
    %p106 = scmp.ne.s32.totalorder %s92, %s93
    %p107 = scmp.eq.s32.totalorder %s15, 1
    %p108 = por %p106, %p107
    %p110 = scmp.ne.s32.totalorder %s93, %s109
    %p111 = scmp.eq.s32.totalorder %s15, 0
    %p112 = por %p110, %p111
    %s113 = ssub.s32 %s16, %s28
    %s114 = ssub.s32 %s17, %s24
    %s115 = sor.u32 %s113, %s114
    %p116 = scmp.eq.s32.totalorder %s115, 0
    %s118 = sadd.s32 %s117, 1
    %s119 = scalar_select %p116, %s117, %s118
    %p122 = pneg %p116
    %p123 = scmp.eq.s32.totalorder %s9, 1
    %p124 = por %p122, %p123
    %p125 = scmp.ne.s32.totalorder %s117, %s120
    %p126 = scmp.eq.s32.totalorder %s9, 0
    %p127 = por %p125, %p126
    %p128 = scmp.ne.s32.totalorder %s117, %s120
    %p129 = scmp.eq.s32.totalorder %s14, 1
    %p130 = por %p128, %p129
    %p131 = scmp.ne.s32.totalorder %s120, %s121
    %p132 = scmp.eq.s32.totalorder %s14, 0
    %p133 = por %p131, %p132
    %p134 = scmp.ne.s32.totalorder %s120, %s121
    %p135 = scmp.eq.s32.totalorder %s15, 1
    %p136 = por %p134, %p135
    %p138 = scmp.ne.s32.totalorder %s121, %s137
    %p139 = scmp.eq.s32.totalorder %s15, 0
    %p140 = por %p138, %p139
    %p141 = scmp.le.s32.totalorder 1, %s9
    %p142 = scmp.lt.s32.totalorder %s9, 3
    %p143 = pnand %p141, %p142
    %p144 = pneg %p143
    // Predicated region
    $region9: #{get_predictions.30} parent=5 // pred_check
      _
    $region10: #{get_predictions.30} parent=5 // pred_check_branch
      %146 = sbr.rel (%p143) target = $region12
    $region11: #{get_predictions.30} parent=5 // pred_region
      %s147 = ssub.s32 %s9, 1
    $region12: #{get_predictions.30} parent=5 // pred_fallthru
      _
    %p148 = scmp.lt.s32.totalorder %s9, 2
    // Predicated region
    $region13: #{get_predictions.30} parent=5 // pred_check
      %p149 = pneg %p148
    $region14: #{get_predictions.30} parent=5 // pred_check_branch
      %151 = sbr.rel (%p149) target = $region16
    $region15: #{get_predictions.30} parent=5 // pred_region
      // Predicated region
      $region17: #{get_predictions.30} parent=15 // pred_check
        %p152 = pneg %p43
      $region18: #{get_predictions.30} parent=15 // pred_check_branch
        %154 = sbr.rel (%p152) target = $region20
      $region19: #{get_predictions.30} parent=15 // pred_region
        %s155 = smul.u32 4, %s17
        %p156 = scmp.lt.s32.totalorder %s16, 1
        %s157 = scalar_select %p156, %s16, 1
        %p158 = scmp.lt.s32.totalorder %s155, 3
        %s159 = scalar_select %p158, %s155, 3
        %s160 = smul.addr %s157, 4
        %s161 = sadd.s32 %s159, %s160
        %s162 = smul.addr %s161, 2
        %s163 = scalar_lea.vmem %s0, %s162
        %s164 = smul.u32 4, %s17
      $region20: #{get_predictions.30} parent=15 // pred_fallthru
        _
      // Predicated region
      $region21: #{get_predictions.30} parent=15 // pred_check
        %p165 = pneg %p71
      $region22: #{get_predictions.30} parent=15 // pred_check_branch
        %167 = sbr.rel (%p165) target = $region24
      $region23: #{get_predictions.30} parent=15 // pred_region
        %s168 = smul.u32 4, %s17
        %p169 = scmp.lt.s32.totalorder %s16, 1
        %s170 = scalar_select %p169, %s16, 1
        %p171 = scmp.lt.s32.totalorder %s168, 3
        %s172 = scalar_select %p171, %s168, 3
        %s173 = smul.addr %s170, 4
        %s174 = sadd.s32 %s172, %s173
        %s175 = smul.addr %s174, 2
        %s176 = scalar_lea.vmem %s1, %s175
        %s177 = smul.u32 4, %s17
      $region24: #{get_predictions.30} parent=15 // pred_fallthru
        _
      // Predicated region
      $region25: #{get_predictions.30} parent=15 // pred_check
        %p178 = pneg %p99
      $region26: #{get_predictions.30} parent=15 // pred_check_branch
        %180 = sbr.rel (%p178) target = $region28
      $region27: #{get_predictions.30} parent=15 // pred_region
        %s181 = smul.u32 4, %s17
        %p182 = scmp.lt.s32.totalorder %s16, 1
        %s183 = scalar_select %p182, %s16, 1
        %p184 = scmp.lt.s32.totalorder %s181, 3
        %s185 = scalar_select %p184, %s181, 3
        %s186 = smul.addr %s183, 4
        %s187 = sadd.s32 %s185, %s186
        %s188 = smul.addr %s187, 2
        %s189 = scalar_lea.vmem %s2, %s188
        %s190 = smul.u32 4, %s17
      $region28: #{get_predictions.30} parent=15 // pred_fallthru
        _
    $region16: #{get_predictions.30} parent=5 // pred_fallthru
      _
    %p191 = scmp.le.s32.totalorder 1, %s9
    %p192 = scmp.lt.s32.totalorder %s9, 3
    %p193 = pnand %p191, %p192
    %p194 = pneg %p193
    // Predicated region
    $region29: #{get_predictions.30} parent=5 // pred_check
      _
    $region30: #{get_predictions.30} parent=5 // pred_check_branch
      %196 = sbr.rel (%p193) target = $region32
    $region31: #{get_predictions.30} parent=5 // pred_region
      %s197 = ssub.s32 %s9, 1
      %s198 = smul.u32 4, %s19
      %p199 = scmp.lt.s32.totalorder %s18, 1
      %s200 = scalar_select %p199, %s18, 1
      %p201 = scmp.lt.s32.totalorder %s198, 3
      %s202 = scalar_select %p201, %s198, 3
      %s203 = smul.addr %s200, 4
      %s204 = sadd.s32 %s202, %s203
      %s205 = smul.addr %s204, 2
      %s206 = scalar_lea.vmem %s0, %s205
      %p207 = pneg %p49
      %p208 = pneg %p46
      %s209 = smul.u32 4, %s19
      %p210 = scmp.lt.s32.totalorder %s18, 1
      %s211 = scalar_select %p210, %s18, 1
      %p212 = scmp.lt.s32.totalorder %s209, 3
      %s213 = scalar_select %p212, %s209, 3
      %s214 = smul.addr %s211, 4
      %s215 = sadd.s32 %s213, %s214
      %s216 = smul.addr %s215, 2
      %s217 = scalar_lea.vmem %s1, %s216
      %p218 = pneg %p77
      %p219 = pneg %p74
      %s220 = smul.u32 4, %s19
      %p221 = scmp.lt.s32.totalorder %s18, 1
      %s222 = scalar_select %p221, %s18, 1
      %p223 = scmp.lt.s32.totalorder %s220, 3
      %s224 = scalar_select %p223, %s220, 3
      %s225 = smul.addr %s222, 4
      %s226 = sadd.s32 %s224, %s225
      %s227 = smul.addr %s226, 2
      %s228 = scalar_lea.vmem %s2, %s227
      %p229 = pneg %p105
      %p230 = pneg %p102
      %p231 = pneg %p133
      %p232 = pneg %p130
      %s233 = smul.u32 4, %s19
      %p234 = scmp.lt.s32.totalorder %s18, 1
      %s235 = scalar_select %p234, %s18, 1
      %p236 = scmp.lt.s32.totalorder %s233, 3
      %s237 = scalar_select %p236, %s233, 3
      %s238 = smul.addr %s235, 4
      %s239 = sadd.s32 %s237, %s238
      %s240 = smul.addr %s239, 2
      %s241 = scalar_lea.vmem %s3, %s240
      %s242 = smul.u32 4, %s19
      %p243 = scmp.lt.s32.totalorder %s18, 1
      %s244 = scalar_select %p243, %s18, 1
      %p245 = scmp.lt.s32.totalorder %s242, 3
      %s246 = scalar_select %p245, %s242, 3
      %s247 = smul.addr %s244, 4
      %s248 = sadd.s32 %s246, %s247
      %s249 = smul.addr %s248, 2
      %s250 = scalar_lea.vmem %s0, %s249
      %s251 = smul.u32 4, %s19
      %s252 = smul.u32 4, %s19
      %p253 = scmp.lt.s32.totalorder %s18, 1
      %s254 = scalar_select %p253, %s18, 1
      %p255 = scmp.lt.s32.totalorder %s252, 3
      %s256 = scalar_select %p255, %s252, 3
      %s257 = smul.addr %s254, 4
      %s258 = sadd.s32 %s256, %s257
      %s259 = smul.addr %s258, 2
      %s260 = scalar_lea.vmem %s1, %s259
      %s261 = smul.u32 4, %s19
      %s262 = smul.u32 4, %s19
      %p263 = scmp.lt.s32.totalorder %s18, 1
      %s264 = scalar_select %p263, %s18, 1
      %p265 = scmp.lt.s32.totalorder %s262, 3
      %s266 = scalar_select %p265, %s262, 3
      %s267 = smul.addr %s264, 4
      %s268 = sadd.s32 %s266, %s267
      %s269 = smul.addr %s268, 2
      %s270 = scalar_lea.vmem %s2, %s269
      %s271 = smul.u32 4, %s19
      %s272 = smul.u32 4, %s19
      %p273 = scmp.lt.s32.totalorder %s18, 1
      %s274 = scalar_select %p273, %s18, 1
      %p275 = scmp.lt.s32.totalorder %s272, 3
      %s276 = scalar_select %p275, %s272, 3
      %s277 = smul.addr %s274, 4
      %s278 = sadd.s32 %s276, %s277
      %s279 = smul.addr %s278, 2
      %s280 = scalar_lea.vmem %s3, %s279
      %s281 = smul.u32 4, %s19
      %v283 = vld [vmem:[%s250] sm:$0x3]
      %v284 = vld [vmem:[%s250 + $0x2] sm:$0x3]
      %v285 = vld [vmem:[%s250 + $0x4] sm:$0x3]
      %v286 = vld [vmem:[%s250 + $0x6] sm:$0x3]
      %v287 = vld [vmem:[%s260] sm:$0x3]
      %v288 = vld [vmem:[%s260 + $0x2] sm:$0x3]
      %v289 = vld [vmem:[%s260 + $0x4] sm:$0x3]
      %v290 = vld [vmem:[%s260 + $0x6] sm:$0x3]
      %v291 = vld [vmem:[%s270] sm:$0x3]
      %v292 = vld [vmem:[%s270 + $0x2] sm:$0x3]
      %v293 = vld [vmem:[%s270 + $0x4] sm:$0x3]
      %v294 = vld [vmem:[%s270 + $0x6] sm:$0x3]
      %vm295 = vcmask 64512
      %v297 = vsel %vm295, %v283, 0
      %v300 = vsel %vm295, %v287, 0
      %302 = vmatprep.subr.bf16.mxu0 0
      %303 = vmatpush1.bf16.xpose.msra.mxu0 0
      %304 = vmatprep.subr.bf16.mxu0 0
      %305 = vmatpush1.bf16.xpose.msra.mxu0 0
      %306 = vmatprep.subr.bf16.mxu0 0
      %307 = vmatpush1.bf16.xpose.msra.mxu0 0
      %308 = vmatprep.subr.bf16.mxu0 0
      %309 = vmatpush1.bf16.xpose.msra.mxu0 0
      %310 = vmatprep.subr.bf16.mxu0 0
      %311 = vmatpush1.bf16.xpose.msra.mxu0 0
      %312 = vmatprep.subr.bf16.mxu0 0
      %313 = vmatpush1.bf16.xpose.msra.mxu0 0
      %314 = vmatprep.subr.bf16.mxu0 0
      %315 = vmatpush1.bf16.xpose.msra.mxu0 0
      %316 = vmatprep.subr.bf16.mxu0 0
      %317 = vmatpush1.bf16.xpose.msra.mxu0 %v300
      %318 = vmatprep.subr.bf16.mxu0 0
      %319 = vmatpush2.bf16.xpose.msra.mxu0 0
      %320 = vmatprep.subr.bf16.mxu0 0
      %321 = vmatpush2.bf16.xpose.msra.mxu0 0
      %322 = vmatprep.subr.bf16.mxu0 0
      %323 = vmatpush2.bf16.xpose.msra.mxu0 0
      %324 = vmatprep.subr.bf16.mxu0 0
      %325 = vmatpush2.bf16.xpose.msra.mxu0 0
      %326 = vmatprep.subr.bf16.mxu0 0
      %327 = vmatpush2.bf16.xpose.msra.mxu0 0
      %328 = vmatprep.subr.bf16.mxu0 0
      %329 = vmatpush2.bf16.xpose.msra.mxu0 0
      %330 = vmatprep.subr.bf16.mxu0 0
      %331 = vmatpush2.bf16.xpose.msra.mxu0 0
      %332 = vmatprep.subr.bf16.mxu0 0
      %333 = vmatpush2.bf16.xpose.msra.mxu0 0
      %334 = vmatprep.mubr.bf16.mxu0 0
      %335 = vmatmul.mubr.bf16.gmra.mxu0 %v297
      %v336 = vpop.f32.mrf.mxu0
      %v337 = vadd.f32 0.0, %v336
      %v338 = vpop.f32.mrf.mxu0
      %v339 = vpop.f32.mrf.mxu0
      %v340 = vpop.f32.mrf.mxu0
      %341 = vdwg.mxu0
      %v343 = vsel %vm295, %v284, 0
      %v346 = vsel %vm295, %v288, 0
      %348 = vmatprep.subr.bf16.mxu0 0
      %349 = vmatpush1.bf16.xpose.msra.mxu0 0
      %350 = vmatprep.subr.bf16.mxu0 0
      %351 = vmatpush1.bf16.xpose.msra.mxu0 0
      %352 = vmatprep.subr.bf16.mxu0 0
      %353 = vmatpush1.bf16.xpose.msra.mxu0 0
      %354 = vmatprep.subr.bf16.mxu0 0
      %355 = vmatpush1.bf16.xpose.msra.mxu0 0
      %356 = vmatprep.subr.bf16.mxu0 0
      %357 = vmatpush1.bf16.xpose.msra.mxu0 0
      %358 = vmatprep.subr.bf16.mxu0 0
      %359 = vmatpush1.bf16.xpose.msra.mxu0 0
      %360 = vmatprep.subr.bf16.mxu0 0
      %361 = vmatpush1.bf16.xpose.msra.mxu0 0
      %362 = vmatprep.subr.bf16.mxu0 0
      %363 = vmatpush1.bf16.xpose.msra.mxu0 %v346
      %364 = vmatprep.subr.bf16.mxu0 0
      %365 = vmatpush2.bf16.xpose.msra.mxu0 0
      %366 = vmatprep.subr.bf16.mxu0 0
      %367 = vmatpush2.bf16.xpose.msra.mxu0 0
      %368 = vmatprep.subr.bf16.mxu0 0
      %369 = vmatpush2.bf16.xpose.msra.mxu0 0
      %370 = vmatprep.subr.bf16.mxu0 0
      %371 = vmatpush2.bf16.xpose.msra.mxu0 0
      %372 = vmatprep.subr.bf16.mxu0 0
      %373 = vmatpush2.bf16.xpose.msra.mxu0 0
      %374 = vmatprep.subr.bf16.mxu0 0
      %375 = vmatpush2.bf16.xpose.msra.mxu0 0
      %376 = vmatprep.subr.bf16.mxu0 0
      %377 = vmatpush2.bf16.xpose.msra.mxu0 0
      %378 = vmatprep.subr.bf16.mxu0 0
      %379 = vmatpush2.bf16.xpose.msra.mxu0 0
      %380 = vmatprep.mubr.bf16.mxu0 0
      %381 = vmatmul.mubr.bf16.gmra.mxu0 %v343
      %v382 = vpop.f32.mrf.mxu0
      %v383 = vadd.f32 0.0, %v382
      %v384 = vpop.f32.mrf.mxu0
      %v385 = vpop.f32.mrf.mxu0
      %v386 = vpop.f32.mrf.mxu0
      %387 = vdwg.mxu0
      %v389 = vsel %vm295, %v285, 0
      %v392 = vsel %vm295, %v289, 0
      %394 = vmatprep.subr.bf16.mxu0 0
      %395 = vmatpush1.bf16.xpose.msra.mxu0 0
      %396 = vmatprep.subr.bf16.mxu0 0
      %397 = vmatpush1.bf16.xpose.msra.mxu0 0
      %398 = vmatprep.subr.bf16.mxu0 0
      %399 = vmatpush1.bf16.xpose.msra.mxu0 0
      %400 = vmatprep.subr.bf16.mxu0 0
      %401 = vmatpush1.bf16.xpose.msra.mxu0 0
      %402 = vmatprep.subr.bf16.mxu0 0
      %403 = vmatpush1.bf16.xpose.msra.mxu0 0
      %404 = vmatprep.subr.bf16.mxu0 0
      %405 = vmatpush1.bf16.xpose.msra.mxu0 0
      %406 = vmatprep.subr.bf16.mxu0 0
      %407 = vmatpush1.bf16.xpose.msra.mxu0 0
      %408 = vmatprep.subr.bf16.mxu0 0
      %409 = vmatpush1.bf16.xpose.msra.mxu0 %v392
      %410 = vmatprep.subr.bf16.mxu0 0
      %411 = vmatpush2.bf16.xpose.msra.mxu0 0
      %412 = vmatprep.subr.bf16.mxu0 0
      %413 = vmatpush2.bf16.xpose.msra.mxu0 0
      %414 = vmatprep.subr.bf16.mxu0 0
      %415 = vmatpush2.bf16.xpose.msra.mxu0 0
      %416 = vmatprep.subr.bf16.mxu0 0
      %417 = vmatpush2.bf16.xpose.msra.mxu0 0
      %418 = vmatprep.subr.bf16.mxu0 0
      %419 = vmatpush2.bf16.xpose.msra.mxu0 0
      %420 = vmatprep.subr.bf16.mxu0 0
      %421 = vmatpush2.bf16.xpose.msra.mxu0 0
      %422 = vmatprep.subr.bf16.mxu0 0
      %423 = vmatpush2.bf16.xpose.msra.mxu0 0
      %424 = vmatprep.subr.bf16.mxu0 0
      %425 = vmatpush2.bf16.xpose.msra.mxu0 0
      %426 = vmatprep.mubr.bf16.mxu0 0
      %427 = vmatmul.mubr.bf16.gmra.mxu0 %v389
      %v428 = vpop.f32.mrf.mxu0
      %v429 = vadd.f32 0.0, %v428
      %v430 = vpop.f32.mrf.mxu0
      %v431 = vpop.f32.mrf.mxu0
      %v432 = vpop.f32.mrf.mxu0
      %433 = vdwg.mxu0
      %v435 = vsel %vm295, %v286, 0
      %v438 = vsel %vm295, %v290, 0
      %440 = vmatprep.subr.bf16.mxu0 0
      %441 = vmatpush1.bf16.xpose.msra.mxu0 0
      %442 = vmatprep.subr.bf16.mxu0 0
      %443 = vmatpush1.bf16.xpose.msra.mxu0 0
      %444 = vmatprep.subr.bf16.mxu0 0
      %445 = vmatpush1.bf16.xpose.msra.mxu0 0
      %446 = vmatprep.subr.bf16.mxu0 0
      %447 = vmatpush1.bf16.xpose.msra.mxu0 0
      %448 = vmatprep.subr.bf16.mxu0 0
      %449 = vmatpush1.bf16.xpose.msra.mxu0 0
      %450 = vmatprep.subr.bf16.mxu0 0
      %451 = vmatpush1.bf16.xpose.msra.mxu0 0
      %452 = vmatprep.subr.bf16.mxu0 0
      %453 = vmatpush1.bf16.xpose.msra.mxu0 0
      %454 = vmatprep.subr.bf16.mxu0 0
      %455 = vmatpush1.bf16.xpose.msra.mxu0 %v438
      %456 = vmatprep.subr.bf16.mxu0 0
      %457 = vmatpush2.bf16.xpose.msra.mxu0 0
      %458 = vmatprep.subr.bf16.mxu0 0
      %459 = vmatpush2.bf16.xpose.msra.mxu0 0
      %460 = vmatprep.subr.bf16.mxu0 0
      %461 = vmatpush2.bf16.xpose.msra.mxu0 0
      %462 = vmatprep.subr.bf16.mxu0 0
      %463 = vmatpush2.bf16.xpose.msra.mxu0 0
      %464 = vmatprep.subr.bf16.mxu0 0
      %465 = vmatpush2.bf16.xpose.msra.mxu0 0
      %466 = vmatprep.subr.bf16.mxu0 0
      %467 = vmatpush2.bf16.xpose.msra.mxu0 0
      %468 = vmatprep.subr.bf16.mxu0 0
      %469 = vmatpush2.bf16.xpose.msra.mxu0 0
      %470 = vmatprep.subr.bf16.mxu0 0
      %471 = vmatpush2.bf16.xpose.msra.mxu0 0
      %472 = vmatprep.mubr.bf16.mxu0 0
      %473 = vmatmul.mubr.bf16.gmra.mxu0 %v435
      %v474 = vpop.f32.mrf.mxu0
      %v475 = vadd.f32 0.0, %v474
      %v476 = vpop.f32.mrf.mxu0
      %v477 = vpop.f32.mrf.mxu0
      %v478 = vpop.f32.mrf.mxu0
      %479 = vdwg.mxu0
      %v480 = vmul.f32 %v337, 0.35355338
      %v481 = vmul.f32 %v383, 0.35355338
      %v482 = vmul.f32 %v429, 0.35355338
      %v483 = vmul.f32 %v475, 0.35355338
      %vm484 = vcmask 27648
      %v485 = vsel %vm484, %v480, -inf
      %486 = vmax.xlane.f32.xlu0 %v485
      %v487 = vpop.xlane.xlu0 %486
      %v488 = vsel %vm484, %v481, -inf
      %489 = vmax.xlane.f32.xlu0 %v488
      %v490 = vpop.xlane.xlu0 %489
      %v491 = vsel %vm484, %v482, -inf
      %492 = vmax.xlane.f32.xlu0 %v491
      %v493 = vpop.xlane.xlu0 %492
      %v494 = vsel %vm484, %v483, -inf
      %495 = vmax.xlane.f32.xlu0 %v494
      %v496 = vpop.xlane.xlu0 %495
      %v497 = vsub.f32 %v480, %v487
      %v498 = vsub.f32 %v481, %v490
      %v499 = vsub.f32 %v482, %v493
      %v500 = vsub.f32 %v483, %v496
      %v501 = vmul.f32 %v497, 1.442695
      %v502 = vpow.pop %v501
      %v503 = vmul.f32 %v498, 1.442695
      %v504 = vpow.pop %v503
      %v505 = vmul.f32 %v499, 1.442695
      %v506 = vpow.pop %v505
      %v507 = vmul.f32 %v500, 1.442695
      %v508 = vpow.pop %v507
      %v509 = vsel %vm484, %v502, 0.0
      %510 = vadd.xlane.f32.xlu0 %v509
      %v511 = vpop.xlane.xlu0 %510
      %v512 = vsel %vm484, %v504, 0.0
      %513 = vadd.xlane.f32.xlu0 %v512
      %v514 = vpop.xlane.xlu0 %513
      %v515 = vsel %vm484, %v506, 0.0
      %516 = vadd.xlane.f32.xlu0 %v515
      %v517 = vpop.xlane.xlu0 %516
      %v518 = vsel %vm484, %v508, 0.0
      %519 = vadd.xlane.f32.xlu0 %v518
      %v520 = vpop.xlane.xlu0 %519
      %v521 = vrcp.pop %v511
      %v522 = vrcp.pop %v514
      %v523 = vrcp.pop %v517
      %v524 = vrcp.pop %v520
      %v525 = vpack.c.bf16 %v502, %v502
      %v526 = vpack.c.bf16 %v504, %v504
      %v527 = vpack.c.bf16 %v506, %v506
      %v528 = vpack.c.bf16 %v508, %v508
      %vm529 = vcmask 31744
      %v531 = vsel %vm529, %v525, 0
      %vm533 = vcmask 1041408
      %v535 = vsel %vm533, %v291, 0
      %537 = vmatprep.subr.bf16.mxu0 0
      %538 = vmatpush1.bf16.msra.mxu0 0
      %539 = vmatprep.subr.bf16.mxu0 0
      %540 = vmatpush1.bf16.msra.mxu0 0
      %541 = vmatprep.subr.bf16.mxu0 0
      %542 = vmatpush1.bf16.msra.mxu0 0
      %543 = vmatprep.subr.bf16.mxu0 0
      %544 = vmatpush1.bf16.msra.mxu0 0
      %545 = vmatprep.subr.bf16.mxu0 0
      %546 = vmatpush1.bf16.msra.mxu0 0
      %547 = vmatprep.subr.bf16.mxu0 0
      %548 = vmatpush1.bf16.msra.mxu0 0
      %549 = vmatprep.subr.bf16.mxu0 0
      %550 = vmatpush1.bf16.msra.mxu0 0
      %551 = vmatprep.subr.bf16.mxu0 0
      %552 = vmatpush1.bf16.msra.mxu0 %v535
      %553 = vmatprep.subr.bf16.mxu0 0
      %554 = vmatpush2.bf16.msra.mxu0 0
      %555 = vmatprep.subr.bf16.mxu0 0
      %556 = vmatpush2.bf16.msra.mxu0 0
      %557 = vmatprep.subr.bf16.mxu0 0
      %558 = vmatpush2.bf16.msra.mxu0 0
      %559 = vmatprep.subr.bf16.mxu0 0
      %560 = vmatpush2.bf16.msra.mxu0 0
      %561 = vmatprep.subr.bf16.mxu0 0
      %562 = vmatpush2.bf16.msra.mxu0 0
      %563 = vmatprep.subr.bf16.mxu0 0
      %564 = vmatpush2.bf16.msra.mxu0 0
      %565 = vmatprep.subr.bf16.mxu0 0
      %566 = vmatpush2.bf16.msra.mxu0 0
      %567 = vmatprep.subr.bf16.mxu0 0
      %568 = vmatpush2.bf16.msra.mxu0 0
      %569 = vmatprep.mubr.bf16.mxu0 0
      %570 = vmatmul.mubr.bf16.gmra.mxu0 %v531
      %v571 = vpop.f32.mrf.mxu0
      %v572 = vadd.f32 0.0, %v571
      %v573 = vpop.f32.mrf.mxu0
      %v574 = vpop.f32.mrf.mxu0
      %v575 = vpop.f32.mrf.mxu0
      %576 = vdwg.mxu0
      %v578 = vsel %vm529, %v526, 0
      %v581 = vsel %vm533, %v292, 0
      %583 = vmatprep.subr.bf16.mxu0 0
      %584 = vmatpush1.bf16.msra.mxu0 0
      %585 = vmatprep.subr.bf16.mxu0 0
      %586 = vmatpush1.bf16.msra.mxu0 0
      %587 = vmatprep.subr.bf16.mxu0 0
      %588 = vmatpush1.bf16.msra.mxu0 0
      %589 = vmatprep.subr.bf16.mxu0 0
      %590 = vmatpush1.bf16.msra.mxu0 0
      %591 = vmatprep.subr.bf16.mxu0 0
      %592 = vmatpush1.bf16.msra.mxu0 0
      %593 = vmatprep.subr.bf16.mxu0 0
      %594 = vmatpush1.bf16.msra.mxu0 0
      %595 = vmatprep.subr.bf16.mxu0 0
      %596 = vmatpush1.bf16.msra.mxu0 0
      %597 = vmatprep.subr.bf16.mxu0 0
      %598 = vmatpush1.bf16.msra.mxu0 %v581
      %599 = vmatprep.subr.bf16.mxu0 0
      %600 = vmatpush2.bf16.msra.mxu0 0
      %601 = vmatprep.subr.bf16.mxu0 0
      %602 = vmatpush2.bf16.msra.mxu0 0
      %603 = vmatprep.subr.bf16.mxu0 0
      %604 = vmatpush2.bf16.msra.mxu0 0
      %605 = vmatprep.subr.bf16.mxu0 0
      %606 = vmatpush2.bf16.msra.mxu0 0
      %607 = vmatprep.subr.bf16.mxu0 0
      %608 = vmatpush2.bf16.msra.mxu0 0
      %609 = vmatprep.subr.bf16.mxu0 0
      %610 = vmatpush2.bf16.msra.mxu0 0
      %611 = vmatprep.subr.bf16.mxu0 0
      %612 = vmatpush2.bf16.msra.mxu0 0
      %613 = vmatprep.subr.bf16.mxu0 0
      %614 = vmatpush2.bf16.msra.mxu0 0
      %615 = vmatprep.mubr.bf16.mxu0 0
      %616 = vmatmul.mubr.bf16.gmra.mxu0 %v578
      %v617 = vpop.f32.mrf.mxu0
      %v618 = vadd.f32 0.0, %v617
      %v619 = vpop.f32.mrf.mxu0
      %v620 = vpop.f32.mrf.mxu0
      %v621 = vpop.f32.mrf.mxu0
      %622 = vdwg.mxu0
      %v624 = vsel %vm529, %v527, 0
      %v627 = vsel %vm533, %v293, 0
      %629 = vmatprep.subr.bf16.mxu0 0
      %630 = vmatpush1.bf16.msra.mxu0 0
      %631 = vmatprep.subr.bf16.mxu0 0
      %632 = vmatpush1.bf16.msra.mxu0 0
      %633 = vmatprep.subr.bf16.mxu0 0
      %634 = vmatpush1.bf16.msra.mxu0 0
      %635 = vmatprep.subr.bf16.mxu0 0
      %636 = vmatpush1.bf16.msra.mxu0 0
      %637 = vmatprep.subr.bf16.mxu0 0
      %638 = vmatpush1.bf16.msra.mxu0 0
      %639 = vmatprep.subr.bf16.mxu0 0
      %640 = vmatpush1.bf16.msra.mxu0 0
      %641 = vmatprep.subr.bf16.mxu0 0
      %642 = vmatpush1.bf16.msra.mxu0 0
      %643 = vmatprep.subr.bf16.mxu0 0
      %644 = vmatpush1.bf16.msra.mxu0 %v627
      %645 = vmatprep.subr.bf16.mxu0 0
      %646 = vmatpush2.bf16.msra.mxu0 0
      %647 = vmatprep.subr.bf16.mxu0 0
      %648 = vmatpush2.bf16.msra.mxu0 0
      %649 = vmatprep.subr.bf16.mxu0 0
      %650 = vmatpush2.bf16.msra.mxu0 0
      %651 = vmatprep.subr.bf16.mxu0 0
      %652 = vmatpush2.bf16.msra.mxu0 0
      %653 = vmatprep.subr.bf16.mxu0 0
      %654 = vmatpush2.bf16.msra.mxu0 0
      %655 = vmatprep.subr.bf16.mxu0 0
      %656 = vmatpush2.bf16.msra.mxu0 0
      %657 = vmatprep.subr.bf16.mxu0 0
      %658 = vmatpush2.bf16.msra.mxu0 0
      %659 = vmatprep.subr.bf16.mxu0 0
      %660 = vmatpush2.bf16.msra.mxu0 0
      %661 = vmatprep.mubr.bf16.mxu0 0
      %662 = vmatmul.mubr.bf16.gmra.mxu0 %v624
      %v663 = vpop.f32.mrf.mxu0
      %v664 = vadd.f32 0.0, %v663
      %v665 = vpop.f32.mrf.mxu0
      %v666 = vpop.f32.mrf.mxu0
      %v667 = vpop.f32.mrf.mxu0
      %668 = vdwg.mxu0
      %v670 = vsel %vm529, %v528, 0
      %v673 = vsel %vm533, %v294, 0
      %675 = vmatprep.subr.bf16.mxu0 0
      %676 = vmatpush1.bf16.msra.mxu0 0
      %677 = vmatprep.subr.bf16.mxu0 0
      %678 = vmatpush1.bf16.msra.mxu0 0
      %679 = vmatprep.subr.bf16.mxu0 0
      %680 = vmatpush1.bf16.msra.mxu0 0
      %681 = vmatprep.subr.bf16.mxu0 0
      %682 = vmatpush1.bf16.msra.mxu0 0
      %683 = vmatprep.subr.bf16.mxu0 0
      %684 = vmatpush1.bf16.msra.mxu0 0
      %685 = vmatprep.subr.bf16.mxu0 0
      %686 = vmatpush1.bf16.msra.mxu0 0
      %687 = vmatprep.subr.bf16.mxu0 0
      %688 = vmatpush1.bf16.msra.mxu0 0
      %689 = vmatprep.subr.bf16.mxu0 0
      %690 = vmatpush1.bf16.msra.mxu0 %v673
      %691 = vmatprep.subr.bf16.mxu0 0
      %692 = vmatpush2.bf16.msra.mxu0 0
      %693 = vmatprep.subr.bf16.mxu0 0
      %694 = vmatpush2.bf16.msra.mxu0 0
      %695 = vmatprep.subr.bf16.mxu0 0
      %696 = vmatpush2.bf16.msra.mxu0 0
      %697 = vmatprep.subr.bf16.mxu0 0
      %698 = vmatpush2.bf16.msra.mxu0 0
      %699 = vmatprep.subr.bf16.mxu0 0
      %700 = vmatpush2.bf16.msra.mxu0 0
      %701 = vmatprep.subr.bf16.mxu0 0
      %702 = vmatpush2.bf16.msra.mxu0 0
      %703 = vmatprep.subr.bf16.mxu0 0
      %704 = vmatpush2.bf16.msra.mxu0 0
      %705 = vmatprep.subr.bf16.mxu0 0
      %706 = vmatpush2.bf16.msra.mxu0 0
      %707 = vmatprep.mubr.bf16.mxu0 0
      %708 = vmatmul.mubr.bf16.gmra.mxu0 %v670
      %v709 = vpop.f32.mrf.mxu0
      %v710 = vadd.f32 0.0, %v709
      %v711 = vpop.f32.mrf.mxu0
      %v712 = vpop.f32.mrf.mxu0
      %v713 = vpop.f32.mrf.mxu0
      %714 = vdwg.mxu0
      %v715 = vmul.f32 %v572, %v521
      %v716 = vmul.f32 %v618, %v522
      %v717 = vmul.f32 %v664, %v523
      %v718 = vmul.f32 %v710, %v524
      %v719 = vpack.c.bf16 %v715, %v715
      %v720 = vpack.c.bf16 %v716, %v716
      %v721 = vpack.c.bf16 %v717, %v717
      %v722 = vpack.c.bf16 %v718, %v718
      %vm723 = vcmask 58368
      %724 = vst.msk [vmem:[%s280] sm:$0x3] %vm723, %v719
      %725 = vst.msk [vmem:[%s280 + $0x2] sm:$0x3] %vm723, %v720
      %726 = vst.msk [vmem:[%s280 + $0x4] sm:$0x3] %vm723, %v721
      %727 = vst.msk [vmem:[%s280 + $0x6] sm:$0x3] %vm723, %v722
      %s728 = smul.u32 4, %s19
      %p729 = scmp.lt.s32.totalorder %s18, 1
      %s730 = scalar_select %p729, %s18, 1
      %p731 = scmp.lt.s32.totalorder %s728, 3
      %s732 = scalar_select %p731, %s728, 3
      %s733 = smul.addr %s730, 4
      %s734 = sadd.s32 %s732, %s733
      %s735 = smul.addr %s734, 2
      %s736 = scalar_lea.vmem %s3, %s735
      // Predicated region
      $region33: #{get_predictions.30} parent=31 // pred_check
        %p737 = pneg %p130
      $region34: #{get_predictions.30} parent=31 // pred_check_branch
        %739 = sbr.rel (%p737) target = $region36
      $region35: #{get_predictions.30} parent=31 // pred_region
        %s740 = smul.u32 4, %s19
      $region36: #{get_predictions.30} parent=31 // pred_fallthru
        _
    $region32: #{get_predictions.30} parent=5 // pred_fallthru
      _
    %p741 = scmp.le.s32.totalorder 2, %s9
    // Predicated region
    $region37: #{get_predictions.30} parent=5 // pred_check
      %p742 = pneg %p741
    $region38: #{get_predictions.30} parent=5 // pred_check_branch
      %744 = sbr.rel (%p742) target = $region40
    $region39: #{get_predictions.30} parent=5 // pred_region
      %s745 = ssub.s32 %s9, 2
      // Predicated region
      $region41: #{get_predictions.30} parent=39 // pred_check
        %p746 = pneg %p136
      $region42: #{get_predictions.30} parent=39 // pred_check_branch
        %748 = sbr.rel (%p746) target = $region44
      $region43: #{get_predictions.30} parent=39 // pred_region
        %s749 = smul.u32 4, %s21
        %p750 = scmp.lt.s32.totalorder %s20, 1
        %s751 = scalar_select %p750, %s20, 1
        %p752 = scmp.lt.s32.totalorder %s749, 3
        %s753 = scalar_select %p752, %s749, 3
        %s754 = smul.addr %s751, 4
        %s755 = sadd.s32 %s753, %s754
        %s756 = smul.addr %s755, 2
        %s757 = scalar_lea.vmem %s3, %s756
      $region44: #{get_predictions.30} parent=39 // pred_fallthru
        _
    $region40: #{get_predictions.30} parent=5 // pred_fallthru
      _
  $region6: #{get_predictions.30} parent=0 // loop_footer
    %s13 = sadd.s32 1, %s9
  $region7: #{get_predictions.30} parent=0 // loop_footer_branch
    %8 = sbr.rel target = $region3
  $region8: #{get_predictions.30} parent=0 // loop_exit
    _

// kernel: get_predictions.32
$region0: #{get_predictions.32}
  #allocation0 [shape = 'u32[]', space=smem, size = 0x4, offset = 0x4, fixed_abs, tag = 'smem constant byte address 0x4 - core index']
  #allocation1 [shape = 'u32[144,128]{1,0:T(1,128)}', space=vmem, size = 0x12000, scoped, tag = 'internal scratch']
  %s0 = inlined_call_operand.vmem [shape: bf16[8,32], index: 0, kind: input, shape index: {}]
  %s1 = inlined_call_operand.vmem [shape: f32[1,32], index: 1, kind: input, shape index: {}]
  %s2 = inlined_call_operand.vmem [shape: f32[1,32], index: 2, kind: input, shape index: {}]
  %s3 = inlined_call_operand.vmem [shape: bf16[32,32], index: 3, kind: input, shape index: {}]
  %s4 = inlined_call_operand.vmem [shape: bf16[32,32], index: 4, kind: input, shape index: {}]
  %s5 = inlined_call_operand.vmem [shape: bf16[8,32], index: 5, kind: output, shape index: {}]
  %s6 = sld [smem:[#allocation0]]
  $region30: #{get_predictions.32} parent=0
    _
  %s8 = ssub.s32 1, %s6
  %s9 = scalar_select 0, %s8, %s6
  // Predicated region
  $region2: #{get_predictions.32} parent=0 // pred_check
    _
  $region3: #{get_predictions.32} parent=0 // pred_check_branch
    %11 = sbr.rel (0) target = $region5
  $region4: #{get_predictions.32} parent=0 // pred_region
    _
  $region5: #{get_predictions.32} parent=0 // pred_fallthru
    _
  // Predicated region
  $region6: #{get_predictions.32} parent=0 // pred_check
    _
  $region7: #{get_predictions.32} parent=0 // pred_check_branch
    %13 = sbr.rel (0) target = $region9
  $region8: #{get_predictions.32} parent=0 // pred_region
    _
  $region9: #{get_predictions.32} parent=0 // pred_fallthru
    _
  // Predicated region
  $region10: #{get_predictions.32} parent=0 // pred_check
    _
  $region11: #{get_predictions.32} parent=0 // pred_check_branch
    %15 = sbr.rel (0) target = $region13
  $region12: #{get_predictions.32} parent=0 // pred_region
    _
  $region13: #{get_predictions.32} parent=0 // pred_fallthru
    _
  // Predicated region
  $region14: #{get_predictions.32} parent=0 // pred_check
    _
  $region15: #{get_predictions.32} parent=0 // pred_check_branch
    %17 = sbr.rel (0) target = $region17
  $region16: #{get_predictions.32} parent=0 // pred_region
    _
  $region17: #{get_predictions.32} parent=0 // pred_fallthru
    _
  // Predicated region
  $region18: #{get_predictions.32} parent=0 // pred_check
    _
  $region19: #{get_predictions.32} parent=0 // pred_check_branch
    %19 = sbr.rel (0) target = $region21
  $region20: #{get_predictions.32} parent=0 // pred_region
    _
  $region21: #{get_predictions.32} parent=0 // pred_fallthru
    _
  %v21 = vld [vmem:[%s0] sm:$0xf]
  %v22 = vunpack.c.l.bf16 %v21
  %vm23 = vcmask 261120
  %v24 = vsel %vm23, %v22, 0.0
  %25 = vadd.xlane.f32.xlu0 %v24
  %v26 = vpop.xlane.xlu0 %25
  %v27 = vrcp.pop 32.0
  %v28 = vmul.f32 %v26, %v27
  %v29 = vsub.f32 %v22, %v28
  %v30 = vmul.f32 %v29, %v29
  %v31 = vsel %vm23, %v30, 0.0
  %32 = vadd.xlane.f32.xlu0 %v31
  %v33 = vpop.xlane.xlu0 %32
  %v34 = vmul.f32 %v33, %v27
  %v35 = vadd.f32 %v34, 1e-05
  %v36 = vrsqrt.pop %v35
  %v37 = vmul.f32 %v29, %v36
  %v38 = vld [vmem:[%s1] sm:$0x1]
  %v40 = vlaneseq
  %v41 = vshrl.u32 %v40, 7
  %v42 = vsub.s32 0, %v41
  %v43 = vrot.slane %v38, %v42
  %v45 = vmul.f32 %v37, %v43
  %v46 = vld [vmem:[%s2] sm:$0x1]
  %v48 = vlaneseq
  %v49 = vshrl.u32 %v48, 7
  %v50 = vsub.s32 0, %v49
  %v51 = vrot.slane %v46, %v50
  %v53 = vadd.f32 %v45, %v51
  %v54 = vpack.c.bf16 %v53, %v53
  %v55 = vld [vmem:[%s3] sm:$0xf]
  %v56 = vld [vmem:[%s3 + $0x4] sm:$0xf]
  %v57 = vld [vmem:[%s3 + $0x8] sm:$0xf]
  %v58 = vld [vmem:[%s3 + $0xc] sm:$0xf]
  %v63 = vunpack.c.l.b16 %v55
  %v64 = vunpack.c.l.b16 %v56
  %v65 = vunpack.c.l.b16 %v57
  %v66 = vunpack.c.l.b16 %v58
  %v67 = vpack.c.b16 %v64, %v63
  %v68 = vpack.c.b16 %v66, %v65
  %v72 = vsel %vm23, %v54, 0
  %74 = vmatprep.subr.bf16.mxu0 0
  %75 = vmatpush1.bf16.msra.mxu0 0
  %76 = vmatprep.subr.bf16.mxu0 0
  %77 = vmatpush1.bf16.msra.mxu0 0
  %78 = vmatprep.subr.bf16.mxu0 0
  %79 = vmatpush1.bf16.msra.mxu0 0
  %80 = vmatprep.subr.bf16.mxu0 0
  %81 = vmatpush1.bf16.msra.mxu0 0
  %82 = vmatprep.subr.bf16.mxu0 0
  %83 = vmatpush1.bf16.msra.mxu0 0
  %84 = vmatprep.subr.bf16.mxu0 0
  %85 = vmatpush1.bf16.msra.mxu0 0
  %86 = vmatprep.subr.bf16.mxu0 0
  %87 = vmatpush1.bf16.msra.mxu0 %v68
  %88 = vmatprep.subr.bf16.mxu0 0
  %89 = vmatpush1.bf16.msra.mxu0 %v67
  %90 = vmatprep.subr.bf16.mxu0 0
  %91 = vmatpush2.bf16.msra.mxu0 0
  %92 = vmatprep.subr.bf16.mxu0 0
  %93 = vmatpush2.bf16.msra.mxu0 0
  %94 = vmatprep.subr.bf16.mxu0 0
  %95 = vmatpush2.bf16.msra.mxu0 0
  %96 = vmatprep.subr.bf16.mxu0 0
  %97 = vmatpush2.bf16.msra.mxu0 0
  %98 = vmatprep.subr.bf16.mxu0 0
  %99 = vmatpush2.bf16.msra.mxu0 0
  %100 = vmatprep.subr.bf16.mxu0 0
  %101 = vmatpush2.bf16.msra.mxu0 0
  %102 = vmatprep.subr.bf16.mxu0 0
  %103 = vmatpush2.bf16.msra.mxu0 0
  %104 = vmatprep.subr.bf16.mxu0 0
  %105 = vmatpush2.bf16.msra.mxu0 0
  %106 = vmatprep.mubr.bf16.mxu0 0
  %107 = vmatmul.mubr.bf16.gmra.mxu0 %v72
  %v108 = vpop.f32.mrf.mxu0
  %v109 = vadd.f32 0.0, %v108
  %v110 = vpop.f32.mrf.mxu0
  %v111 = vpop.f32.mrf.mxu0
  %v112 = vpop.f32.mrf.mxu0
  %113 = vdwg.mxu0
  %v114 = vld [vmem:[%s4] sm:$0xf]
  %v115 = vld [vmem:[%s4 + $0x4] sm:$0xf]
  %v116 = vld [vmem:[%s4 + $0x8] sm:$0xf]
  %v117 = vld [vmem:[%s4 + $0xc] sm:$0xf]
  %v122 = vunpack.c.l.b16 %v114
  %v123 = vunpack.c.l.b16 %v115
  %v124 = vunpack.c.l.b16 %v116
  %v125 = vunpack.c.l.b16 %v117
  %v126 = vpack.c.b16 %v123, %v122
  %v127 = vpack.c.b16 %v125, %v124
  %130 = vmatprep.subr.bf16.mxu0 0
  %131 = vmatpush1.bf16.msra.mxu0 0
  %132 = vmatprep.subr.bf16.mxu0 0
  %133 = vmatpush1.bf16.msra.mxu0 0
  %134 = vmatprep.subr.bf16.mxu0 0
  %135 = vmatpush1.bf16.msra.mxu0 0
  %136 = vmatprep.subr.bf16.mxu0 0
  %137 = vmatpush1.bf16.msra.mxu0 0
  %138 = vmatprep.subr.bf16.mxu0 0
  %139 = vmatpush1.bf16.msra.mxu0 0
  %140 = vmatprep.subr.bf16.mxu0 0
  %141 = vmatpush1.bf16.msra.mxu0 0
  %142 = vmatprep.subr.bf16.mxu0 0
  %143 = vmatpush1.bf16.msra.mxu0 %v127
  %144 = vmatprep.subr.bf16.mxu0 0
  %145 = vmatpush1.bf16.msra.mxu0 %v126
  %146 = vmatprep.subr.bf16.mxu0 0
  %147 = vmatpush2.bf16.msra.mxu0 0
  %148 = vmatprep.subr.bf16.mxu0 0
  %149 = vmatpush2.bf16.msra.mxu0 0
  %150 = vmatprep.subr.bf16.mxu0 0
  %151 = vmatpush2.bf16.msra.mxu0 0
  %152 = vmatprep.subr.bf16.mxu0 0
  %153 = vmatpush2.bf16.msra.mxu0 0
  %154 = vmatprep.subr.bf16.mxu0 0
  %155 = vmatpush2.bf16.msra.mxu0 0
  %156 = vmatprep.subr.bf16.mxu0 0
  %157 = vmatpush2.bf16.msra.mxu0 0
  %158 = vmatprep.subr.bf16.mxu0 0
  %159 = vmatpush2.bf16.msra.mxu0 0
  %160 = vmatprep.subr.bf16.mxu0 0
  %161 = vmatpush2.bf16.msra.mxu0 0
  %162 = vmatprep.mubr.bf16.mxu0 0
  %163 = vmatmul.mubr.bf16.gmra.mxu0 %v72
  %v164 = vpop.f32.mrf.mxu0
  %v165 = vadd.f32 0.0, %v164
  %v166 = vpop.f32.mrf.mxu0
  %v167 = vpop.f32.mrf.mxu0
  %v168 = vpop.f32.mrf.mxu0
  %169 = vdwg.mxu0
  %v170 = vxor.u32 %v165, 2147483648
  %v171 = vmul.f32 %v170, 1.442695
  %v172 = vpow.pop %v171
  %v173 = vadd.f32 %v172, 1.0
  %v174 = vrcp.pop %v173
  %v175 = vmul.f32 1.0, %v174
  %v176 = vmul.f32 %v109, %v175
  %v177 = vpack.c.bf16 %v176, %v176
  %vm178 = vcmask 257024
  %179 = vst.msk [vmem:[%s5] sm:$0xf] %vm178, %v177
  // Predicated region
  $region22: #{get_predictions.32} parent=0 // pred_check
    _
  $region23: #{get_predictions.32} parent=0 // pred_check_branch
    %181 = sbr.rel (0) target = $region25
  $region24: #{get_predictions.32} parent=0 // pred_region
    _
  $region25: #{get_predictions.32} parent=0 // pred_fallthru
    _
  // Predicated region
  $region26: #{get_predictions.32} parent=0 // pred_check
    _
  $region27: #{get_predictions.32} parent=0 // pred_check_branch
    %183 = sbr.rel (0) target = $region29
  $region28: #{get_predictions.32} parent=0 // pred_region
    _
  $region29: #{get_predictions.32} parent=0 // pred_fallthru
    _

// kernel: get_predictions.33
$region0: #{get_predictions.33}
  #allocation0 [shape = 'u32[]', space=smem, size = 0x4, offset = 0x4, fixed_abs, tag = 'smem constant byte address 0x4 - core index']
  #allocation1 [shape = 'u32[144,128]{1,0:T(1,128)}', space=vmem, size = 0x12000, scoped, tag = 'internal scratch']
  %s0 = inlined_call_operand.vmem [shape: bf16[2,8,32], index: 0, kind: input, shape index: {}]
  %s1 = inlined_call_operand.vmem [shape: f32[5,32], index: 1, kind: input, shape index: {}]
  %s2 = inlined_call_operand.vmem [shape: f32[1,32], index: 2, kind: input, shape index: {}]
  %s3 = inlined_call_operand.vmem [shape: f32[1,32], index: 3, kind: input, shape index: {}]
  %s4 = inlined_call_operand.vmem [shape: bf16[32,32], index: 4, kind: input, shape index: {}]
  %s5 = inlined_call_operand.vmem [shape: bf16[2,4,32], index: 5, kind: output, shape index: {}]
  %s6 = sld [smem:[#allocation0]]
  $region53: #{get_predictions.33} parent=0
    _
  %s8 = ssub.s32 1, %s6
  %s9 = scalar_select 0, %s8, %s6
  loop: start=0, step=1, limit=4
  $region2: #{get_predictions.33} parent=0 // loop_pre_header
    _
  $region3: #{get_predictions.33} parent=0 // loop_header
    %s11 = sphi 0, %s15
    %p12 = scmp.ge.s32.totalorder %s11, 4
    %s21 = sphi 0, %s23
    %s24 = sphi 0, %s21
    %s25 = sphi 0, %s24
    %s41 = sphi 0, %s25
    %s45 = sphi 0, %s45
    %s47 = sphi 0, %s45
    %s48 = sphi 0, %s47
    %s62 = sphi 0, %s48
    %s66 = sphi 0, %s66
    %s68 = sphi 0, %s66
    %s69 = sphi 0, %s68
    %s83 = sphi 0, %s69
    %s87 = sphi 0, %s87
    %s89 = sphi 0, %s87
    %s90 = sphi 0, %s89
    %s104 = sphi 0, %s90
    %s108 = sphi 0, %s108
    %s110 = sphi 0, %s108
    %s111 = sphi 0, %s110
    %s125 = sphi 0, %s111
    %s131 = sphi 0, %s133
    %s134 = sphi 0, %s131
    %s135 = sphi 0, %s134
    %s151 = sphi 0, %s135
  $region4: #{get_predictions.33} parent=0 // loop_header_branch
    %14 = sbr.rel (%p12) target = $region8
  $region5: #{get_predictions.33} parent=0 // loop_body
    %s16 = ssub.s32 %s11, 1
    %s17 = ssub.s32 %s11, 2
    %s18 = sadd.s32 %s11, 1
    %s19 = ssub.s32 %s11, %s18
    %p20 = scmp.eq.s32.totalorder %s19, 0
    %s22 = sadd.s32 %s21, 1
    %s23 = scalar_select %p20, %s21, %s22
    %p26 = pneg %p20
    %p27 = scmp.eq.s32.totalorder %s11, 1
    %p28 = por %p26, %p27
    %p29 = scmp.ne.s32.totalorder %s21, %s24
    %p30 = scmp.eq.s32.totalorder %s11, 0
    %p31 = por %p29, %p30
    %p32 = scmp.ne.s32.totalorder %s21, %s24
    %p33 = scmp.eq.s32.totalorder %s16, 1
    %p34 = por %p32, %p33
    %p35 = scmp.ne.s32.totalorder %s24, %s25
    %p36 = scmp.eq.s32.totalorder %s16, 0
    %p37 = por %p35, %p36
    %p38 = scmp.ne.s32.totalorder %s24, %s25
    %p39 = scmp.eq.s32.totalorder %s17, 1
    %p40 = por %p38, %p39
    %p42 = scmp.ne.s32.totalorder %s25, %s41
    %p43 = scmp.eq.s32.totalorder %s17, 0
    %p44 = por %p42, %p43
    %s46 = sadd.s32 %s45, 1
    %p49 = scmp.eq.s32.totalorder %s11, 1
    %p50 = scmp.ne.s32.totalorder %s45, %s47
    %p51 = scmp.eq.s32.totalorder %s11, 0
    %p52 = por %p50, %p51
    %p53 = scmp.ne.s32.totalorder %s45, %s47
    %p54 = scmp.eq.s32.totalorder %s16, 1
    %p55 = por %p53, %p54
    %p56 = scmp.ne.s32.totalorder %s47, %s48
    %p57 = scmp.eq.s32.totalorder %s16, 0
    %p58 = por %p56, %p57
    %p59 = scmp.ne.s32.totalorder %s47, %s48
    %p60 = scmp.eq.s32.totalorder %s17, 1
    %p61 = por %p59, %p60
    %p63 = scmp.ne.s32.totalorder %s48, %s62
    %p64 = scmp.eq.s32.totalorder %s17, 0
    %p65 = por %p63, %p64
    %s67 = sadd.s32 %s66, 1
    %p70 = scmp.eq.s32.totalorder %s11, 1
    %p71 = scmp.ne.s32.totalorder %s66, %s68
    %p72 = scmp.eq.s32.totalorder %s11, 0
    %p73 = por %p71, %p72
    %p74 = scmp.ne.s32.totalorder %s66, %s68
    %p75 = scmp.eq.s32.totalorder %s16, 1
    %p76 = por %p74, %p75
    %p77 = scmp.ne.s32.totalorder %s68, %s69
    %p78 = scmp.eq.s32.totalorder %s16, 0
    %p79 = por %p77, %p78
    %p80 = scmp.ne.s32.totalorder %s68, %s69
    %p81 = scmp.eq.s32.totalorder %s17, 1
    %p82 = por %p80, %p81
    %p84 = scmp.ne.s32.totalorder %s69, %s83
    %p85 = scmp.eq.s32.totalorder %s17, 0
    %p86 = por %p84, %p85
    %s88 = sadd.s32 %s87, 1
    %p91 = scmp.eq.s32.totalorder %s11, 1
    %p92 = scmp.ne.s32.totalorder %s87, %s89
    %p93 = scmp.eq.s32.totalorder %s11, 0
    %p94 = por %p92, %p93
    %p95 = scmp.ne.s32.totalorder %s87, %s89
    %p96 = scmp.eq.s32.totalorder %s16, 1
    %p97 = por %p95, %p96
    %p98 = scmp.ne.s32.totalorder %s89, %s90
    %p99 = scmp.eq.s32.totalorder %s16, 0
    %p100 = por %p98, %p99
    %p101 = scmp.ne.s32.totalorder %s89, %s90
    %p102 = scmp.eq.s32.totalorder %s17, 1
    %p103 = por %p101, %p102
    %p105 = scmp.ne.s32.totalorder %s90, %s104
    %p106 = scmp.eq.s32.totalorder %s17, 0
    %p107 = por %p105, %p106
    %s109 = sadd.s32 %s108, 1
    %p112 = scmp.eq.s32.totalorder %s11, 1
    %p113 = scmp.ne.s32.totalorder %s108, %s110
    %p114 = scmp.eq.s32.totalorder %s11, 0
    %p115 = por %p113, %p114
    %p116 = scmp.ne.s32.totalorder %s108, %s110
    %p117 = scmp.eq.s32.totalorder %s16, 1
    %p118 = por %p116, %p117
    %p119 = scmp.ne.s32.totalorder %s110, %s111
    %p120 = scmp.eq.s32.totalorder %s16, 0
    %p121 = por %p119, %p120
    %p122 = scmp.ne.s32.totalorder %s110, %s111
    %p123 = scmp.eq.s32.totalorder %s17, 1
    %p124 = por %p122, %p123
    %p126 = scmp.ne.s32.totalorder %s111, %s125
    %p127 = scmp.eq.s32.totalorder %s17, 0
    %p128 = por %p126, %p127
    %s129 = ssub.s32 %s11, %s18
    %p130 = scmp.eq.s32.totalorder %s129, 0
    %s132 = sadd.s32 %s131, 1
    %s133 = scalar_select %p130, %s131, %s132
    %p136 = pneg %p130
    %p137 = scmp.eq.s32.totalorder %s11, 1
    %p138 = por %p136, %p137
    %p139 = scmp.ne.s32.totalorder %s131, %s134
    %p140 = scmp.eq.s32.totalorder %s11, 0
    %p141 = por %p139, %p140
    %p142 = scmp.ne.s32.totalorder %s131, %s134
    %p143 = scmp.eq.s32.totalorder %s16, 1
    %p144 = por %p142, %p143
    %p145 = scmp.ne.s32.totalorder %s134, %s135
    %p146 = scmp.eq.s32.totalorder %s16, 0
    %p147 = por %p145, %p146
    %p148 = scmp.ne.s32.totalorder %s134, %s135
    %p149 = scmp.eq.s32.totalorder %s17, 1
    %p150 = por %p148, %p149
    %p152 = scmp.ne.s32.totalorder %s135, %s151
    %p153 = scmp.eq.s32.totalorder %s17, 0
    %p154 = por %p152, %p153
    %p155 = scmp.le.s32.totalorder 1, %s11
    %p156 = scmp.lt.s32.totalorder %s11, 3
    %p157 = pnand %p155, %p156
    %p158 = pneg %p157
    // Predicated region
    $region9: #{get_predictions.33} parent=5 // pred_check
      _
    $region10: #{get_predictions.33} parent=5 // pred_check_branch
      %160 = sbr.rel (%p157) target = $region12
    $region11: #{get_predictions.33} parent=5 // pred_region
      %s161 = ssub.s32 %s11, 1
      // Predicated region
      $region13: #{get_predictions.33} parent=11 // pred_check
        %p162 = pneg %p58
      $region14: #{get_predictions.33} parent=11 // pred_check_branch
        %164 = sbr.rel (%p162) target = $region16
      $region15: #{get_predictions.33} parent=11 // pred_region
        _
      $region16: #{get_predictions.33} parent=11 // pred_fallthru
        _
      // Predicated region
      $region17: #{get_predictions.33} parent=11 // pred_check
        %p165 = pneg %p79
      $region18: #{get_predictions.33} parent=11 // pred_check_branch
        %167 = sbr.rel (%p165) target = $region20
      $region19: #{get_predictions.33} parent=11 // pred_region
        _
      $region20: #{get_predictions.33} parent=11 // pred_fallthru
        _
      // Predicated region
      $region21: #{get_predictions.33} parent=11 // pred_check
        %p168 = pneg %p100
      $region22: #{get_predictions.33} parent=11 // pred_check_branch
        %170 = sbr.rel (%p168) target = $region24
      $region23: #{get_predictions.33} parent=11 // pred_region
        _
      $region24: #{get_predictions.33} parent=11 // pred_fallthru
        _
      // Predicated region
      $region25: #{get_predictions.33} parent=11 // pred_check
        %p171 = pneg %p121
      $region26: #{get_predictions.33} parent=11 // pred_check_branch
        %173 = sbr.rel (%p171) target = $region28
      $region27: #{get_predictions.33} parent=11 // pred_region
        _
      $region28: #{get_predictions.33} parent=11 // pred_fallthru
        _
    $region12: #{get_predictions.33} parent=5 // pred_fallthru
      _
    %p174 = scmp.lt.s32.totalorder %s11, 2
    // Predicated region
    $region29: #{get_predictions.33} parent=5 // pred_check
      %p175 = pneg %p174
    $region30: #{get_predictions.33} parent=5 // pred_check_branch
      %177 = sbr.rel (%p175) target = $region32
    $region31: #{get_predictions.33} parent=5 // pred_region
      // Predicated region
      $region33: #{get_predictions.33} parent=31 // pred_check
        %p178 = pneg %p31
      $region34: #{get_predictions.33} parent=31 // pred_check_branch
        %180 = sbr.rel (%p178) target = $region36
      $region35: #{get_predictions.33} parent=31 // pred_region
        %p181 = scmp.lt.s32.totalorder %s11, 1
        %s182 = scalar_select %p181, %s11, 1
        %s183 = smul.addr %s182, 4
        %s184 = scalar_lea.vmem %s0, %s183
      $region36: #{get_predictions.33} parent=31 // pred_fallthru
        _
    $region32: #{get_predictions.33} parent=5 // pred_fallthru
      _
    %p185 = scmp.le.s32.totalorder 1, %s11
    %p186 = scmp.lt.s32.totalorder %s11, 3
    %p187 = pnand %p185, %p186
    %p188 = pneg %p187
    // Predicated region
    $region37: #{get_predictions.33} parent=5 // pred_check
      _
    $region38: #{get_predictions.33} parent=5 // pred_check_branch
      %190 = sbr.rel (%p187) target = $region40
    $region39: #{get_predictions.33} parent=5 // pred_region
      %s191 = ssub.s32 %s11, 1
      %p192 = scmp.lt.s32.totalorder %s16, 1
      %s193 = scalar_select %p192, %s16, 1
      %s194 = smul.addr %s193, 4
      %s195 = scalar_lea.vmem %s0, %s194
      %p196 = pneg %p37
      %p197 = pneg %p34
      %p198 = pneg %p58
      %p199 = pneg %p55
      %p200 = pneg %p79
      %p201 = pneg %p76
      %p202 = pneg %p100
      %p203 = pneg %p97
      %p204 = pneg %p121
      %p205 = pneg %p118
      %p206 = pneg %p147
      %p207 = pneg %p144
      %p208 = scmp.lt.s32.totalorder %s16, 1
      %s209 = scalar_select %p208, %s16, 1
      %s210 = smul.addr %s209, 2
      %s211 = scalar_lea.vmem %s5, %s210
      %p212 = scmp.lt.s32.totalorder %s16, 1
      %s213 = scalar_select %p212, %s16, 1
      %s214 = smul.addr %s213, 4
      %s215 = scalar_lea.vmem %s0, %s214
      %p216 = scmp.lt.s32.totalorder %s16, 1
      %s217 = scalar_select %p216, %s16, 1
      %s218 = smul.addr %s217, 2
      %s219 = scalar_lea.vmem %s5, %s218
      %v221 = vld [vmem:[%s215] sm:$0xf]
      %v222 = vunpack.c.l.bf16 %v221
      %v223 = vld [vmem:[%s1] sm:$0x1f]
      %v224 = vlaneseq
      %v225 = vshrl.u32 %v224, 7
      %v226 = vsub.s32 0, %v225
      %v227 = vrot.slane %v223, %v226
      %v228 = vmul.f32 %v222, %v227
      %v229 = vlaneseq
      %v230 = vshrl.u32 %v229, 7
      %v231 = vsub.s32 1, %v230
      %v232 = vrot.slane %v223, %v231
      %v233 = vmul.f32 %v222, %v232
      %v235 = vrot.slane %v233, 1
      %v237 = vadd.f32 %v228, %v235
      %v238 = vlaneseq
      %v239 = vshrl.u32 %v238, 7
      %v240 = vsub.s32 2, %v239
      %v241 = vrot.slane %v223, %v240
      %v242 = vmul.f32 %v222, %v241
      %v244 = vrot.slane %v242, 2
      %v246 = vadd.f32 %v237, %v244
      %v247 = vlaneseq
      %v248 = vshrl.u32 %v247, 7
      %v249 = vsub.s32 3, %v248
      %v250 = vrot.slane %v223, %v249
      %v251 = vmul.f32 %v222, %v250
      %v253 = vrot.slane %v251, 3
      %v255 = vadd.f32 %v246, %v253
      %v256 = vlaneseq
      %v257 = vshrl.u32 %v256, 7
      %v258 = vsub.s32 4, %v257
      %v259 = vrot.slane %v223, %v258
      %v260 = vmul.f32 %v222, %v259
      %v262 = vrot.slane %v260, 4
      %v264 = vadd.f32 %v255, %v262
      %v265 = vld [vmem:[%s2] sm:$0x1]
      %v267 = vlaneseq
      %v268 = vshrl.u32 %v267, 7
      %v269 = vsub.s32 0, %v268
      %v270 = vrot.slane %v265, %v269
      %v272 = vmul.f32 %v264, %v270
      %v273 = vld [vmem:[%s3] sm:$0x1]
      %v275 = vlaneseq
      %v276 = vshrl.u32 %v275, 7
      %v277 = vsub.s32 0, %v276
      %v278 = vrot.slane %v273, %v277
      %v280 = vadd.f32 %v272, %v278
      %v281 = vxor.u32 %v280, 2147483648
      %v282 = vmul.f32 %v281, 1.442695
      %v283 = vpow.pop %v282
      %v284 = vadd.f32 %v283, 1.0
      %v285 = vrcp.pop %v284
      %v286 = vmul.f32 1.0, %v285
      %v287 = vmul.f32 %v280, %v286
      %v288 = vpack.c.bf16 %v287, %v287
      %v289 = vld [vmem:[%s4] sm:$0xf]
      %v290 = vld [vmem:[%s4 + $0x4] sm:$0xf]
      %v291 = vld [vmem:[%s4 + $0x8] sm:$0xf]
      %v292 = vld [vmem:[%s4 + $0xc] sm:$0xf]
      %v297 = vunpack.c.l.b16 %v289
      %v298 = vunpack.c.l.b16 %v290
      %v299 = vunpack.c.l.b16 %v291
      %v300 = vunpack.c.l.b16 %v292
      %v301 = vpack.c.b16 %v298, %v297
      %v302 = vpack.c.b16 %v300, %v299
      %vm305 = vcmask 261120
      %v307 = vsel %vm305, %v288, 0
      %309 = vmatprep.subr.bf16.mxu0 0
      %310 = vmatpush1.bf16.msra.mxu0 0
      %311 = vmatprep.subr.bf16.mxu0 0
      %312 = vmatpush1.bf16.msra.mxu0 0
      %313 = vmatprep.subr.bf16.mxu0 0
      %314 = vmatpush1.bf16.msra.mxu0 0
      %315 = vmatprep.subr.bf16.mxu0 0
      %316 = vmatpush1.bf16.msra.mxu0 0
      %317 = vmatprep.subr.bf16.mxu0 0
      %318 = vmatpush1.bf16.msra.mxu0 0
      %319 = vmatprep.subr.bf16.mxu0 0
      %320 = vmatpush1.bf16.msra.mxu0 0
      %321 = vmatprep.subr.bf16.mxu0 0
      %322 = vmatpush1.bf16.msra.mxu0 %v302
      %323 = vmatprep.subr.bf16.mxu0 0
      %324 = vmatpush1.bf16.msra.mxu0 %v301
      %325 = vmatprep.subr.bf16.mxu0 0
      %326 = vmatpush2.bf16.msra.mxu0 0
      %327 = vmatprep.subr.bf16.mxu0 0
      %328 = vmatpush2.bf16.msra.mxu0 0
      %329 = vmatprep.subr.bf16.mxu0 0
      %330 = vmatpush2.bf16.msra.mxu0 0
      %331 = vmatprep.subr.bf16.mxu0 0
      %332 = vmatpush2.bf16.msra.mxu0 0
      %333 = vmatprep.subr.bf16.mxu0 0
      %334 = vmatpush2.bf16.msra.mxu0 0
      %335 = vmatprep.subr.bf16.mxu0 0
      %336 = vmatpush2.bf16.msra.mxu0 0
      %337 = vmatprep.subr.bf16.mxu0 0
      %338 = vmatpush2.bf16.msra.mxu0 0
      %339 = vmatprep.subr.bf16.mxu0 0
      %340 = vmatpush2.bf16.msra.mxu0 0
      %341 = vmatprep.mubr.bf16.mxu0 0
      %342 = vmatmul.mubr.bf16.gmra.mxu0 %v307
      %v343 = vpop.f32.mrf.mxu0
      %v344 = vadd.f32 0.0, %v343
      %v345 = vpop.f32.mrf.mxu0
      %v346 = vpop.f32.mrf.mxu0
      %v347 = vpop.f32.mrf.mxu0
      %348 = vdwg.mxu0
      %v349 = vpack.c.bf16 %v344, %v344
      %vm350 = vcmask 254976
      %351 = vst.msk [vmem:[%s219] sm:$0x3] %vm350, %v349
      %p352 = scmp.lt.s32.totalorder %s16, 1
      %s353 = scalar_select %p352, %s16, 1
      %s354 = smul.addr %s353, 2
      %s355 = scalar_lea.vmem %s5, %s354
      // Predicated region
      $region41: #{get_predictions.33} parent=39 // pred_check
        %p356 = pneg %p144
      $region42: #{get_predictions.33} parent=39 // pred_check_branch
        %358 = sbr.rel (%p356) target = $region44
      $region43: #{get_predictions.33} parent=39 // pred_region
        _
      $region44: #{get_predictions.33} parent=39 // pred_fallthru
        _
    $region40: #{get_predictions.33} parent=5 // pred_fallthru
      _
    %p359 = scmp.le.s32.totalorder 2, %s11
    // Predicated region
    $region45: #{get_predictions.33} parent=5 // pred_check
      %p360 = pneg %p359
    $region46: #{get_predictions.33} parent=5 // pred_check_branch
      %362 = sbr.rel (%p360) target = $region48
    $region47: #{get_predictions.33} parent=5 // pred_region
      %s363 = ssub.s32 %s11, 2
      // Predicated region
      $region49: #{get_predictions.33} parent=47 // pred_check
        %p364 = pneg %p150
      $region50: #{get_predictions.33} parent=47 // pred_check_branch
        %366 = sbr.rel (%p364) target = $region52
      $region51: #{get_predictions.33} parent=47 // pred_region
        %p367 = scmp.lt.s32.totalorder %s17, 1
        %s368 = scalar_select %p367, %s17, 1
        %s369 = smul.addr %s368, 2
        %s370 = scalar_lea.vmem %s5, %s369
      $region52: #{get_predictions.33} parent=47 // pred_fallthru
        _
    $region48: #{get_predictions.33} parent=5 // pred_fallthru
      _
  $region6: #{get_predictions.33} parent=0 // loop_footer
    %s15 = sadd.s32 1, %s11
  $region7: #{get_predictions.33} parent=0 // loop_footer_branch
    %10 = sbr.rel target = $region3
  $region8: #{get_predictions.33} parent=0 // loop_exit
    _

// kernel: get_predictions.47
$region0: #{get_predictions.47}
  #allocation0 [shape = 'u32[]', space=smem, size = 0x4, offset = 0x4, fixed_abs, tag = 'smem constant byte address 0x4 - core index']
  #allocation1 [shape = 'u32[144,128]{1,0:T(1,128)}', space=vmem, size = 0x12000, scoped, tag = 'internal scratch']
  %s0 = inlined_call_operand.vmem [shape: bf16[8,32], index: 0, kind: input, shape index: {}]
  %s1 = inlined_call_operand.vmem [shape: bf16[32,64], index: 1, kind: input, shape index: {}]
  %s2 = inlined_call_operand.vmem [shape: f32[1,64], index: 2, kind: input, shape index: {}]
  %s3 = inlined_call_operand.hbm [shape: f32[8,64], index: 3, kind: output, shape index: {}]
  %s4 = sld [smem:[#allocation0]]
  $region22: #{get_predictions.47} parent=0
    _
  %s6 = ssub.s32 1, %s4
  %s7 = scalar_select 0, %s6, %s4
  $region1: #{get_predictions.47} parent=0
    #allocation2 [shape = 'u8[4096]{0}', space=vmem, size = 0x1000, scoped, tag = 'output window, operand 0, single buffered']
    #allocation3 [shape = 's32[1]{0}', space=sflag, size = 0x4, scoped, tag = 'scoped memory for get_predictions.47']
    %8 = vsyncpa [#allocation3], 0
    // Predicated region
    $region2: #{get_predictions.47} parent=1 // pred_check
      _
    $region3: #{get_predictions.47} parent=1 // pred_check_branch
      %10 = sbr.rel (0) target = $region5
    $region4: #{get_predictions.47} parent=1 // pred_region
      _
    $region5: #{get_predictions.47} parent=1 // pred_fallthru
      _
    // Predicated region
    $region6: #{get_predictions.47} parent=1 // pred_check
      _
    $region7: #{get_predictions.47} parent=1 // pred_check_branch
      %12 = sbr.rel (0) target = $region9
    $region8: #{get_predictions.47} parent=1 // pred_region
      _
    $region9: #{get_predictions.47} parent=1 // pred_fallthru
      _
    // Predicated region
    $region10: #{get_predictions.47} parent=1 // pred_check
      _
    $region11: #{get_predictions.47} parent=1 // pred_check_branch
      %14 = sbr.rel (0) target = $region13
    $region12: #{get_predictions.47} parent=1 // pred_region
      _
    $region13: #{get_predictions.47} parent=1 // pred_fallthru
      _
    %v16 = vld [vmem:[%s0] sm:$0xf]
    %v17 = vld [vmem:[%s1] sm:$0xf]
    %v18 = vld [vmem:[%s1 + $0x4] sm:$0xf]
    %v19 = vld [vmem:[%s1 + $0x8] sm:$0xf]
    %v20 = vld [vmem:[%s1 + $0xc] sm:$0xf]
    %v21 = vld [vmem:[%s2] sm:$0x1]
    %v23 = vlaneseq
    %v24 = vshrl.u32 %v23, 7
    %v25 = vsub.s32 0, %v24
    %v26 = vrot.slane %v21, %v25
    %v32 = vunpack.c.l.b16 %v17
    %v33 = vunpack.c.l.b16 %v18
    %v34 = vunpack.c.l.b16 %v19
    %v35 = vunpack.c.l.b16 %v20
    %v36 = vpack.c.b16 %v33, %v32
    %v37 = vpack.c.b16 %v35, %v34
    %vm40 = vcmask 261120
    %v42 = vsel %vm40, %v16, 0
    %44 = vmatprep.subr.bf16.mxu0 0
    %45 = vmatpush1.bf16.msra.mxu0 0
    %46 = vmatprep.subr.bf16.mxu0 0
    %47 = vmatpush1.bf16.msra.mxu0 0
    %48 = vmatprep.subr.bf16.mxu0 0
    %49 = vmatpush1.bf16.msra.mxu0 0
    %50 = vmatprep.subr.bf16.mxu0 0
    %51 = vmatpush1.bf16.msra.mxu0 0
    %52 = vmatprep.subr.bf16.mxu0 0
    %53 = vmatpush1.bf16.msra.mxu0 0
    %54 = vmatprep.subr.bf16.mxu0 0
    %55 = vmatpush1.bf16.msra.mxu0 0
    %56 = vmatprep.subr.bf16.mxu0 0
    %57 = vmatpush1.bf16.msra.mxu0 %v37
    %58 = vmatprep.subr.bf16.mxu0 0
    %59 = vmatpush1.bf16.msra.mxu0 %v36
    %60 = vmatprep.subr.bf16.mxu0 0
    %61 = vmatpush2.bf16.msra.mxu0 0
    %62 = vmatprep.subr.bf16.mxu0 0
    %63 = vmatpush2.bf16.msra.mxu0 0
    %64 = vmatprep.subr.bf16.mxu0 0
    %65 = vmatpush2.bf16.msra.mxu0 0
    %66 = vmatprep.subr.bf16.mxu0 0
    %67 = vmatpush2.bf16.msra.mxu0 0
    %68 = vmatprep.subr.bf16.mxu0 0
    %69 = vmatpush2.bf16.msra.mxu0 0
    %70 = vmatprep.subr.bf16.mxu0 0
    %71 = vmatpush2.bf16.msra.mxu0 0
    %72 = vmatprep.subr.bf16.mxu0 0
    %73 = vmatpush2.bf16.msra.mxu0 0
    %74 = vmatprep.subr.bf16.mxu0 0
    %75 = vmatpush2.bf16.msra.mxu0 0
    %76 = vmatprep.mubr.bf16.mxu0 0
    %77 = vmatmul.mubr.bf16.gmra.mxu0 %v42
    %v78 = vpop.f32.mrf.mxu0
    %v79 = vadd.f32 %v26, %v78
    %v80 = vpop.f32.mrf.mxu0
    %v81 = vpop.f32.mrf.mxu0
    %v82 = vpop.f32.mrf.mxu0
    %83 = vdwg.mxu0
    %vm84 = vcmask 523264
    %85 = vst.msk [vmem:[#allocation2] sm:$0xff] %vm84, %v79
    // Predicated region
    $region14: #{get_predictions.47} parent=1 // pred_check
      _
    $region15: #{get_predictions.47} parent=1 // pred_check_branch
      %87 = sbr.rel (0) target = $region17
    $region16: #{get_predictions.47} parent=1 // pred_region
      %s89 = ssub.s32 128, 128
      %90 = vsyncadd [#allocation3], %s89
      %s92 = sshll.u32 [#allocation2], 4
      %s93 = int_to_ptr.vmem [resolvable:$true] %s92
      %95 = dma.vmem_to_hbm [thread:$0]  %s93, 128, %s3, [#allocation3]
    $region17: #{get_predictions.47} parent=1 // pred_fallthru
      _
    // Predicated region
    $region18: #{get_predictions.47} parent=1 // pred_check
      _
    $region19: #{get_predictions.47} parent=1 // pred_check_branch
      %97 = sbr.rel (0) target = $region21
    $region20: #{get_predictions.47} parent=1 // pred_region
      %98 = dma.done [#allocation3], 128
    $region21: #{get_predictions.47} parent=1 // pred_fallthru
      _
    %99 = vsyncpa [#allocation3], 1

</llo_original>
